<compile_context>
chip_gen: v7x
topology: tpu7x:2x2x1
jax: 0.10.0
libtpu: 0.0.40
codegen_flags: <defaults>
</compile_context>

<pallas_src>
import functools
import math

import jax
import jax.numpy as jnp
from jax.experimental import pallas as pl
from jax.experimental.pallas import tpu as pltpu


# ---------------------------------------------------------------------------
# In-kernel helpers (all elementwise math kept in f32; MXU fed in bf16)
# ---------------------------------------------------------------------------
def _layer_norm(x, gamma, beta, eps=1e-6):
    # PyTorch nn.LayerNorm: biased variance, eps inside sqrt.
    mean = jnp.mean(x, axis=-1, keepdims=True)
    var = jnp.mean((x - mean) ** 2, axis=-1, keepdims=True)
    return (x - mean) * jax.lax.rsqrt(var + eps) * gamma + beta


def _mha_block(x, kv, mask_add, wq, wk, wv, wo, g, b, n_head, d_k, d_v):
    """Multi-head attention + residual + LayerNorm for one batch tile.

    x:        (B, Lq, D)   f32 query / residual source
    kv:       (B, Lk, D)   f32 key/value source
    mask_add: (B, Lm, Lk)  bf16 additive mask (0 or -1e9), Lm in {1, Lq}
    weights:  bf16 (in, out); g/b: f32 (1, D)
    """
    B, Lq, D = x.shape
    Lk = kv.shape[1]

    x2 = x.reshape(B * Lq, D).astype(jnp.bfloat16)
    kv2 = kv.reshape(B * Lk, D).astype(jnp.bfloat16)

    # Full-width QKV projections (single 2D bf16 matmuls, f32 accumulation).
    q = jnp.dot(x2, wq, preferred_element_type=jnp.float32).reshape(B, Lq, n_head * d_k)
    k = jnp.dot(kv2, wk, preferred_element_type=jnp.float32).reshape(B, Lk, n_head * d_k)
    v = jnp.dot(kv2, wv, preferred_element_type=jnp.float32).reshape(B, Lk, n_head * d_v)

    scale = 1.0 / (float(d_k) ** 0.5)
    heads = []
    for h in range(n_head):                       # static unroll over heads
        qh = q[:, :, h * d_k:(h + 1) * d_k].astype(jnp.bfloat16)
        kh = k[:, :, h * d_k:(h + 1) * d_k].astype(jnp.bfloat16)
        vh = v[:, :, h * d_v:(h + 1) * d_v].astype(jnp.bfloat16)

        s = jnp.einsum('bqd,bkd->bqk', qh, kh,
                       preferred_element_type=jnp.float32) * scale
        s = s + mask_add                           # additive mask, f32 math
        m = jnp.max(s, axis=-1, keepdims=True)
        e = jnp.exp(s - m)
        p = e / jnp.sum(e, axis=-1, keepdims=True)  # exact softmax divide
        heads.append(jnp.einsum('bqk,bkd->bqd', p.astype(jnp.bfloat16), vh,
                                preferred_element_type=jnp.float32))

    # One full-width output projection: concat(o_h) @ Wo  (single MXU GEMM
    # with contraction H*d_v instead of n_head K=d_v GEMMs summed on the VPU).
    o = jnp.concatenate(heads, axis=-1).reshape(B * Lq, n_head * d_v)
    proj = jnp.dot(o.astype(jnp.bfloat16), wo, preferred_element_type=jnp.float32)

    out = proj.reshape(B, Lq, D) + x               # residual (f32)
    return _layer_norm(out, g, b)


def _ffn_block(x, w1, b1, w2, b2, g, b):
    """Position-wise feed forward + residual + LayerNorm."""
    B, L, D = x.shape
    x2 = x.reshape(B * L, D).astype(jnp.bfloat16)
    h = jnp.dot(x2, w1, preferred_element_type=jnp.float32) + b1
    h = jnp.maximum(h, 0.0)                        # ReLU (f32)
    y = jnp.dot(h.astype(jnp.bfloat16), w2, preferred_element_type=jnp.float32) + b2
    y = y.reshape(B, L, D) + x                     # residual
    return _layer_norm(y, g, b)


# ---------------------------------------------------------------------------
# Fused decoder-stack kernel: grid = (batch tiles, layers).
# out_ref doubles as the layer-resident activation (block index constant over
# the layer axis), so no activation scratch / duplicate store is needed.
# ---------------------------------------------------------------------------
def decoder_stack_kernel(dec_ref, trg_mask_ref, enc_ref, src_mask_ref,
                         s_wq, s_wk, s_wv, s_wo, s_g, s_b,
                         c_wq, c_wk, c_wv, c_wo, c_g, c_b,
                         w1, b1, w2, b2, f_g, f_b,
                         out_ref, *, n_head, d_k, d_v):
    layer = pl.program_id(1)

    @pl.when(layer == 0)
    def _():
        out_ref[...] = dec_ref[...]        # load dec_input into resident block

    x = out_ref[...]                        # (tb, Lq, D), resident across layers
    enc = enc_ref[...]                      # (tb, Lk, D)
    trg_add = trg_mask_ref[...]             # (tb, Lm_t, Lq) bf16 additive
    src_add = src_mask_ref[...]             # (tb, Lm_s, Lk) bf16 additive

    # Self attention.
    x = _mha_block(x, x, trg_add, s_wq[...], s_wk[...], s_wv[...], s_wo[...],
                   s_g[...], s_b[...], n_head, d_k, d_v)
    # Encoder-decoder attention.
    x = _mha_block(x, enc, src_add, c_wq[...], c_wk[...], c_wv[...], c_wo[...],
                   c_g[...], c_b[...], n_head, d_k, d_v)
    # Position-wise FFN.
    x = _ffn_block(x, w1[...], b1[...], w2[...], b2[...], f_g[...], f_b[...])

    out_ref[...] = x                        # written back to HBM once per batch tile


# ---------------------------------------------------------------------------
# Wrapper
# ---------------------------------------------------------------------------
def _batch_spec(tb, rest):
    zeros = (0,) * len(rest)
    return pl.BlockSpec((tb,) + rest, lambda bi, l, _z=zeros: (bi,) + _z)


def _layer_spec(shape):
    # Squeezed leading layer dim: kernel ref arrives as `shape` directly.
    zeros = (0,) * len(shape)
    return pl.BlockSpec((None,) + shape, lambda bi, l, _z=zeros: (l,) + _z)


def decoder_forward(dec_input, trg_mask, enc_output, src_mask, params,
                    n_head, d_k, d_v, return_attns=False, batch_tile=1):
    B, Lq, D = dec_input.shape
    Lk = enc_output.shape[1]
    n_layers = params["slf_wq"].shape[0]
    d_inner = params["w1"].shape[2]
    Hdk = n_head * d_k
    Hdv = n_head * d_v
    assert B % batch_tile == 0, "batch_tile must divide the batch"
    tb = batch_tile

    # Additive masks built once (bf16): halves mask bytes, removes the per-layer
    # compare+select, and is robust to bool / int / float 0-1 masks.
    trg_add = jnp.where(trg_mask == 0, -1e9, 0.0).astype(jnp.bfloat16)
    src_add = jnp.where(src_mask == 0, -1e9, 0.0).astype(jnp.bfloat16)
    Lm_t, Lqm = trg_add.shape[1], trg_add.shape[2]
    Lm_s = src_add.shape[1]

    # Explicit scoped-VMEM budget: 2x per-layer weights (double buffering)
    # + resident activation / enc / mask blocks + slack.
    per_layer_w = sum(math.prod(v.shape[1:]) * v.dtype.itemsize
                      for v in params.values())
    resident = (4 * tb * Lq * D * 4            # dec block + resident out + temporaries
                + tb * Lk * D * 4
                + tb * (Lm_t * Lqm + Lm_s * Lk) * 2)
    vmem_limit = int(min(100 << 20, 2 * per_layer_w + 2 * resident + (8 << 20)))

    kern = functools.partial(decoder_stack_kernel, n_head=n_head, d_k=d_k, d_v=d_v)

    out = pl.pallas_call(
        kern,
        out_shape=jax.ShapeDtypeStruct((B, Lq, D), jnp.float32),
        grid=(B // tb, n_layers),
        in_specs=[
            _batch_spec(tb, (Lq, D)),           # dec_input
            _batch_spec(tb, (Lm_t, Lqm)),       # additive trg mask
            _batch_spec(tb, (Lk, D)),           # enc_output
            _batch_spec(tb, (Lm_s, Lk)),        # additive src mask
            # self-attention (per-layer, streamed, bf16)
            _layer_spec((D, Hdk)), _layer_spec((D, Hdk)),
            _layer_spec((D, Hdv)), _layer_spec((Hdv, D)),
            _layer_spec((1, D)), _layer_spec((1, D)),
            # enc-dec attention
            _layer_spec((D, Hdk)), _layer_spec((D, Hdk)),
            _layer_spec((D, Hdv)), _layer_spec((Hdv, D)),
            _layer_spec((1, D)), _layer_spec((1, D)),
            # FFN
            _layer_spec((D, d_inner)), _layer_spec((1, d_inner)),
            _layer_spec((d_inner, D)), _layer_spec((1, D)),
            _layer_spec((1, D)), _layer_spec((1, D)),
        ],
        out_specs=pl.BlockSpec((tb, Lq, D), lambda bi, l: (bi, 0, 0)),
        compiler_params=pltpu.CompilerParams(
            dimension_semantics=("parallel", "arbitrary"),  # batch || , layers seq.
            vmem_limit_bytes=vmem_limit),
    )(dec_input, trg_add, enc_output, src_add,
      params["slf_wq"], params["slf_wk"], params["slf_wv"], params["slf_wo"],
      params["slf_g"], params["slf_b"],
      params["enc_wq"], params["enc_wk"], params["enc_wv"], params["enc_wo"],
      params["enc_g"], params["enc_b"],
      params["w1"], params["b1"], params["w2"], params["b2"],
      params["ffn_g"], params["ffn_b"])

    # Final self.layer_norm is defined in the reference __init__ but unused in forward.
    # TODO(synk): return_attns=True would also require returning per-head attention maps.
    return (out,)


# ---------------------------------------------------------------------------
# Deterministic parameter init (weights stacked along a leading layer axis).
# Matmul weights stored in bf16 (MXU-native on v5e/v6e/v7x); biases / LN in f32.
# ---------------------------------------------------------------------------
def init_params(key, n_layers, n_head, d_k, d_v, d_model, d_inner):
    Hdk, Hdv = n_head * d_k, n_head * d_v
    ks = jax.random.split(key, 12)

    def lin(k, shape):
        w = 0.02 * jax.random.normal(k, (n_layers,) + shape, jnp.float32)
        return w.astype(jnp.bfloat16)

    ones = jnp.ones((n_layers, 1, d_model), jnp.float32)
    zeros = jnp.zeros((n_layers, 1, d_model), jnp.float32)
    return dict(
        slf_wq=lin(ks[0], (d_model, Hdk)), slf_wk=lin(ks[1], (d_model, Hdk)),
        slf_wv=lin(ks[2], (d_model, Hdv)), slf_wo=lin(ks[3], (Hdv, d_model)),
        slf_g=ones, slf_b=zeros,
        enc_wq=lin(ks[4], (d_model, Hdk)), enc_wk=lin(ks[5], (d_model, Hdk)),
        enc_wv=lin(ks[6], (d_model, Hdv)), enc_wo=lin(ks[7], (Hdv, d_model)),
        enc_g=ones, enc_b=zeros,
        w1=lin(ks[8], (d_model, d_inner)),
        b1=0.02 * jax.random.normal(ks[9], (n_layers, 1, d_inner), jnp.float32),
        w2=lin(ks[10], (d_inner, d_model)),
        b2=0.02 * jax.random.normal(ks[11], (n_layers, 1, d_model), jnp.float32),
        ffn_g=ones, ffn_b=zeros,
    )


# ---------------------------------------------------------------------------
if __name__ == "__main__":
    n_layers, n_head, d_k, d_v = 2, 4, 8, 8
    d_model, d_inner = 32, 64
    B, Lq, Lk = 2, 8, 8

    root = jax.random.PRNGKey(0)
    k_par, k_dec, k_enc = jax.random.split(root, 3)

    params = init_params(k_par, n_layers, n_head, d_k, d_v, d_model, d_inner)

    dec_input = jax.random.normal(k_dec, (B, Lq, d_model), jnp.float32)
    enc_output = jax.random.normal(k_enc, (B, Lk, d_model), jnp.float32)
    # Causal target mask (B, Lq, Lq); all-ones source mask (B, 1, Lk).
    trg_mask = jnp.broadcast_to(
        jnp.tril(jnp.ones((Lq, Lq), jnp.float32)), (B, Lq, Lq))
    src_mask = jnp.ones((B, 1, Lk), jnp.float32)

    (dec_output,) = decoder_forward(dec_input, trg_mask, enc_output, src_mask,
                                    params, n_head, d_k, d_v, batch_tile=1)
    dec_output = jax.block_until_ready(dec_output)
    assert dec_output.shape == (B, Lq, d_model)
    assert bool(jnp.all(jnp.isfinite(dec_output)))
    print("KERNEL_OK")
</pallas_src>

<mosaic_0001>
module attributes {stable_mosaic.version = 11 : i64} {
  func.func @decoder_stack_kernel(%arg0: i32, %arg1: i32, %arg2: memref<1x8x32xf32, #tpu.memory_space<vmem>>, %arg3: memref<1x8x8xbf16, #tpu.memory_space<vmem>>, %arg4: memref<1x8x32xf32, #tpu.memory_space<vmem>>, %arg5: memref<1x1x8xbf16, #tpu.memory_space<vmem>>, %arg6: memref<1x32x32xbf16, #tpu.memory_space<vmem>>, %arg7: memref<1x32x32xbf16, #tpu.memory_space<vmem>>, %arg8: memref<1x32x32xbf16, #tpu.memory_space<vmem>>, %arg9: memref<1x32x32xbf16, #tpu.memory_space<vmem>>, %arg10: memref<1x1x32xf32, #tpu.memory_space<vmem>>, %arg11: memref<1x1x32xf32, #tpu.memory_space<vmem>>, %arg12: memref<1x32x32xbf16, #tpu.memory_space<vmem>>, %arg13: memref<1x32x32xbf16, #tpu.memory_space<vmem>>, %arg14: memref<1x32x32xbf16, #tpu.memory_space<vmem>>, %arg15: memref<1x32x32xbf16, #tpu.memory_space<vmem>>, %arg16: memref<1x1x32xf32, #tpu.memory_space<vmem>>, %arg17: memref<1x1x32xf32, #tpu.memory_space<vmem>>, %arg18: memref<1x32x64xbf16, #tpu.memory_space<vmem>>, %arg19: memref<1x1x64xf32, #tpu.memory_space<vmem>>, %arg20: memref<1x64x32xbf16, #tpu.memory_space<vmem>>, %arg21: memref<1x1x32xf32, #tpu.memory_space<vmem>>, %arg22: memref<1x1x32xf32, #tpu.memory_space<vmem>>, %arg23: memref<1x1x32xf32, #tpu.memory_space<vmem>>, %arg24: memref<1x8x32xf32, #tpu.memory_space<vmem>>) attributes {dimension_semantics = [#tpu.dimension_semantics<parallel>, #tpu.dimension_semantics<arbitrary>], iteration_bounds = array<i64: 2, 2>, scalar_prefetch = 0 : i64, scratch_operands = 0 : i64, tpu.core_type = #tpu.core_type<tc>, window_params = [{transform_indices = @transform_0, window_bounds = array<i64: 1, 8, 32>}, {transform_indices = @transform_1, window_bounds = array<i64: 1, 8, 8>}, {transform_indices = @transform_2, window_bounds = array<i64: 1, 8, 32>}, {transform_indices = @transform_3, window_bounds = array<i64: 1, 1, 8>}, {transform_indices = @transform_4, window_bounds = array<i64: 1, 32, 32>}, {transform_indices = @transform_5, window_bounds = array<i64: 1, 32, 32>}, {transform_indices = @transform_6, window_bounds = array<i64: 1, 32, 32>}, {transform_indices = @transform_7, window_bounds = array<i64: 1, 32, 32>}, {transform_indices = @transform_8, window_bounds = array<i64: 1, 1, 32>}, {transform_indices = @transform_9, window_bounds = array<i64: 1, 1, 32>}, {transform_indices = @transform_10, window_bounds = array<i64: 1, 32, 32>}, {transform_indices = @transform_11, window_bounds = array<i64: 1, 32, 32>}, {transform_indices = @transform_12, window_bounds = array<i64: 1, 32, 32>}, {transform_indices = @transform_13, window_bounds = array<i64: 1, 32, 32>}, {transform_indices = @transform_14, window_bounds = array<i64: 1, 1, 32>}, {transform_indices = @transform_15, window_bounds = array<i64: 1, 1, 32>}, {transform_indices = @transform_16, window_bounds = array<i64: 1, 32, 64>}, {transform_indices = @transform_17, window_bounds = array<i64: 1, 1, 64>}, {transform_indices = @transform_18, window_bounds = array<i64: 1, 64, 32>}, {transform_indices = @transform_19, window_bounds = array<i64: 1, 1, 32>}, {transform_indices = @transform_20, window_bounds = array<i64: 1, 1, 32>}, {transform_indices = @transform_21, window_bounds = array<i64: 1, 1, 32>}, {transform_indices = @transform_22, window_bounds = array<i64: 1, 8, 32>}]} {
    %c0_i32 = arith.constant 0 : i32
    %0 = arith.cmpi eq, %arg1, %c0_i32 : i32
    %1 = arith.extui %0 : i1 to i32
    %c0_i32_0 = arith.constant 0 : i32
    %2 = arith.cmpi ne, %1, %c0_i32_0 : i32
    scf.if %2 {
      %c0_134 = arith.constant 0 : index
      %c0_135 = arith.constant 0 : index
      %c0_136 = arith.constant 0 : index
      %341 = vector.load %arg2[%c0_134, %c0_135, %c0_136] : memref<1x8x32xf32, #tpu.memory_space<vmem>>, vector<1x8x32xf32>
      %c0_137 = arith.constant 0 : index
      %c0_138 = arith.constant 0 : index
      %c0_139 = arith.constant 0 : index
      %342 = vector.load %arg24[%c0_137, %c0_138, %c0_139] : memref<1x8x32xf32, #tpu.memory_space<vmem>>, vector<1x8x32xf32>
      tpu.vector_store %arg24[%c0_137, %c0_138, %c0_139], %341 {strides = array<i32>} : memref<1x8x32xf32, #tpu.memory_space<vmem>>, vector<1x8x32xf32>,
    } else {
    }
    %c0 = arith.constant 0 : index
    %c0_1 = arith.constant 0 : index
    %c0_2 = arith.constant 0 : index
    %3 = vector.load %arg24[%c0, %c0_1, %c0_2] : memref<1x8x32xf32, #tpu.memory_space<vmem>>, vector<1x8x32xf32>
    %c0_3 = arith.constant 0 : index
    %c0_4 = arith.constant 0 : index
    %c0_5 = arith.constant 0 : index
    %4 = vector.load %arg4[%c0_3, %c0_4, %c0_5] : memref<1x8x32xf32, #tpu.memory_space<vmem>>, vector<1x8x32xf32>
    %c0_6 = arith.constant 0 : index
    %c0_7 = arith.constant 0 : index
    %c0_8 = arith.constant 0 : index
    %5 = vector.load %arg3[%c0_6, %c0_7, %c0_8] : memref<1x8x8xbf16, #tpu.memory_space<vmem>>, vector<1x8x8xbf16>
    %c0_9 = arith.constant 0 : index
    %c0_10 = arith.constant 0 : index
    %c0_11 = arith.constant 0 : index
    %6 = vector.load %arg5[%c0_9, %c0_10, %c0_11] : memref<1x1x8xbf16, #tpu.memory_space<vmem>>, vector<1x1x8xbf16>
    %c0_12 = arith.constant 0 : index
    %c0_13 = arith.constant 0 : index
    %c0_14 = arith.constant 0 : index
    %7 = vector.load %arg6[%c0_12, %c0_13, %c0_14] : memref<1x32x32xbf16, #tpu.memory_space<vmem>>, vector<1x32x32xbf16>
    %8 = vector.shape_cast %7 : vector<1x32x32xbf16> to vector<32x32xbf16>
    %c0_15 = arith.constant 0 : index
    %c0_16 = arith.constant 0 : index
    %c0_17 = arith.constant 0 : index
    %9 = vector.load %arg7[%c0_15, %c0_16, %c0_17] : memref<1x32x32xbf16, #tpu.memory_space<vmem>>, vector<1x32x32xbf16>
    %10 = vector.shape_cast %9 : vector<1x32x32xbf16> to vector<32x32xbf16>
    %c0_18 = arith.constant 0 : index
    %c0_19 = arith.constant 0 : index
    %c0_20 = arith.constant 0 : index
    %11 = vector.load %arg8[%c0_18, %c0_19, %c0_20] : memref<1x32x32xbf16, #tpu.memory_space<vmem>>, vector<1x32x32xbf16>
    %12 = vector.shape_cast %11 : vector<1x32x32xbf16> to vector<32x32xbf16>
    %c0_21 = arith.constant 0 : index
    %c0_22 = arith.constant 0 : index
    %c0_23 = arith.constant 0 : index
    %13 = vector.load %arg9[%c0_21, %c0_22, %c0_23] : memref<1x32x32xbf16, #tpu.memory_space<vmem>>, vector<1x32x32xbf16>
    %14 = vector.shape_cast %13 : vector<1x32x32xbf16> to vector<32x32xbf16>
    %c0_24 = arith.constant 0 : index
    %c0_25 = arith.constant 0 : index
    %c0_26 = arith.constant 0 : index
    %15 = vector.load %arg10[%c0_24, %c0_25, %c0_26] : memref<1x1x32xf32, #tpu.memory_space<vmem>>, vector<1x1x32xf32>
    %16 = vector.shape_cast %15 : vector<1x1x32xf32> to vector<1x32xf32>
    %c0_27 = arith.constant 0 : index
    %c0_28 = arith.constant 0 : index
    %c0_29 = arith.constant 0 : index
    %17 = vector.load %arg11[%c0_27, %c0_28, %c0_29] : memref<1x1x32xf32, #tpu.memory_space<vmem>>, vector<1x1x32xf32>
    %18 = vector.shape_cast %17 : vector<1x1x32xf32> to vector<1x32xf32>
    %19 = vector.shape_cast %3 : vector<1x8x32xf32> to vector<8x32xf32>
    %20 = arith.truncf %19 : vector<8x32xf32> to vector<8x32xbf16>
    %21 = vector.shape_cast %3 : vector<1x8x32xf32> to vector<8x32xf32>
    %22 = arith.truncf %21 : vector<8x32xf32> to vector<8x32xbf16>
    %cst = arith.constant dense<0.000000e+00> : vector<8x32xf32>
    %23 = tpu.matmul %20, %8, %cst {dimension_numbers = #tpu.dot_dimension_numbers<[1], [0], [0], [1], [0, 0, 1, 1], [], []>} : vector<8x32xbf16>, vector<32x32xbf16>, vector<8x32xf32> -> vector<8x32xf32>
    %24 = vector.shape_cast %23 : vector<8x32xf32> to vector<1x8x32xf32>
    %cst_30 = arith.constant dense<0.000000e+00> : vector<8x32xf32>
    %25 = tpu.matmul %22, %10, %cst_30 {dimension_numbers = #tpu.dot_dimension_numbers<[1], [0], [0], [1], [0, 0, 1, 1], [], []>} : vector<8x32xbf16>, vector<32x32xbf16>, vector<8x32xf32> -> vector<8x32xf32>
    %26 = vector.shape_cast %25 : vector<8x32xf32> to vector<1x8x32xf32>
    %cst_31 = arith.constant dense<0.000000e+00> : vector<8x32xf32>
    %27 = tpu.matmul %22, %12, %cst_31 {dimension_numbers = #tpu.dot_dimension_numbers<[1], [0], [0], [1], [0, 0, 1, 1], [], []>} : vector<8x32xbf16>, vector<32x32xbf16>, vector<8x32xf32> -> vector<8x32xf32>
    %28 = vector.shape_cast %27 : vector<8x32xf32> to vector<1x8x32xf32>
    %29 = vector.extract_strided_slice %24 {offsets = [0, 0, 0], sizes = [1, 8, 8], strides = [1, 1, 1]} : vector<1x8x32xf32> to vector<1x8x8xf32>
    %30 = arith.truncf %29 : vector<1x8x8xf32> to vector<1x8x8xbf16>
    %31 = vector.extract_strided_slice %26 {offsets = [0, 0, 0], sizes = [1, 8, 8], strides = [1, 1, 1]} : vector<1x8x32xf32> to vector<1x8x8xf32>
    %32 = arith.truncf %31 : vector<1x8x8xf32> to vector<1x8x8xbf16>
    %33 = vector.extract_strided_slice %28 {offsets = [0, 0, 0], sizes = [1, 8, 8], strides = [1, 1, 1]} : vector<1x8x32xf32> to vector<1x8x8xf32>
    %34 = arith.truncf %33 : vector<1x8x8xf32> to vector<1x8x8xbf16>
    "tpu.trace_start"() <{level = 10 : i32, message = "bqd,bkd->bqk"}> : () -> ()
    %cst_32 = arith.constant dense<0.000000e+00> : vector<1x8x8xf32>
    %35 = tpu.matmul %30, %32, %cst_32 {dimension_numbers = #tpu.dot_dimension_numbers<[2], [2], [1], [1], [0, 0, 0, 1, 1, 1], [0], [0]>} : vector<1x8x8xbf16>, vector<1x8x8xbf16>, vector<1x8x8xf32> -> vector<1x8x8xf32>
    "tpu.trace_stop"() : () -> ()
    %cst_33 = arith.constant 0.353553385 : f32
    %36 = vector.broadcast %cst_33 : f32 to vector<1x8x8xf32>
    %37 = arith.mulf %35, %36 : vector<1x8x8xf32>
    %38 = arith.extf %5 : vector<1x8x8xbf16> to vector<1x8x8xf32>
    %39 = arith.addf %37, %38 : vector<1x8x8xf32>
    %cst_34 = arith.constant dense<0xFF800000> : vector<1x8xf32>
    %40 = vector.multi_reduction <maximumf>, %39, %cst_34 [2] : vector<1x8x8xf32> to vector<1x8xf32>
    %41 = vector.shape_cast %40 : vector<1x8xf32> to vector<1x8x1xf32>
    %42 = vector.broadcast %41 : vector<1x8x1xf32> to vector<1x8x8xf32>
    %43 = arith.subf %39, %42 : vector<1x8x8xf32>
    %44 = math.exp %43 : vector<1x8x8xf32>
    %cst_35 = arith.constant dense<0.000000e+00> : vector<1x8xf32>
    %45 = vector.multi_reduction <add>, %44, %cst_35 [2] : vector<1x8x8xf32> to vector<1x8xf32>
    %46 = vector.shape_cast %45 : vector<1x8xf32> to vector<1x8x1xf32>
    %47 = vector.broadcast %46 : vector<1x8x1xf32> to vector<1x8x8xf32>
    %48 = arith.divf %44, %47 : vector<1x8x8xf32>
    %49 = arith.truncf %48 : vector<1x8x8xf32> to vector<1x8x8xbf16>
    "tpu.trace_start"() <{level = 10 : i32, message = "bqk,bkd->bqd"}> : () -> ()
    %cst_36 = arith.constant dense<0.000000e+00> : vector<1x8x8xf32>
    %50 = tpu.matmul %49, %34, %cst_36 {dimension_numbers = #tpu.dot_dimension_numbers<[2], [1], [1], [2], [0, 0, 0, 1, 1, 2], [0], [0]>} : vector<1x8x8xbf16>, vector<1x8x8xbf16>, vector<1x8x8xf32> -> vector<1x8x8xf32>
    "tpu.trace_stop"() : () -> ()
    %51 = vector.extract_strided_slice %24 {offsets = [0, 0, 8], sizes = [1, 8, 8], strides = [1, 1, 1]} : vector<1x8x32xf32> to vector<1x8x8xf32>
    %52 = arith.truncf %51 : vector<1x8x8xf32> to vector<1x8x8xbf16>
    %53 = vector.extract_strided_slice %26 {offsets = [0, 0, 8], sizes = [1, 8, 8], strides = [1, 1, 1]} : vector<1x8x32xf32> to vector<1x8x8xf32>
    %54 = arith.truncf %53 : vector<1x8x8xf32> to vector<1x8x8xbf16>
    %55 = vector.extract_strided_slice %28 {offsets = [0, 0, 8], sizes = [1, 8, 8], strides = [1, 1, 1]} : vector<1x8x32xf32> to vector<1x8x8xf32>
    %56 = arith.truncf %55 : vector<1x8x8xf32> to vector<1x8x8xbf16>
    "tpu.trace_start"() <{level = 10 : i32, message = "bqd,bkd->bqk"}> : () -> ()
    %cst_37 = arith.constant dense<0.000000e+00> : vector<1x8x8xf32>
    %57 = tpu.matmul %52, %54, %cst_37 {dimension_numbers = #tpu.dot_dimension_numbers<[2], [2], [1], [1], [0, 0, 0, 1, 1, 1], [0], [0]>} : vector<1x8x8xbf16>, vector<1x8x8xbf16>, vector<1x8x8xf32> -> vector<1x8x8xf32>
    "tpu.trace_stop"() : () -> ()
    %cst_38 = arith.constant 0.353553385 : f32
    %58 = vector.broadcast %cst_38 : f32 to vector<1x8x8xf32>
    %59 = arith.mulf %57, %58 : vector<1x8x8xf32>
    %60 = arith.extf %5 : vector<1x8x8xbf16> to vector<1x8x8xf32>
    %61 = arith.addf %59, %60 : vector<1x8x8xf32>
    %cst_39 = arith.constant dense<0xFF800000> : vector<1x8xf32>
    %62 = vector.multi_reduction <maximumf>, %61, %cst_39 [2] : vector<1x8x8xf32> to vector<1x8xf32>
    %63 = vector.shape_cast %62 : vector<1x8xf32> to vector<1x8x1xf32>
    %64 = vector.broadcast %63 : vector<1x8x1xf32> to vector<1x8x8xf32>
    %65 = arith.subf %61, %64 : vector<1x8x8xf32>
    %66 = math.exp %65 : vector<1x8x8xf32>
    %cst_40 = arith.constant dense<0.000000e+00> : vector<1x8xf32>
    %67 = vector.multi_reduction <add>, %66, %cst_40 [2] : vector<1x8x8xf32> to vector<1x8xf32>
    %68 = vector.shape_cast %67 : vector<1x8xf32> to vector<1x8x1xf32>
    %69 = vector.broadcast %68 : vector<1x8x1xf32> to vector<1x8x8xf32>
    %70 = arith.divf %66, %69 : vector<1x8x8xf32>
    %71 = arith.truncf %70 : vector<1x8x8xf32> to vector<1x8x8xbf16>
    "tpu.trace_start"() <{level = 10 : i32, message = "bqk,bkd->bqd"}> : () -> ()
    %cst_41 = arith.constant dense<0.000000e+00> : vector<1x8x8xf32>
    %72 = tpu.matmul %71, %56, %cst_41 {dimension_numbers = #tpu.dot_dimension_numbers<[2], [1], [1], [2], [0, 0, 0, 1, 1, 2], [0], [0]>} : vector<1x8x8xbf16>, vector<1x8x8xbf16>, vector<1x8x8xf32> -> vector<1x8x8xf32>
    "tpu.trace_stop"() : () -> ()
    %73 = vector.extract_strided_slice %24 {offsets = [0, 0, 16], sizes = [1, 8, 8], strides = [1, 1, 1]} : vector<1x8x32xf32> to vector<1x8x8xf32>
    %74 = arith.truncf %73 : vector<1x8x8xf32> to vector<1x8x8xbf16>
    %75 = vector.extract_strided_slice %26 {offsets = [0, 0, 16], sizes = [1, 8, 8], strides = [1, 1, 1]} : vector<1x8x32xf32> to vector<1x8x8xf32>
    %76 = arith.truncf %75 : vector<1x8x8xf32> to vector<1x8x8xbf16>
    %77 = vector.extract_strided_slice %28 {offsets = [0, 0, 16], sizes = [1, 8, 8], strides = [1, 1, 1]} : vector<1x8x32xf32> to vector<1x8x8xf32>
    %78 = arith.truncf %77 : vector<1x8x8xf32> to vector<1x8x8xbf16>
    "tpu.trace_start"() <{level = 10 : i32, message = "bqd,bkd->bqk"}> : () -> ()
    %cst_42 = arith.constant dense<0.000000e+00> : vector<1x8x8xf32>
    %79 = tpu.matmul %74, %76, %cst_42 {dimension_numbers = #tpu.dot_dimension_numbers<[2], [2], [1], [1], [0, 0, 0, 1, 1, 1], [0], [0]>} : vector<1x8x8xbf16>, vector<1x8x8xbf16>, vector<1x8x8xf32> -> vector<1x8x8xf32>
    "tpu.trace_stop"() : () -> ()
    %cst_43 = arith.constant 0.353553385 : f32
    %80 = vector.broadcast %cst_43 : f32 to vector<1x8x8xf32>
    %81 = arith.mulf %79, %80 : vector<1x8x8xf32>
    %82 = arith.extf %5 : vector<1x8x8xbf16> to vector<1x8x8xf32>
    %83 = arith.addf %81, %82 : vector<1x8x8xf32>
    %cst_44 = arith.constant dense<0xFF800000> : vector<1x8xf32>
    %84 = vector.multi_reduction <maximumf>, %83, %cst_44 [2] : vector<1x8x8xf32> to vector<1x8xf32>
    %85 = vector.shape_cast %84 : vector<1x8xf32> to vector<1x8x1xf32>
    %86 = vector.broadcast %85 : vector<1x8x1xf32> to vector<1x8x8xf32>
    %87 = arith.subf %83, %86 : vector<1x8x8xf32>
    %88 = math.exp %87 : vector<1x8x8xf32>
    %cst_45 = arith.constant dense<0.000000e+00> : vector<1x8xf32>
    %89 = vector.multi_reduction <add>, %88, %cst_45 [2] : vector<1x8x8xf32> to vector<1x8xf32>
    %90 = vector.shape_cast %89 : vector<1x8xf32> to vector<1x8x1xf32>
    %91 = vector.broadcast %90 : vector<1x8x1xf32> to vector<1x8x8xf32>
    %92 = arith.divf %88, %91 : vector<1x8x8xf32>
    %93 = arith.truncf %92 : vector<1x8x8xf32> to vector<1x8x8xbf16>
    "tpu.trace_start"() <{level = 10 : i32, message = "bqk,bkd->bqd"}> : () -> ()
    %cst_46 = arith.constant dense<0.000000e+00> : vector<1x8x8xf32>
    %94 = tpu.matmul %93, %78, %cst_46 {dimension_numbers = #tpu.dot_dimension_numbers<[2], [1], [1], [2], [0, 0, 0, 1, 1, 2], [0], [0]>} : vector<1x8x8xbf16>, vector<1x8x8xbf16>, vector<1x8x8xf32> -> vector<1x8x8xf32>
    "tpu.trace_stop"() : () -> ()
    %95 = vector.extract_strided_slice %24 {offsets = [0, 0, 24], sizes = [1, 8, 8], strides = [1, 1, 1]} : vector<1x8x32xf32> to vector<1x8x8xf32>
    %96 = arith.truncf %95 : vector<1x8x8xf32> to vector<1x8x8xbf16>
    %97 = vector.extract_strided_slice %26 {offsets = [0, 0, 24], sizes = [1, 8, 8], strides = [1, 1, 1]} : vector<1x8x32xf32> to vector<1x8x8xf32>
    %98 = arith.truncf %97 : vector<1x8x8xf32> to vector<1x8x8xbf16>
    %99 = vector.extract_strided_slice %28 {offsets = [0, 0, 24], sizes = [1, 8, 8], strides = [1, 1, 1]} : vector<1x8x32xf32> to vector<1x8x8xf32>
    %100 = arith.truncf %99 : vector<1x8x8xf32> to vector<1x8x8xbf16>
    "tpu.trace_start"() <{level = 10 : i32, message = "bqd,bkd->bqk"}> : () -> ()
    %cst_47 = arith.constant dense<0.000000e+00> : vector<1x8x8xf32>
    %101 = tpu.matmul %96, %98, %cst_47 {dimension_numbers = #tpu.dot_dimension_numbers<[2], [2], [1], [1], [0, 0, 0, 1, 1, 1], [0], [0]>} : vector<1x8x8xbf16>, vector<1x8x8xbf16>, vector<1x8x8xf32> -> vector<1x8x8xf32>
    "tpu.trace_stop"() : () -> ()
    %cst_48 = arith.constant 0.353553385 : f32
    %102 = vector.broadcast %cst_48 : f32 to vector<1x8x8xf32>
    %103 = arith.mulf %101, %102 : vector<1x8x8xf32>
    %104 = arith.extf %5 : vector<1x8x8xbf16> to vector<1x8x8xf32>
    %105 = arith.addf %103, %104 : vector<1x8x8xf32>
    %cst_49 = arith.constant dense<0xFF800000> : vector<1x8xf32>
    %106 = vector.multi_reduction <maximumf>, %105, %cst_49 [2] : vector<1x8x8xf32> to vector<1x8xf32>
    %107 = vector.shape_cast %106 : vector<1x8xf32> to vector<1x8x1xf32>
    %108 = vector.broadcast %107 : vector<1x8x1xf32> to vector<1x8x8xf32>
    %109 = arith.subf %105, %108 : vector<1x8x8xf32>
    %110 = math.exp %109 : vector<1x8x8xf32>
    %cst_50 = arith.constant dense<0.000000e+00> : vector<1x8xf32>
    %111 = vector.multi_reduction <add>, %110, %cst_50 [2] : vector<1x8x8xf32> to vector<1x8xf32>
    %112 = vector.shape_cast %111 : vector<1x8xf32> to vector<1x8x1xf32>
    %113 = vector.broadcast %112 : vector<1x8x1xf32> to vector<1x8x8xf32>
    %114 = arith.divf %110, %113 : vector<1x8x8xf32>
    %115 = arith.truncf %114 : vector<1x8x8xf32> to vector<1x8x8xbf16>
    "tpu.trace_start"() <{level = 10 : i32, message = "bqk,bkd->bqd"}> : () -> ()
    %cst_51 = arith.constant dense<0.000000e+00> : vector<1x8x8xf32>
    %116 = tpu.matmul %115, %100, %cst_51 {dimension_numbers = #tpu.dot_dimension_numbers<[2], [1], [1], [2], [0, 0, 0, 1, 1, 2], [0], [0]>} : vector<1x8x8xbf16>, vector<1x8x8xbf16>, vector<1x8x8xf32> -> vector<1x8x8xf32>
    "tpu.trace_stop"() : () -> ()
    %117 = tpu.concatenate %50, %72, %94, %116 in 2 : vector<1x8x8xf32>, vector<1x8x8xf32>, vector<1x8x8xf32>, vector<1x8x8xf32> -> vector<1x8x32xf32>
    %118 = vector.shape_cast %117 : vector<1x8x32xf32> to vector<8x32xf32>
    %119 = arith.truncf %118 : vector<8x32xf32> to vector<8x32xbf16>
    %cst_52 = arith.constant dense<0.000000e+00> : vector<8x32xf32>
    %120 = tpu.matmul %119, %14, %cst_52 {dimension_numbers = #tpu.dot_dimension_numbers<[1], [0], [0], [1], [0, 0, 1, 1], [], []>} : vector<8x32xbf16>, vector<32x32xbf16>, vector<8x32xf32> -> vector<8x32xf32>
    %121 = vector.shape_cast %120 : vector<8x32xf32> to vector<1x8x32xf32>
    %122 = arith.addf %121, %3 : vector<1x8x32xf32>
    %cst_53 = arith.constant dense<0.000000e+00> : vector<1x8xf32>
    %123 = vector.multi_reduction <add>, %122, %cst_53 [2] : vector<1x8x32xf32> to vector<1x8xf32>
    %124 = vector.shape_cast %123 : vector<1x8xf32> to vector<1x8x1xf32>
    %cst_54 = arith.constant 3.200000e+01 : f32
    %125 = vector.broadcast %cst_54 : f32 to vector<1x8x1xf32>
    %126 = arith.divf %124, %125 : vector<1x8x1xf32>
    %127 = vector.broadcast %126 : vector<1x8x1xf32> to vector<1x8x32xf32>
    %128 = arith.subf %122, %127 : vector<1x8x32xf32>
    %129 = arith.mulf %128, %128 : vector<1x8x32xf32>
    %cst_55 = arith.constant dense<0.000000e+00> : vector<1x8xf32>
    %130 = vector.multi_reduction <add>, %129, %cst_55 [2] : vector<1x8x32xf32> to vector<1x8xf32>
    %131 = vector.shape_cast %130 : vector<1x8xf32> to vector<1x8x1xf32>
    %cst_56 = arith.constant 3.200000e+01 : f32
    %132 = vector.broadcast %cst_56 : f32 to vector<1x8x1xf32>
    %133 = arith.divf %131, %132 : vector<1x8x1xf32>
    %134 = vector.broadcast %126 : vector<1x8x1xf32> to vector<1x8x32xf32>
    %135 = arith.subf %122, %134 : vector<1x8x32xf32>
    %cst_57 = arith.constant 9.99999997E-7 : f32
    %136 = vector.broadcast %cst_57 : f32 to vector<1x8x1xf32>
    %137 = arith.addf %133, %136 : vector<1x8x1xf32>
    %138 = math.rsqrt %137 : vector<1x8x1xf32>
    %139 = vector.broadcast %138 : vector<1x8x1xf32> to vector<1x8x32xf32>
    %140 = arith.mulf %135, %139 : vector<1x8x32xf32>
    %141 = vector.shape_cast %16 : vector<1x32xf32> to vector<1x1x32xf32>
    %142 = vector.broadcast %141 : vector<1x1x32xf32> to vector<1x8x32xf32>
    %143 = arith.mulf %140, %142 : vector<1x8x32xf32>
    %144 = vector.shape_cast %18 : vector<1x32xf32> to vector<1x1x32xf32>
    %145 = vector.broadcast %144 : vector<1x1x32xf32> to vector<1x8x32xf32>
    %146 = arith.addf %143, %145 : vector<1x8x32xf32>
    %c0_58 = arith.constant 0 : index
    %c0_59 = arith.constant 0 : index
    %c0_60 = arith.constant 0 : index
    %147 = vector.load %arg12[%c0_58, %c0_59, %c0_60] : memref<1x32x32xbf16, #tpu.memory_space<vmem>>, vector<1x32x32xbf16>
    %148 = vector.shape_cast %147 : vector<1x32x32xbf16> to vector<32x32xbf16>
    %c0_61 = arith.constant 0 : index
    %c0_62 = arith.constant 0 : index
    %c0_63 = arith.constant 0 : index
    %149 = vector.load %arg13[%c0_61, %c0_62, %c0_63] : memref<1x32x32xbf16, #tpu.memory_space<vmem>>, vector<1x32x32xbf16>
    %150 = vector.shape_cast %149 : vector<1x32x32xbf16> to vector<32x32xbf16>
    %c0_64 = arith.constant 0 : index
    %c0_65 = arith.constant 0 : index
    %c0_66 = arith.constant 0 : index
    %151 = vector.load %arg14[%c0_64, %c0_65, %c0_66] : memref<1x32x32xbf16, #tpu.memory_space<vmem>>, vector<1x32x32xbf16>
    %152 = vector.shape_cast %151 : vector<1x32x32xbf16> to vector<32x32xbf16>
    %c0_67 = arith.constant 0 : index
    %c0_68 = arith.constant 0 : index
    %c0_69 = arith.constant 0 : index
    %153 = vector.load %arg15[%c0_67, %c0_68, %c0_69] : memref<1x32x32xbf16, #tpu.memory_space<vmem>>, vector<1x32x32xbf16>
    %154 = vector.shape_cast %153 : vector<1x32x32xbf16> to vector<32x32xbf16>
    %c0_70 = arith.constant 0 : index
    %c0_71 = arith.constant 0 : index
    %c0_72 = arith.constant 0 : index
    %155 = vector.load %arg16[%c0_70, %c0_71, %c0_72] : memref<1x1x32xf32, #tpu.memory_space<vmem>>, vector<1x1x32xf32>
    %156 = vector.shape_cast %155 : vector<1x1x32xf32> to vector<1x32xf32>
    %c0_73 = arith.constant 0 : index
    %c0_74 = arith.constant 0 : index
    %c0_75 = arith.constant 0 : index
    %157 = vector.load %arg17[%c0_73, %c0_74, %c0_75] : memref<1x1x32xf32, #tpu.memory_space<vmem>>, vector<1x1x32xf32>
    %158 = vector.shape_cast %157 : vector<1x1x32xf32> to vector<1x32xf32>
    %159 = vector.shape_cast %146 : vector<1x8x32xf32> to vector<8x32xf32>
    %160 = arith.truncf %159 : vector<8x32xf32> to vector<8x32xbf16>
    %161 = vector.shape_cast %4 : vector<1x8x32xf32> to vector<8x32xf32>
    %162 = arith.truncf %161 : vector<8x32xf32> to vector<8x32xbf16>
    %cst_76 = arith.constant dense<0.000000e+00> : vector<8x32xf32>
    %163 = tpu.matmul %160, %148, %cst_76 {dimension_numbers = #tpu.dot_dimension_numbers<[1], [0], [0], [1], [0, 0, 1, 1], [], []>} : vector<8x32xbf16>, vector<32x32xbf16>, vector<8x32xf32> -> vector<8x32xf32>
    %164 = vector.shape_cast %163 : vector<8x32xf32> to vector<1x8x32xf32>
    %cst_77 = arith.constant dense<0.000000e+00> : vector<8x32xf32>
    %165 = tpu.matmul %162, %150, %cst_77 {dimension_numbers = #tpu.dot_dimension_numbers<[1], [0], [0], [1], [0, 0, 1, 1], [], []>} : vector<8x32xbf16>, vector<32x32xbf16>, vector<8x32xf32> -> vector<8x32xf32>
    %166 = vector.shape_cast %165 : vector<8x32xf32> to vector<1x8x32xf32>
    %cst_78 = arith.constant dense<0.000000e+00> : vector<8x32xf32>
    %167 = tpu.matmul %162, %152, %cst_78 {dimension_numbers = #tpu.dot_dimension_numbers<[1], [0], [0], [1], [0, 0, 1, 1], [], []>} : vector<8x32xbf16>, vector<32x32xbf16>, vector<8x32xf32> -> vector<8x32xf32>
    %168 = vector.shape_cast %167 : vector<8x32xf32> to vector<1x8x32xf32>
    %169 = vector.extract_strided_slice %164 {offsets = [0, 0, 0], sizes = [1, 8, 8], strides = [1, 1, 1]} : vector<1x8x32xf32> to vector<1x8x8xf32>
    %170 = arith.truncf %169 : vector<1x8x8xf32> to vector<1x8x8xbf16>
    %171 = vector.extract_strided_slice %166 {offsets = [0, 0, 0], sizes = [1, 8, 8], strides = [1, 1, 1]} : vector<1x8x32xf32> to vector<1x8x8xf32>
    %172 = arith.truncf %171 : vector<1x8x8xf32> to vector<1x8x8xbf16>
    %173 = vector.extract_strided_slice %168 {offsets = [0, 0, 0], sizes = [1, 8, 8], strides = [1, 1, 1]} : vector<1x8x32xf32> to vector<1x8x8xf32>
    %174 = arith.truncf %173 : vector<1x8x8xf32> to vector<1x8x8xbf16>
    "tpu.trace_start"() <{level = 10 : i32, message = "bqd,bkd->bqk"}> : () -> ()
    %cst_79 = arith.constant dense<0.000000e+00> : vector<1x8x8xf32>
    %175 = tpu.matmul %170, %172, %cst_79 {dimension_numbers = #tpu.dot_dimension_numbers<[2], [2], [1], [1], [0, 0, 0, 1, 1, 1], [0], [0]>} : vector<1x8x8xbf16>, vector<1x8x8xbf16>, vector<1x8x8xf32> -> vector<1x8x8xf32>
    "tpu.trace_stop"() : () -> ()
    %cst_80 = arith.constant 0.353553385 : f32
    %176 = vector.broadcast %cst_80 : f32 to vector<1x8x8xf32>
    %177 = arith.mulf %175, %176 : vector<1x8x8xf32>
    %178 = arith.extf %6 : vector<1x1x8xbf16> to vector<1x1x8xf32>
    %179 = vector.broadcast %178 : vector<1x1x8xf32> to vector<1x8x8xf32>
    %180 = arith.addf %177, %179 : vector<1x8x8xf32>
    %cst_81 = arith.constant dense<0xFF800000> : vector<1x8xf32>
    %181 = vector.multi_reduction <maximumf>, %180, %cst_81 [2] : vector<1x8x8xf32> to vector<1x8xf32>
    %182 = vector.shape_cast %181 : vector<1x8xf32> to vector<1x8x1xf32>
    %183 = vector.broadcast %182 : vector<1x8x1xf32> to vector<1x8x8xf32>
    %184 = arith.subf %180, %183 : vector<1x8x8xf32>
    %185 = math.exp %184 : vector<1x8x8xf32>
    %cst_82 = arith.constant dense<0.000000e+00> : vector<1x8xf32>
    %186 = vector.multi_reduction <add>, %185, %cst_82 [2] : vector<1x8x8xf32> to vector<1x8xf32>
    %187 = vector.shape_cast %186 : vector<1x8xf32> to vector<1x8x1xf32>
    %188 = vector.broadcast %187 : vector<1x8x1xf32> to vector<1x8x8xf32>
    %189 = arith.divf %185, %188 : vector<1x8x8xf32>
    %190 = arith.truncf %189 : vector<1x8x8xf32> to vector<1x8x8xbf16>
    "tpu.trace_start"() <{level = 10 : i32, message = "bqk,bkd->bqd"}> : () -> ()
    %cst_83 = arith.constant dense<0.000000e+00> : vector<1x8x8xf32>
    %191 = tpu.matmul %190, %174, %cst_83 {dimension_numbers = #tpu.dot_dimension_numbers<[2], [1], [1], [2], [0, 0, 0, 1, 1, 2], [0], [0]>} : vector<1x8x8xbf16>, vector<1x8x8xbf16>, vector<1x8x8xf32> -> vector<1x8x8xf32>
    "tpu.trace_stop"() : () -> ()
    %192 = vector.extract_strided_slice %164 {offsets = [0, 0, 8], sizes = [1, 8, 8], strides = [1, 1, 1]} : vector<1x8x32xf32> to vector<1x8x8xf32>
    %193 = arith.truncf %192 : vector<1x8x8xf32> to vector<1x8x8xbf16>
    %194 = vector.extract_strided_slice %166 {offsets = [0, 0, 8], sizes = [1, 8, 8], strides = [1, 1, 1]} : vector<1x8x32xf32> to vector<1x8x8xf32>
    %195 = arith.truncf %194 : vector<1x8x8xf32> to vector<1x8x8xbf16>
    %196 = vector.extract_strided_slice %168 {offsets = [0, 0, 8], sizes = [1, 8, 8], strides = [1, 1, 1]} : vector<1x8x32xf32> to vector<1x8x8xf32>
    %197 = arith.truncf %196 : vector<1x8x8xf32> to vector<1x8x8xbf16>
    "tpu.trace_start"() <{level = 10 : i32, message = "bqd,bkd->bqk"}> : () -> ()
    %cst_84 = arith.constant dense<0.000000e+00> : vector<1x8x8xf32>
    %198 = tpu.matmul %193, %195, %cst_84 {dimension_numbers = #tpu.dot_dimension_numbers<[2], [2], [1], [1], [0, 0, 0, 1, 1, 1], [0], [0]>} : vector<1x8x8xbf16>, vector<1x8x8xbf16>, vector<1x8x8xf32> -> vector<1x8x8xf32>
    "tpu.trace_stop"() : () -> ()
    %cst_85 = arith.constant 0.353553385 : f32
    %199 = vector.broadcast %cst_85 : f32 to vector<1x8x8xf32>
    %200 = arith.mulf %198, %199 : vector<1x8x8xf32>
    %201 = arith.extf %6 : vector<1x1x8xbf16> to vector<1x1x8xf32>
    %202 = vector.broadcast %201 : vector<1x1x8xf32> to vector<1x8x8xf32>
    %203 = arith.addf %200, %202 : vector<1x8x8xf32>
    %cst_86 = arith.constant dense<0xFF800000> : vector<1x8xf32>
    %204 = vector.multi_reduction <maximumf>, %203, %cst_86 [2] : vector<1x8x8xf32> to vector<1x8xf32>
    %205 = vector.shape_cast %204 : vector<1x8xf32> to vector<1x8x1xf32>
    %206 = vector.broadcast %205 : vector<1x8x1xf32> to vector<1x8x8xf32>
    %207 = arith.subf %203, %206 : vector<1x8x8xf32>
    %208 = math.exp %207 : vector<1x8x8xf32>
    %cst_87 = arith.constant dense<0.000000e+00> : vector<1x8xf32>
    %209 = vector.multi_reduction <add>, %208, %cst_87 [2] : vector<1x8x8xf32> to vector<1x8xf32>
    %210 = vector.shape_cast %209 : vector<1x8xf32> to vector<1x8x1xf32>
    %211 = vector.broadcast %210 : vector<1x8x1xf32> to vector<1x8x8xf32>
    %212 = arith.divf %208, %211 : vector<1x8x8xf32>
    %213 = arith.truncf %212 : vector<1x8x8xf32> to vector<1x8x8xbf16>
    "tpu.trace_start"() <{level = 10 : i32, message = "bqk,bkd->bqd"}> : () -> ()
    %cst_88 = arith.constant dense<0.000000e+00> : vector<1x8x8xf32>
    %214 = tpu.matmul %213, %197, %cst_88 {dimension_numbers = #tpu.dot_dimension_numbers<[2], [1], [1], [2], [0, 0, 0, 1, 1, 2], [0], [0]>} : vector<1x8x8xbf16>, vector<1x8x8xbf16>, vector<1x8x8xf32> -> vector<1x8x8xf32>
    "tpu.trace_stop"() : () -> ()
    %215 = vector.extract_strided_slice %164 {offsets = [0, 0, 16], sizes = [1, 8, 8], strides = [1, 1, 1]} : vector<1x8x32xf32> to vector<1x8x8xf32>
    %216 = arith.truncf %215 : vector<1x8x8xf32> to vector<1x8x8xbf16>
    %217 = vector.extract_strided_slice %166 {offsets = [0, 0, 16], sizes = [1, 8, 8], strides = [1, 1, 1]} : vector<1x8x32xf32> to vector<1x8x8xf32>
    %218 = arith.truncf %217 : vector<1x8x8xf32> to vector<1x8x8xbf16>
    %219 = vector.extract_strided_slice %168 {offsets = [0, 0, 16], sizes = [1, 8, 8], strides = [1, 1, 1]} : vector<1x8x32xf32> to vector<1x8x8xf32>
    %220 = arith.truncf %219 : vector<1x8x8xf32> to vector<1x8x8xbf16>
    "tpu.trace_start"() <{level = 10 : i32, message = "bqd,bkd->bqk"}> : () -> ()
    %cst_89 = arith.constant dense<0.000000e+00> : vector<1x8x8xf32>
    %221 = tpu.matmul %216, %218, %cst_89 {dimension_numbers = #tpu.dot_dimension_numbers<[2], [2], [1], [1], [0, 0, 0, 1, 1, 1], [0], [0]>} : vector<1x8x8xbf16>, vector<1x8x8xbf16>, vector<1x8x8xf32> -> vector<1x8x8xf32>
    "tpu.trace_stop"() : () -> ()
    %cst_90 = arith.constant 0.353553385 : f32
    %222 = vector.broadcast %cst_90 : f32 to vector<1x8x8xf32>
    %223 = arith.mulf %221, %222 : vector<1x8x8xf32>
    %224 = arith.extf %6 : vector<1x1x8xbf16> to vector<1x1x8xf32>
    %225 = vector.broadcast %224 : vector<1x1x8xf32> to vector<1x8x8xf32>
    %226 = arith.addf %223, %225 : vector<1x8x8xf32>
    %cst_91 = arith.constant dense<0xFF800000> : vector<1x8xf32>
    %227 = vector.multi_reduction <maximumf>, %226, %cst_91 [2] : vector<1x8x8xf32> to vector<1x8xf32>
    %228 = vector.shape_cast %227 : vector<1x8xf32> to vector<1x8x1xf32>
    %229 = vector.broadcast %228 : vector<1x8x1xf32> to vector<1x8x8xf32>
    %230 = arith.subf %226, %229 : vector<1x8x8xf32>
    %231 = math.exp %230 : vector<1x8x8xf32>
    %cst_92 = arith.constant dense<0.000000e+00> : vector<1x8xf32>
    %232 = vector.multi_reduction <add>, %231, %cst_92 [2] : vector<1x8x8xf32> to vector<1x8xf32>
    %233 = vector.shape_cast %232 : vector<1x8xf32> to vector<1x8x1xf32>
    %234 = vector.broadcast %233 : vector<1x8x1xf32> to vector<1x8x8xf32>
    %235 = arith.divf %231, %234 : vector<1x8x8xf32>
    %236 = arith.truncf %235 : vector<1x8x8xf32> to vector<1x8x8xbf16>
    "tpu.trace_start"() <{level = 10 : i32, message = "bqk,bkd->bqd"}> : () -> ()
    %cst_93 = arith.constant dense<0.000000e+00> : vector<1x8x8xf32>
    %237 = tpu.matmul %236, %220, %cst_93 {dimension_numbers = #tpu.dot_dimension_numbers<[2], [1], [1], [2], [0, 0, 0, 1, 1, 2], [0], [0]>} : vector<1x8x8xbf16>, vector<1x8x8xbf16>, vector<1x8x8xf32> -> vector<1x8x8xf32>
    "tpu.trace_stop"() : () -> ()
    %238 = vector.extract_strided_slice %164 {offsets = [0, 0, 24], sizes = [1, 8, 8], strides = [1, 1, 1]} : vector<1x8x32xf32> to vector<1x8x8xf32>
    %239 = arith.truncf %238 : vector<1x8x8xf32> to vector<1x8x8xbf16>
    %240 = vector.extract_strided_slice %166 {offsets = [0, 0, 24], sizes = [1, 8, 8], strides = [1, 1, 1]} : vector<1x8x32xf32> to vector<1x8x8xf32>
    %241 = arith.truncf %240 : vector<1x8x8xf32> to vector<1x8x8xbf16>
    %242 = vector.extract_strided_slice %168 {offsets = [0, 0, 24], sizes = [1, 8, 8], strides = [1, 1, 1]} : vector<1x8x32xf32> to vector<1x8x8xf32>
    %243 = arith.truncf %242 : vector<1x8x8xf32> to vector<1x8x8xbf16>
    "tpu.trace_start"() <{level = 10 : i32, message = "bqd,bkd->bqk"}> : () -> ()
    %cst_94 = arith.constant dense<0.000000e+00> : vector<1x8x8xf32>
    %244 = tpu.matmul %239, %241, %cst_94 {dimension_numbers = #tpu.dot_dimension_numbers<[2], [2], [1], [1], [0, 0, 0, 1, 1, 1], [0], [0]>} : vector<1x8x8xbf16>, vector<1x8x8xbf16>, vector<1x8x8xf32> -> vector<1x8x8xf32>
    "tpu.trace_stop"() : () -> ()
    %cst_95 = arith.constant 0.353553385 : f32
    %245 = vector.broadcast %cst_95 : f32 to vector<1x8x8xf32>
    %246 = arith.mulf %244, %245 : vector<1x8x8xf32>
    %247 = arith.extf %6 : vector<1x1x8xbf16> to vector<1x1x8xf32>
    %248 = vector.broadcast %247 : vector<1x1x8xf32> to vector<1x8x8xf32>
    %249 = arith.addf %246, %248 : vector<1x8x8xf32>
    %cst_96 = arith.constant dense<0xFF800000> : vector<1x8xf32>
    %250 = vector.multi_reduction <maximumf>, %249, %cst_96 [2] : vector<1x8x8xf32> to vector<1x8xf32>
    %251 = vector.shape_cast %250 : vector<1x8xf32> to vector<1x8x1xf32>
    %252 = vector.broadcast %251 : vector<1x8x1xf32> to vector<1x8x8xf32>
    %253 = arith.subf %249, %252 : vector<1x8x8xf32>
    %254 = math.exp %253 : vector<1x8x8xf32>
    %cst_97 = arith.constant dense<0.000000e+00> : vector<1x8xf32>
    %255 = vector.multi_reduction <add>, %254, %cst_97 [2] : vector<1x8x8xf32> to vector<1x8xf32>
    %256 = vector.shape_cast %255 : vector<1x8xf32> to vector<1x8x1xf32>
    %257 = vector.broadcast %256 : vector<1x8x1xf32> to vector<1x8x8xf32>
    %258 = arith.divf %254, %257 : vector<1x8x8xf32>
    %259 = arith.truncf %258 : vector<1x8x8xf32> to vector<1x8x8xbf16>
    "tpu.trace_start"() <{level = 10 : i32, message = "bqk,bkd->bqd"}> : () -> ()
    %cst_98 = arith.constant dense<0.000000e+00> : vector<1x8x8xf32>
    %260 = tpu.matmul %259, %243, %cst_98 {dimension_numbers = #tpu.dot_dimension_numbers<[2], [1], [1], [2], [0, 0, 0, 1, 1, 2], [0], [0]>} : vector<1x8x8xbf16>, vector<1x8x8xbf16>, vector<1x8x8xf32> -> vector<1x8x8xf32>
    "tpu.trace_stop"() : () -> ()
    %261 = tpu.concatenate %191, %214, %237, %260 in 2 : vector<1x8x8xf32>, vector<1x8x8xf32>, vector<1x8x8xf32>, vector<1x8x8xf32> -> vector<1x8x32xf32>
    %262 = vector.shape_cast %261 : vector<1x8x32xf32> to vector<8x32xf32>
    %263 = arith.truncf %262 : vector<8x32xf32> to vector<8x32xbf16>
    %cst_99 = arith.constant dense<0.000000e+00> : vector<8x32xf32>
    %264 = tpu.matmul %263, %154, %cst_99 {dimension_numbers = #tpu.dot_dimension_numbers<[1], [0], [0], [1], [0, 0, 1, 1], [], []>} : vector<8x32xbf16>, vector<32x32xbf16>, vector<8x32xf32> -> vector<8x32xf32>
    %265 = vector.shape_cast %264 : vector<8x32xf32> to vector<1x8x32xf32>
    %266 = arith.addf %265, %146 : vector<1x8x32xf32>
    %cst_100 = arith.constant dense<0.000000e+00> : vector<1x8xf32>
    %267 = vector.multi_reduction <add>, %266, %cst_100 [2] : vector<1x8x32xf32> to vector<1x8xf32>
    %268 = vector.shape_cast %267 : vector<1x8xf32> to vector<1x8x1xf32>
    %cst_101 = arith.constant 3.200000e+01 : f32
    %269 = vector.broadcast %cst_101 : f32 to vector<1x8x1xf32>
    %270 = arith.divf %268, %269 : vector<1x8x1xf32>
    %271 = vector.broadcast %270 : vector<1x8x1xf32> to vector<1x8x32xf32>
    %272 = arith.subf %266, %271 : vector<1x8x32xf32>
    %273 = arith.mulf %272, %272 : vector<1x8x32xf32>
    %cst_102 = arith.constant dense<0.000000e+00> : vector<1x8xf32>
    %274 = vector.multi_reduction <add>, %273, %cst_102 [2] : vector<1x8x32xf32> to vector<1x8xf32>
    %275 = vector.shape_cast %274 : vector<1x8xf32> to vector<1x8x1xf32>
    %cst_103 = arith.constant 3.200000e+01 : f32
    %276 = vector.broadcast %cst_103 : f32 to vector<1x8x1xf32>
    %277 = arith.divf %275, %276 : vector<1x8x1xf32>
    %278 = vector.broadcast %270 : vector<1x8x1xf32> to vector<1x8x32xf32>
    %279 = arith.subf %266, %278 : vector<1x8x32xf32>
    %cst_104 = arith.constant 9.99999997E-7 : f32
    %280 = vector.broadcast %cst_104 : f32 to vector<1x8x1xf32>
    %281 = arith.addf %277, %280 : vector<1x8x1xf32>
    %282 = math.rsqrt %281 : vector<1x8x1xf32>
    %283 = vector.broadcast %282 : vector<1x8x1xf32> to vector<1x8x32xf32>
    %284 = arith.mulf %279, %283 : vector<1x8x32xf32>
    %285 = vector.shape_cast %156 : vector<1x32xf32> to vector<1x1x32xf32>
    %286 = vector.broadcast %285 : vector<1x1x32xf32> to vector<1x8x32xf32>
    %287 = arith.mulf %284, %286 : vector<1x8x32xf32>
    %288 = vector.shape_cast %158 : vector<1x32xf32> to vector<1x1x32xf32>
    %289 = vector.broadcast %288 : vector<1x1x32xf32> to vector<1x8x32xf32>
    %290 = arith.addf %287, %289 : vector<1x8x32xf32>
    %c0_105 = arith.constant 0 : index
    %c0_106 = arith.constant 0 : index
    %c0_107 = arith.constant 0 : index
    %291 = vector.load %arg18[%c0_105, %c0_106, %c0_107] : memref<1x32x64xbf16, #tpu.memory_space<vmem>>, vector<1x32x64xbf16>
    %292 = vector.shape_cast %291 : vector<1x32x64xbf16> to vector<32x64xbf16>
    %c0_108 = arith.constant 0 : index
    %c0_109 = arith.constant 0 : index
    %c0_110 = arith.constant 0 : index
    %293 = vector.load %arg19[%c0_108, %c0_109, %c0_110] : memref<1x1x64xf32, #tpu.memory_space<vmem>>, vector<1x1x64xf32>
    %294 = vector.shape_cast %293 : vector<1x1x64xf32> to vector<1x64xf32>
    %c0_111 = arith.constant 0 : index
    %c0_112 = arith.constant 0 : index
    %c0_113 = arith.constant 0 : index
    %295 = vector.load %arg20[%c0_111, %c0_112, %c0_113] : memref<1x64x32xbf16, #tpu.memory_space<vmem>>, vector<1x64x32xbf16>
    %296 = vector.shape_cast %295 : vector<1x64x32xbf16> to vector<64x32xbf16>
    %c0_114 = arith.constant 0 : index
    %c0_115 = arith.constant 0 : index
    %c0_116 = arith.constant 0 : index
    %297 = vector.load %arg21[%c0_114, %c0_115, %c0_116] : memref<1x1x32xf32, #tpu.memory_space<vmem>>, vector<1x1x32xf32>
    %298 = vector.shape_cast %297 : vector<1x1x32xf32> to vector<1x32xf32>
    %c0_117 = arith.constant 0 : index
    %c0_118 = arith.constant 0 : index
    %c0_119 = arith.constant 0 : index
    %299 = vector.load %arg22[%c0_117, %c0_118, %c0_119] : memref<1x1x32xf32, #tpu.memory_space<vmem>>, vector<1x1x32xf32>
    %300 = vector.shape_cast %299 : vector<1x1x32xf32> to vector<1x32xf32>
    %c0_120 = arith.constant 0 : index
    %c0_121 = arith.constant 0 : index
    %c0_122 = arith.constant 0 : index
    %301 = vector.load %arg23[%c0_120, %c0_121, %c0_122] : memref<1x1x32xf32, #tpu.memory_space<vmem>>, vector<1x1x32xf32>
    %302 = vector.shape_cast %301 : vector<1x1x32xf32> to vector<1x32xf32>
    %303 = vector.shape_cast %290 : vector<1x8x32xf32> to vector<8x32xf32>
    %304 = arith.truncf %303 : vector<8x32xf32> to vector<8x32xbf16>
    %cst_123 = arith.constant dense<0.000000e+00> : vector<8x64xf32>
    %305 = tpu.matmul %304, %292, %cst_123 {dimension_numbers = #tpu.dot_dimension_numbers<[1], [0], [0], [1], [0, 0, 1, 1], [], []>} : vector<8x32xbf16>, vector<32x64xbf16>, vector<8x64xf32> -> vector<8x64xf32>
    %306 = vector.broadcast %294 : vector<1x64xf32> to vector<8x64xf32>
    %307 = arith.addf %305, %306 : vector<8x64xf32>
    %cst_124 = arith.constant 0.000000e+00 : f32
    %308 = vector.broadcast %cst_124 : f32 to vector<8x64xf32>
    %309 = arith.maximumf %307, %308 : vector<8x64xf32>
    %310 = arith.truncf %309 : vector<8x64xf32> to vector<8x64xbf16>
    %cst_125 = arith.constant dense<0.000000e+00> : vector<8x32xf32>
    %311 = tpu.matmul %310, %296, %cst_125 {dimension_numbers = #tpu.dot_dimension_numbers<[1], [0], [0], [1], [0, 0, 1, 1], [], []>} : vector<8x64xbf16>, vector<64x32xbf16>, vector<8x32xf32> -> vector<8x32xf32>
    %312 = vector.broadcast %298 : vector<1x32xf32> to vector<8x32xf32>
    %313 = arith.addf %311, %312 : vector<8x32xf32>
    %314 = vector.shape_cast %313 : vector<8x32xf32> to vector<1x8x32xf32>
    %315 = arith.addf %314, %290 : vector<1x8x32xf32>
    %cst_126 = arith.constant dense<0.000000e+00> : vector<1x8xf32>
    %316 = vector.multi_reduction <add>, %315, %cst_126 [2] : vector<1x8x32xf32> to vector<1x8xf32>
    %317 = vector.shape_cast %316 : vector<1x8xf32> to vector<1x8x1xf32>
    %cst_127 = arith.constant 3.200000e+01 : f32
    %318 = vector.broadcast %cst_127 : f32 to vector<1x8x1xf32>
    %319 = arith.divf %317, %318 : vector<1x8x1xf32>
    %320 = vector.broadcast %319 : vector<1x8x1xf32> to vector<1x8x32xf32>
    %321 = arith.subf %315, %320 : vector<1x8x32xf32>
    %322 = arith.mulf %321, %321 : vector<1x8x32xf32>
    %cst_128 = arith.constant dense<0.000000e+00> : vector<1x8xf32>
    %323 = vector.multi_reduction <add>, %322, %cst_128 [2] : vector<1x8x32xf32> to vector<1x8xf32>
    %324 = vector.shape_cast %323 : vector<1x8xf32> to vector<1x8x1xf32>
    %cst_129 = arith.constant 3.200000e+01 : f32
    %325 = vector.broadcast %cst_129 : f32 to vector<1x8x1xf32>
    %326 = arith.divf %324, %325 : vector<1x8x1xf32>
    %327 = vector.broadcast %319 : vector<1x8x1xf32> to vector<1x8x32xf32>
    %328 = arith.subf %315, %327 : vector<1x8x32xf32>
    %cst_130 = arith.constant 9.99999997E-7 : f32
    %329 = vector.broadcast %cst_130 : f32 to vector<1x8x1xf32>
    %330 = arith.addf %326, %329 : vector<1x8x1xf32>
    %331 = math.rsqrt %330 : vector<1x8x1xf32>
    %332 = vector.broadcast %331 : vector<1x8x1xf32> to vector<1x8x32xf32>
    %333 = arith.mulf %328, %332 : vector<1x8x32xf32>
    %334 = vector.shape_cast %300 : vector<1x32xf32> to vector<1x1x32xf32>
    %335 = vector.broadcast %334 : vector<1x1x32xf32> to vector<1x8x32xf32>
    %336 = arith.mulf %333, %335 : vector<1x8x32xf32>
    %337 = vector.shape_cast %302 : vector<1x32xf32> to vector<1x1x32xf32>
    %338 = vector.broadcast %337 : vector<1x1x32xf32> to vector<1x8x32xf32>
    %339 = arith.addf %336, %338 : vector<1x8x32xf32>
    %c0_131 = arith.constant 0 : index
    %c0_132 = arith.constant 0 : index
    %c0_133 = arith.constant 0 : index
    %340 = vector.load %arg24[%c0_131, %c0_132, %c0_133] : memref<1x8x32xf32, #tpu.memory_space<vmem>>, vector<1x8x32xf32>
    tpu.vector_store %arg24[%c0_131, %c0_132, %c0_133], %339 {strides = array<i32>} : memref<1x8x32xf32, #tpu.memory_space<vmem>>, vector<1x8x32xf32>,
    return
  }
  func.func @transform_0(%arg0: i32, %arg1: i32) -> (i32, i32, i32) {
    %c0_i32 = arith.constant 0 : i32
    %c0_i32_0 = arith.constant 0 : i32
    %c0_i32_1 = arith.constant 0 : i32
    return %arg0, %c0_i32, %c0_i32_0 : i32, i32, i32
  }
  func.func @transform_1(%arg0: i32, %arg1: i32) -> (i32, i32, i32) {
    %c0_i32 = arith.constant 0 : i32
    %c0_i32_0 = arith.constant 0 : i32
    %c0_i32_1 = arith.constant 0 : i32
    return %arg0, %c0_i32, %c0_i32_0 : i32, i32, i32
  }
  func.func @transform_2(%arg0: i32, %arg1: i32) -> (i32, i32, i32) {
    %c0_i32 = arith.constant 0 : i32
    %c0_i32_0 = arith.constant 0 : i32
    %c0_i32_1 = arith.constant 0 : i32
    return %arg0, %c0_i32, %c0_i32_0 : i32, i32, i32
  }
  func.func @transform_3(%arg0: i32, %arg1: i32) -> (i32, i32, i32) {
    %c0_i32 = arith.constant 0 : i32
    %c0_i32_0 = arith.constant 0 : i32
    %c0_i32_1 = arith.constant 0 : i32
    return %arg0, %c0_i32, %c0_i32_0 : i32, i32, i32
  }
  func.func @transform_4(%arg0: i32, %arg1: i32) -> (i32, i32, i32) {
    %c0_i32 = arith.constant 0 : i32
    %c0_i32_0 = arith.constant 0 : i32
    %c0_i32_1 = arith.constant 0 : i32
    return %arg1, %c0_i32, %c0_i32_0 : i32, i32, i32
  }
  func.func @transform_5(%arg0: i32, %arg1: i32) -> (i32, i32, i32) {
    %c0_i32 = arith.constant 0 : i32
    %c0_i32_0 = arith.constant 0 : i32
    %c0_i32_1 = arith.constant 0 : i32
    return %arg1, %c0_i32, %c0_i32_0 : i32, i32, i32
  }
  func.func @transform_6(%arg0: i32, %arg1: i32) -> (i32, i32, i32) {
    %c0_i32 = arith.constant 0 : i32
    %c0_i32_0 = arith.constant 0 : i32
    %c0_i32_1 = arith.constant 0 : i32
    return %arg1, %c0_i32, %c0_i32_0 : i32, i32, i32
  }
  func.func @transform_7(%arg0: i32, %arg1: i32) -> (i32, i32, i32) {
    %c0_i32 = arith.constant 0 : i32
    %c0_i32_0 = arith.constant 0 : i32
    %c0_i32_1 = arith.constant 0 : i32
    return %arg1, %c0_i32, %c0_i32_0 : i32, i32, i32
  }
  func.func @transform_8(%arg0: i32, %arg1: i32) -> (i32, i32, i32) {
    %c0_i32 = arith.constant 0 : i32
    %c0_i32_0 = arith.constant 0 : i32
    %c0_i32_1 = arith.constant 0 : i32
    return %arg1, %c0_i32, %c0_i32_0 : i32, i32, i32
  }
  func.func @transform_9(%arg0: i32, %arg1: i32) -> (i32, i32, i32) {
    %c0_i32 = arith.constant 0 : i32
    %c0_i32_0 = arith.constant 0 : i32
    %c0_i32_1 = arith.constant 0 : i32
    return %arg1, %c0_i32, %c0_i32_0 : i32, i32, i32
  }
  func.func @transform_10(%arg0: i32, %arg1: i32) -> (i32, i32, i32) {
    %c0_i32 = arith.constant 0 : i32
    %c0_i32_0 = arith.constant 0 : i32
    %c0_i32_1 = arith.constant 0 : i32
    return %arg1, %c0_i32, %c0_i32_0 : i32, i32, i32
  }
  func.func @transform_11(%arg0: i32, %arg1: i32) -> (i32, i32, i32) {
    %c0_i32 = arith.constant 0 : i32
    %c0_i32_0 = arith.constant 0 : i32
    %c0_i32_1 = arith.constant 0 : i32
    return %arg1, %c0_i32, %c0_i32_0 : i32, i32, i32
  }
  func.func @transform_12(%arg0: i32, %arg1: i32) -> (i32, i32, i32) {
    %c0_i32 = arith.constant 0 : i32
    %c0_i32_0 = arith.constant 0 : i32
    %c0_i32_1 = arith.constant 0 : i32
    return %arg1, %c0_i32, %c0_i32_0 : i32, i32, i32
  }
  func.func @transform_13(%arg0: i32, %arg1: i32) -> (i32, i32, i32) {
    %c0_i32 = arith.constant 0 : i32
    %c0_i32_0 = arith.constant 0 : i32
    %c0_i32_1 = arith.constant 0 : i32
    return %arg1, %c0_i32, %c0_i32_0 : i32, i32, i32
  }
  func.func @transform_14(%arg0: i32, %arg1: i32) -> (i32, i32, i32) {
    %c0_i32 = arith.constant 0 : i32
    %c0_i32_0 = arith.constant 0 : i32
    %c0_i32_1 = arith.constant 0 : i32
    return %arg1, %c0_i32, %c0_i32_0 : i32, i32, i32
  }
  func.func @transform_15(%arg0: i32, %arg1: i32) -> (i32, i32, i32) {
    %c0_i32 = arith.constant 0 : i32
    %c0_i32_0 = arith.constant 0 : i32
    %c0_i32_1 = arith.constant 0 : i32
    return %arg1, %c0_i32, %c0_i32_0 : i32, i32, i32
  }
  func.func @transform_16(%arg0: i32, %arg1: i32) -> (i32, i32, i32) {
    %c0_i32 = arith.constant 0 : i32
    %c0_i32_0 = arith.constant 0 : i32
    %c0_i32_1 = arith.constant 0 : i32
    return %arg1, %c0_i32, %c0_i32_0 : i32, i32, i32
  }
  func.func @transform_17(%arg0: i32, %arg1: i32) -> (i32, i32, i32) {
    %c0_i32 = arith.constant 0 : i32
    %c0_i32_0 = arith.constant 0 : i32
    %c0_i32_1 = arith.constant 0 : i32
    return %arg1, %c0_i32, %c0_i32_0 : i32, i32, i32
  }
  func.func @transform_18(%arg0: i32, %arg1: i32) -> (i32, i32, i32) {
    %c0_i32 = arith.constant 0 : i32
    %c0_i32_0 = arith.constant 0 : i32
    %c0_i32_1 = arith.constant 0 : i32
    return %arg1, %c0_i32, %c0_i32_0 : i32, i32, i32
  }
  func.func @transform_19(%arg0: i32, %arg1: i32) -> (i32, i32, i32) {
    %c0_i32 = arith.constant 0 : i32
    %c0_i32_0 = arith.constant 0 : i32
    %c0_i32_1 = arith.constant 0 : i32
    return %arg1, %c0_i32, %c0_i32_0 : i32, i32, i32
  }
  func.func @transform_20(%arg0: i32, %arg1: i32) -> (i32, i32, i32) {
    %c0_i32 = arith.constant 0 : i32
    %c0_i32_0 = arith.constant 0 : i32
    %c0_i32_1 = arith.constant 0 : i32
    return %arg1, %c0_i32, %c0_i32_0 : i32, i32, i32
  }
  func.func @transform_21(%arg0: i32, %arg1: i32) -> (i32, i32, i32) {
    %c0_i32 = arith.constant 0 : i32
    %c0_i32_0 = arith.constant 0 : i32
    %c0_i32_1 = arith.constant 0 : i32
    return %arg1, %c0_i32, %c0_i32_0 : i32, i32, i32
  }
  func.func @transform_22(%arg0: i32, %arg1: i32) -> (i32, i32, i32) {
    %c0_i32 = arith.constant 0 : i32
    %c0_i32_0 = arith.constant 0 : i32
    %c0_i32_1 = arith.constant 0 : i32
    return %arg0, %c0_i32, %c0_i32_0 : i32, i32, i32
  }
}

</mosaic_0001>

<llo_original>
// kernel: tpu_custom_call.1
$region0: #{tpu_custom_call.1}
  #allocation0 [shape = 'u32[]', space=smem, size = 0x4, offset = 0x4, fixed_abs, tag = 'smem constant byte address 0x4 - core index']
  #allocation1 [shape = 'u32[144,128]{1,0:T(1,128)}', space=vmem, size = 0x12000, scoped, tag = 'internal scratch']
  %s0 = inlined_call_operand.hbm [shape: f32[2,8,32], index: 0, kind: input, shape index: {}]
  %s1 = inlined_call_operand.hbm [shape: bf16[2,8,8], index: 1, kind: input, shape index: {}]
  %s2 = inlined_call_operand.hbm [shape: f32[2,8,32], index: 2, kind: input, shape index: {}]
  %s3 = inlined_call_operand.vmem [shape: bf16[2,1,8], index: 3, kind: input, shape index: {}]
  %s4 = inlined_call_operand.vmem [shape: bf16[2,32,32], index: 4, kind: input, shape index: {}]
  %s5 = inlined_call_operand.vmem [shape: bf16[2,32,32], index: 5, kind: input, shape index: {}]
  %s6 = inlined_call_operand.vmem [shape: bf16[2,32,32], index: 6, kind: input, shape index: {}]
  %s7 = inlined_call_operand.hbm [shape: bf16[2,32,32], index: 7, kind: input, shape index: {}]
  %s8 = inlined_call_operand.hbm [shape: f32[2,1,32], index: 8, kind: input, shape index: {}]
  %s9 = inlined_call_operand.hbm [shape: f32[2,1,32], index: 9, kind: input, shape index: {}]
  %s10 = inlined_call_operand.vmem [shape: bf16[2,32,32], index: 10, kind: input, shape index: {}]
  %s11 = inlined_call_operand.hbm [shape: bf16[2,32,32], index: 11, kind: input, shape index: {}]
  %s12 = inlined_call_operand.hbm [shape: bf16[2,32,32], index: 12, kind: input, shape index: {}]
  %s13 = inlined_call_operand.hbm [shape: bf16[2,32,32], index: 13, kind: input, shape index: {}]
  %s14 = inlined_call_operand.hbm [shape: f32[2,1,32], index: 14, kind: input, shape index: {}]
  %s15 = inlined_call_operand.hbm [shape: f32[2,1,32], index: 15, kind: input, shape index: {}]
  %s16 = inlined_call_operand.hbm [shape: bf16[2,32,64], index: 16, kind: input, shape index: {}]
  %s17 = inlined_call_operand.vmem [shape: f32[2,1,64], index: 17, kind: input, shape index: {}]
  %s18 = inlined_call_operand.vmem [shape: bf16[2,64,32], index: 18, kind: input, shape index: {}]
  %s19 = inlined_call_operand.vmem [shape: f32[2,1,32], index: 19, kind: input, shape index: {}]
  %s20 = inlined_call_operand.vmem [shape: f32[2,1,32], index: 20, kind: input, shape index: {}]
  %s21 = inlined_call_operand.vmem [shape: f32[2,1,32], index: 21, kind: input, shape index: {}]
  %s22 = inlined_call_operand.hbm [shape: f32[2,8,32], index: 22, kind: output, shape index: {}]
  %s23 = sld [smem:[#allocation0]]
  $region173: #{tpu_custom_call.1} parent=0
    _
  %s25 = ssub.s32 1, %s23
  %s26 = scalar_select 0, %s25, %s23
  $region1: #{tpu_custom_call.1} parent=0
    #allocation2 [shape = 'u8[8192]{0}', space=vmem, size = 0x2000, scoped, tag = 'input window, operand 0']
    #allocation3 [shape = 's32[2]{0}', space=sflag, size = 0x8, scoped, tag = 'scoped memory for tpu_custom_call.1']
    #allocation4 [shape = 's32[2]{0}', space=sflag, size = 0x8, scoped, tag = 'scoped memory for tpu_custom_call.1']
    #allocation5 [shape = 'u8[4096]{0}', space=vmem, size = 0x1000, scoped, tag = 'input window, operand 1']
    #allocation6 [shape = 's32[2]{0}', space=sflag, size = 0x8, scoped, tag = 'scoped memory for tpu_custom_call.1']
    #allocation7 [shape = 'u8[8192]{0}', space=vmem, size = 0x2000, scoped, tag = 'input window, operand 2']
    #allocation8 [shape = 'u8[16384]{0}', space=vmem, size = 0x4000, scoped, tag = 'input window, operand 7']
    #allocation9 [shape = 's32[2]{0}', space=sflag, size = 0x8, scoped, tag = 'scoped memory for tpu_custom_call.1']
    #allocation10 [shape = 'u8[1024]{0}', space=vmem, size = 0x400, scoped, tag = 'input window, operand 8']
    #allocation11 [shape = 'u8[1024]{0}', space=vmem, size = 0x400, scoped, tag = 'input window, operand 9']
    #allocation12 [shape = 's32[2]{0}', space=sflag, size = 0x8, scoped, tag = 'scoped memory for tpu_custom_call.1']
    #allocation13 [shape = 'u8[16384]{0}', space=vmem, size = 0x4000, scoped, tag = 'input window, operand 11']
    #allocation14 [shape = 'u8[16384]{0}', space=vmem, size = 0x4000, scoped, tag = 'input window, operand 12']
    #allocation15 [shape = 's32[2]{0}', space=sflag, size = 0x8, scoped, tag = 'scoped memory for tpu_custom_call.1']
    #allocation16 [shape = 'u8[16384]{0}', space=vmem, size = 0x4000, scoped, tag = 'input window, operand 13']
    #allocation17 [shape = 'u8[1024]{0}', space=vmem, size = 0x400, scoped, tag = 'input window, operand 14']
    #allocation18 [shape = 's32[2]{0}', space=sflag, size = 0x8, scoped, tag = 'scoped memory for tpu_custom_call.1']
    #allocation19 [shape = 'u8[1024]{0}', space=vmem, size = 0x400, scoped, tag = 'input window, operand 15']
    #allocation20 [shape = 'u8[16384]{0}', space=vmem, size = 0x4000, scoped, tag = 'input window, operand 16']
    #allocation21 [shape = 's32[2]{0}', space=sflag, size = 0x8, scoped, tag = 'scoped memory for tpu_custom_call.1']
    #allocation22 [shape = 'u8[8192]{0}', space=vmem, size = 0x2000, scoped, tag = 'output window, operand 0']
    %27 = vsyncpa [#allocation3], 0
    %s28 = scalar_lea.sflag [#allocation3], 1
    %29 = vsyncpa %s28, 0
    %30 = vsyncpa [#allocation6], 0
    %s31 = scalar_lea.sflag [#allocation6], 1
    %32 = vsyncpa %s31, 0
    %33 = vsyncpa [#allocation9], 0
    %s34 = scalar_lea.sflag [#allocation9], 1
    %35 = vsyncpa %s34, 0
    %36 = vsyncpa [#allocation12], 0
    %s37 = scalar_lea.sflag [#allocation12], 1
    %38 = vsyncpa %s37, 0
    %39 = vsyncpa [#allocation15], 0
    %s40 = scalar_lea.sflag [#allocation15], 1
    %41 = vsyncpa %s40, 0
    %42 = vsyncpa [#allocation18], 0
    %s43 = scalar_lea.sflag [#allocation18], 1
    %44 = vsyncpa %s43, 0
    %45 = vsyncpa [#allocation21], 0
    %s46 = scalar_lea.sflag [#allocation21], 1
    %47 = vsyncpa %s46, 0
    %48 = vsyncpa [#allocation4], 0
    %s49 = scalar_lea.sflag [#allocation4], 1
    %50 = vsyncpa %s49, 0
    loop: start=0, step=1, limit=6
    $region2: #{tpu_custom_call.1} parent=1 // loop_pre_header
      _
    $region3: #{tpu_custom_call.1} parent=1 // loop_header
      %s52 = sphi 0, %s56
      %p53 = scmp.ge.s32.totalorder %s52, 6
      %s59 = sphi 0, %s71
      %s60 = sphi 0, %s67
      %s61 = sphi 0, %s59
      %s62 = sphi 0, %s60
      %s63 = sphi 0, %s61
      %s64 = sphi 0, %s62
      %s74 = sphi 0, %s76
      %s77 = sphi 0, %s74
      %s78 = sphi 0, %s77
      %s94 = sphi 0, %s78
      %s100 = sphi 0, %s102
      %s103 = sphi 0, %s100
      %s104 = sphi 0, %s103
      %s120 = sphi 0, %s104
      %s126 = sphi 0, %s128
      %s129 = sphi 0, %s126
      %s130 = sphi 0, %s129
      %s146 = sphi 0, %s130
      %s152 = sphi 0, %s154
      %s155 = sphi 0, %s152
      %s156 = sphi 0, %s155
      %s172 = sphi 0, %s156
      %s178 = sphi 0, %s180
      %s181 = sphi 0, %s178
      %s182 = sphi 0, %s181
      %s198 = sphi 0, %s182
      %s204 = sphi 0, %s206
      %s207 = sphi 0, %s204
      %s208 = sphi 0, %s207
      %s224 = sphi 0, %s208
      %s230 = sphi 0, %s232
      %s233 = sphi 0, %s230
      %s234 = sphi 0, %s233
      %s250 = sphi 0, %s234
      %s256 = sphi 0, %s258
      %s259 = sphi 0, %s256
      %s260 = sphi 0, %s259
      %s276 = sphi 0, %s260
      %s282 = sphi 0, %s284
      %s285 = sphi 0, %s282
      %s286 = sphi 0, %s285
      %s302 = sphi 0, %s286
      %s308 = sphi 0, %s310
      %s311 = sphi 0, %s308
      %s312 = sphi 0, %s311
      %s328 = sphi 0, %s312
      %s334 = sphi 0, %s336
      %s337 = sphi 0, %s334
      %s338 = sphi 0, %s337
      %s354 = sphi 0, %s338
      %s360 = sphi 0, %s362
      %s363 = sphi 0, %s360
      %s364 = sphi 0, %s363
      %s380 = sphi 0, %s364
      %s386 = sphi 0, %s388
      %s389 = sphi 0, %s386
      %s390 = sphi 0, %s389
      %s406 = sphi 0, %s390
      %s412 = sphi 0, %s414
      %s415 = sphi 0, %s412
      %s416 = sphi 0, %s415
      %s432 = sphi 0, %s416
      %s438 = sphi 0, %s440
      %s441 = sphi 0, %s438
      %s442 = sphi 0, %s441
      %s458 = sphi 0, %s442
      %s464 = sphi 0, %s466
      %s467 = sphi 0, %s464
      %s468 = sphi 0, %s467
      %s484 = sphi 0, %s468
      %s490 = sphi 0, %s492
      %s493 = sphi 0, %s490
      %s494 = sphi 0, %s493
      %s510 = sphi 0, %s494
      %s516 = sphi 0, %s518
      %s519 = sphi 0, %s516
      %s520 = sphi 0, %s519
      %s536 = sphi 0, %s520
      %s542 = sphi 0, %s544
      %s545 = sphi 0, %s542
      %s546 = sphi 0, %s545
      %s562 = sphi 0, %s546
      %s568 = sphi 0, %s570
      %s571 = sphi 0, %s568
      %s572 = sphi 0, %s571
      %s588 = sphi 0, %s572
      %s594 = sphi 0, %s596
      %s597 = sphi 0, %s594
      %s598 = sphi 0, %s597
      %s614 = sphi 0, %s598
      %s620 = sphi 0, %s622
      %s623 = sphi 0, %s620
      %s624 = sphi 0, %s623
      %s640 = sphi 0, %s624
      %s646 = sphi 0, %s648
      %s649 = sphi 0, %s646
      %s650 = sphi 0, %s649
      %s666 = sphi 0, %s650
    $region4: #{tpu_custom_call.1} parent=1 // loop_header_branch
      %55 = sbr.rel (%p53) target = $region8
    $region5: #{tpu_custom_call.1} parent=1 // loop_body
      %s57 = ssub.s32 %s52, 1
      %s58 = ssub.s32 %s52, 2
      %s65 = sadd.s32 1, %s60
      %p66 = scmp.ge.s32.totalorder %s65, 2
      %s67 = scalar_select %p66, 0, %s65
      %s68 = sadd.s32 1, %s59
      %s69 = scalar_select %p66, %s68, %s59
      %p70 = scmp.ge.s32.totalorder %s69, 2
      %s71 = scalar_select %p70, 0, %s69
      %s72 = ssub.s32 %s59, %s71
      %p73 = scmp.eq.s32.totalorder %s72, 0
      %s75 = sadd.s32 %s74, 1
      %s76 = scalar_select %p73, %s74, %s75
      %p79 = pneg %p73
      %p80 = scmp.eq.s32.totalorder %s52, 3
      %p81 = por %p79, %p80
      %p82 = scmp.ne.s32.totalorder %s74, %s77
      %p83 = scmp.eq.s32.totalorder %s52, 0
      %p84 = por %p82, %p83
      %p85 = scmp.ne.s32.totalorder %s74, %s77
      %p86 = scmp.eq.s32.totalorder %s57, 3
      %p87 = por %p85, %p86
      %p88 = scmp.ne.s32.totalorder %s77, %s78
      %p89 = scmp.eq.s32.totalorder %s57, 0
      %p90 = por %p88, %p89
      %p91 = scmp.ne.s32.totalorder %s77, %s78
      %p92 = scmp.eq.s32.totalorder %s58, 3
      %p93 = por %p91, %p92
      %p95 = scmp.ne.s32.totalorder %s78, %s94
      %p96 = scmp.eq.s32.totalorder %s58, 0
      %p97 = por %p95, %p96
      %s98 = ssub.s32 %s59, %s71
      %p99 = scmp.eq.s32.totalorder %s98, 0
      %s101 = sadd.s32 %s100, 1
      %s102 = scalar_select %p99, %s100, %s101
      %p105 = pneg %p99
      %p106 = scmp.eq.s32.totalorder %s52, 3
      %p107 = por %p105, %p106
      %p108 = scmp.ne.s32.totalorder %s100, %s103
      %p109 = scmp.eq.s32.totalorder %s52, 0
      %p110 = por %p108, %p109
      %p111 = scmp.ne.s32.totalorder %s100, %s103
      %p112 = scmp.eq.s32.totalorder %s57, 3
      %p113 = por %p111, %p112
      %p114 = scmp.ne.s32.totalorder %s103, %s104
      %p115 = scmp.eq.s32.totalorder %s57, 0
      %p116 = por %p114, %p115
      %p117 = scmp.ne.s32.totalorder %s103, %s104
      %p118 = scmp.eq.s32.totalorder %s58, 3
      %p119 = por %p117, %p118
      %p121 = scmp.ne.s32.totalorder %s104, %s120
      %p122 = scmp.eq.s32.totalorder %s58, 0
      %p123 = por %p121, %p122
      %s124 = ssub.s32 %s59, %s71
      %p125 = scmp.eq.s32.totalorder %s124, 0
      %s127 = sadd.s32 %s126, 1
      %s128 = scalar_select %p125, %s126, %s127
      %p131 = pneg %p125
      %p132 = scmp.eq.s32.totalorder %s52, 3
      %p133 = por %p131, %p132
      %p134 = scmp.ne.s32.totalorder %s126, %s129
      %p135 = scmp.eq.s32.totalorder %s52, 0
      %p136 = por %p134, %p135
      %p137 = scmp.ne.s32.totalorder %s126, %s129
      %p138 = scmp.eq.s32.totalorder %s57, 3
      %p139 = por %p137, %p138
      %p140 = scmp.ne.s32.totalorder %s129, %s130
      %p141 = scmp.eq.s32.totalorder %s57, 0
      %p142 = por %p140, %p141
      %p143 = scmp.ne.s32.totalorder %s129, %s130
      %p144 = scmp.eq.s32.totalorder %s58, 3
      %p145 = por %p143, %p144
      %p147 = scmp.ne.s32.totalorder %s130, %s146
      %p148 = scmp.eq.s32.totalorder %s58, 0
      %p149 = por %p147, %p148
      %s150 = ssub.s32 %s59, %s71
      %p151 = scmp.eq.s32.totalorder %s150, 0
      %s153 = sadd.s32 %s152, 1
      %s154 = scalar_select %p151, %s152, %s153
      %p157 = pneg %p151
      %p158 = scmp.eq.s32.totalorder %s52, 3
      %p159 = por %p157, %p158
      %p160 = scmp.ne.s32.totalorder %s152, %s155
      %p161 = scmp.eq.s32.totalorder %s52, 0
      %p162 = por %p160, %p161
      %p163 = scmp.ne.s32.totalorder %s152, %s155
      %p164 = scmp.eq.s32.totalorder %s57, 3
      %p165 = por %p163, %p164
      %p166 = scmp.ne.s32.totalorder %s155, %s156
      %p167 = scmp.eq.s32.totalorder %s57, 0
      %p168 = por %p166, %p167
      %p169 = scmp.ne.s32.totalorder %s155, %s156
      %p170 = scmp.eq.s32.totalorder %s58, 3
      %p171 = por %p169, %p170
      %p173 = scmp.ne.s32.totalorder %s156, %s172
      %p174 = scmp.eq.s32.totalorder %s58, 0
      %p175 = por %p173, %p174
      %s176 = ssub.s32 %s60, %s67
      %p177 = scmp.eq.s32.totalorder %s176, 0
      %s179 = sadd.s32 %s178, 1
      %s180 = scalar_select %p177, %s178, %s179
      %p183 = pneg %p177
      %p184 = scmp.eq.s32.totalorder %s52, 3
      %p185 = por %p183, %p184
      %p186 = scmp.ne.s32.totalorder %s178, %s181
      %p187 = scmp.eq.s32.totalorder %s52, 0
      %p188 = por %p186, %p187
      %p189 = scmp.ne.s32.totalorder %s178, %s181
      %p190 = scmp.eq.s32.totalorder %s57, 3
      %p191 = por %p189, %p190
      %p192 = scmp.ne.s32.totalorder %s181, %s182
      %p193 = scmp.eq.s32.totalorder %s57, 0
      %p194 = por %p192, %p193
      %p195 = scmp.ne.s32.totalorder %s181, %s182
      %p196 = scmp.eq.s32.totalorder %s58, 3
      %p197 = por %p195, %p196
      %p199 = scmp.ne.s32.totalorder %s182, %s198
      %p200 = scmp.eq.s32.totalorder %s58, 0
      %p201 = por %p199, %p200
      %s202 = ssub.s32 %s60, %s67
      %p203 = scmp.eq.s32.totalorder %s202, 0
      %s205 = sadd.s32 %s204, 1
      %s206 = scalar_select %p203, %s204, %s205
      %p209 = pneg %p203
      %p210 = scmp.eq.s32.totalorder %s52, 3
      %p211 = por %p209, %p210
      %p212 = scmp.ne.s32.totalorder %s204, %s207
      %p213 = scmp.eq.s32.totalorder %s52, 0
      %p214 = por %p212, %p213
      %p215 = scmp.ne.s32.totalorder %s204, %s207
      %p216 = scmp.eq.s32.totalorder %s57, 3
      %p217 = por %p215, %p216
      %p218 = scmp.ne.s32.totalorder %s207, %s208
      %p219 = scmp.eq.s32.totalorder %s57, 0
      %p220 = por %p218, %p219
      %p221 = scmp.ne.s32.totalorder %s207, %s208
      %p222 = scmp.eq.s32.totalorder %s58, 3
      %p223 = por %p221, %p222
      %p225 = scmp.ne.s32.totalorder %s208, %s224
      %p226 = scmp.eq.s32.totalorder %s58, 0
      %p227 = por %p225, %p226
      %s228 = ssub.s32 %s60, %s67
      %p229 = scmp.eq.s32.totalorder %s228, 0
      %s231 = sadd.s32 %s230, 1
      %s232 = scalar_select %p229, %s230, %s231
      %p235 = pneg %p229
      %p236 = scmp.eq.s32.totalorder %s52, 3
      %p237 = por %p235, %p236
      %p238 = scmp.ne.s32.totalorder %s230, %s233
      %p239 = scmp.eq.s32.totalorder %s52, 0
      %p240 = por %p238, %p239
      %p241 = scmp.ne.s32.totalorder %s230, %s233
      %p242 = scmp.eq.s32.totalorder %s57, 3
      %p243 = por %p241, %p242
      %p244 = scmp.ne.s32.totalorder %s233, %s234
      %p245 = scmp.eq.s32.totalorder %s57, 0
      %p246 = por %p244, %p245
      %p247 = scmp.ne.s32.totalorder %s233, %s234
      %p248 = scmp.eq.s32.totalorder %s58, 3
      %p249 = por %p247, %p248
      %p251 = scmp.ne.s32.totalorder %s234, %s250
      %p252 = scmp.eq.s32.totalorder %s58, 0
      %p253 = por %p251, %p252
      %s254 = ssub.s32 %s60, %s67
      %p255 = scmp.eq.s32.totalorder %s254, 0
      %s257 = sadd.s32 %s256, 1
      %s258 = scalar_select %p255, %s256, %s257
      %p261 = pneg %p255
      %p262 = scmp.eq.s32.totalorder %s52, 3
      %p263 = por %p261, %p262
      %p264 = scmp.ne.s32.totalorder %s256, %s259
      %p265 = scmp.eq.s32.totalorder %s52, 0
      %p266 = por %p264, %p265
      %p267 = scmp.ne.s32.totalorder %s256, %s259
      %p268 = scmp.eq.s32.totalorder %s57, 3
      %p269 = por %p267, %p268
      %p270 = scmp.ne.s32.totalorder %s259, %s260
      %p271 = scmp.eq.s32.totalorder %s57, 0
      %p272 = por %p270, %p271
      %p273 = scmp.ne.s32.totalorder %s259, %s260
      %p274 = scmp.eq.s32.totalorder %s58, 3
      %p275 = por %p273, %p274
      %p277 = scmp.ne.s32.totalorder %s260, %s276
      %p278 = scmp.eq.s32.totalorder %s58, 0
      %p279 = por %p277, %p278
      %s280 = ssub.s32 %s60, %s67
      %p281 = scmp.eq.s32.totalorder %s280, 0
      %s283 = sadd.s32 %s282, 1
      %s284 = scalar_select %p281, %s282, %s283
      %p287 = pneg %p281
      %p288 = scmp.eq.s32.totalorder %s52, 3
      %p289 = por %p287, %p288
      %p290 = scmp.ne.s32.totalorder %s282, %s285
      %p291 = scmp.eq.s32.totalorder %s52, 0
      %p292 = por %p290, %p291
      %p293 = scmp.ne.s32.totalorder %s282, %s285
      %p294 = scmp.eq.s32.totalorder %s57, 3
      %p295 = por %p293, %p294
      %p296 = scmp.ne.s32.totalorder %s285, %s286
      %p297 = scmp.eq.s32.totalorder %s57, 0
      %p298 = por %p296, %p297
      %p299 = scmp.ne.s32.totalorder %s285, %s286
      %p300 = scmp.eq.s32.totalorder %s58, 3
      %p301 = por %p299, %p300
      %p303 = scmp.ne.s32.totalorder %s286, %s302
      %p304 = scmp.eq.s32.totalorder %s58, 0
      %p305 = por %p303, %p304
      %s306 = ssub.s32 %s60, %s67
      %p307 = scmp.eq.s32.totalorder %s306, 0
      %s309 = sadd.s32 %s308, 1
      %s310 = scalar_select %p307, %s308, %s309
      %p313 = pneg %p307
      %p314 = scmp.eq.s32.totalorder %s52, 3
      %p315 = por %p313, %p314
      %p316 = scmp.ne.s32.totalorder %s308, %s311
      %p317 = scmp.eq.s32.totalorder %s52, 0
      %p318 = por %p316, %p317
      %p319 = scmp.ne.s32.totalorder %s308, %s311
      %p320 = scmp.eq.s32.totalorder %s57, 3
      %p321 = por %p319, %p320
      %p322 = scmp.ne.s32.totalorder %s311, %s312
      %p323 = scmp.eq.s32.totalorder %s57, 0
      %p324 = por %p322, %p323
      %p325 = scmp.ne.s32.totalorder %s311, %s312
      %p326 = scmp.eq.s32.totalorder %s58, 3
      %p327 = por %p325, %p326
      %p329 = scmp.ne.s32.totalorder %s312, %s328
      %p330 = scmp.eq.s32.totalorder %s58, 0
      %p331 = por %p329, %p330
      %s332 = ssub.s32 %s60, %s67
      %p333 = scmp.eq.s32.totalorder %s332, 0
      %s335 = sadd.s32 %s334, 1
      %s336 = scalar_select %p333, %s334, %s335
      %p339 = pneg %p333
      %p340 = scmp.eq.s32.totalorder %s52, 3
      %p341 = por %p339, %p340
      %p342 = scmp.ne.s32.totalorder %s334, %s337
      %p343 = scmp.eq.s32.totalorder %s52, 0
      %p344 = por %p342, %p343
      %p345 = scmp.ne.s32.totalorder %s334, %s337
      %p346 = scmp.eq.s32.totalorder %s57, 3
      %p347 = por %p345, %p346
      %p348 = scmp.ne.s32.totalorder %s337, %s338
      %p349 = scmp.eq.s32.totalorder %s57, 0
      %p350 = por %p348, %p349
      %p351 = scmp.ne.s32.totalorder %s337, %s338
      %p352 = scmp.eq.s32.totalorder %s58, 3
      %p353 = por %p351, %p352
      %p355 = scmp.ne.s32.totalorder %s338, %s354
      %p356 = scmp.eq.s32.totalorder %s58, 0
      %p357 = por %p355, %p356
      %s358 = ssub.s32 %s60, %s67
      %p359 = scmp.eq.s32.totalorder %s358, 0
      %s361 = sadd.s32 %s360, 1
      %s362 = scalar_select %p359, %s360, %s361
      %p365 = pneg %p359
      %p366 = scmp.eq.s32.totalorder %s52, 3
      %p367 = por %p365, %p366
      %p368 = scmp.ne.s32.totalorder %s360, %s363
      %p369 = scmp.eq.s32.totalorder %s52, 0
      %p370 = por %p368, %p369
      %p371 = scmp.ne.s32.totalorder %s360, %s363
      %p372 = scmp.eq.s32.totalorder %s57, 3
      %p373 = por %p371, %p372
      %p374 = scmp.ne.s32.totalorder %s363, %s364
      %p375 = scmp.eq.s32.totalorder %s57, 0
      %p376 = por %p374, %p375
      %p377 = scmp.ne.s32.totalorder %s363, %s364
      %p378 = scmp.eq.s32.totalorder %s58, 3
      %p379 = por %p377, %p378
      %p381 = scmp.ne.s32.totalorder %s364, %s380
      %p382 = scmp.eq.s32.totalorder %s58, 0
      %p383 = por %p381, %p382
      %s384 = ssub.s32 %s60, %s67
      %p385 = scmp.eq.s32.totalorder %s384, 0
      %s387 = sadd.s32 %s386, 1
      %s388 = scalar_select %p385, %s386, %s387
      %p391 = pneg %p385
      %p392 = scmp.eq.s32.totalorder %s52, 3
      %p393 = por %p391, %p392
      %p394 = scmp.ne.s32.totalorder %s386, %s389
      %p395 = scmp.eq.s32.totalorder %s52, 0
      %p396 = por %p394, %p395
      %p397 = scmp.ne.s32.totalorder %s386, %s389
      %p398 = scmp.eq.s32.totalorder %s57, 3
      %p399 = por %p397, %p398
      %p400 = scmp.ne.s32.totalorder %s389, %s390
      %p401 = scmp.eq.s32.totalorder %s57, 0
      %p402 = por %p400, %p401
      %p403 = scmp.ne.s32.totalorder %s389, %s390
      %p404 = scmp.eq.s32.totalorder %s58, 3
      %p405 = por %p403, %p404
      %p407 = scmp.ne.s32.totalorder %s390, %s406
      %p408 = scmp.eq.s32.totalorder %s58, 0
      %p409 = por %p407, %p408
      %s410 = ssub.s32 %s60, %s67
      %p411 = scmp.eq.s32.totalorder %s410, 0
      %s413 = sadd.s32 %s412, 1
      %s414 = scalar_select %p411, %s412, %s413
      %p417 = pneg %p411
      %p418 = scmp.eq.s32.totalorder %s52, 3
      %p419 = por %p417, %p418
      %p420 = scmp.ne.s32.totalorder %s412, %s415
      %p421 = scmp.eq.s32.totalorder %s52, 0
      %p422 = por %p420, %p421
      %p423 = scmp.ne.s32.totalorder %s412, %s415
      %p424 = scmp.eq.s32.totalorder %s57, 3
      %p425 = por %p423, %p424
      %p426 = scmp.ne.s32.totalorder %s415, %s416
      %p427 = scmp.eq.s32.totalorder %s57, 0
      %p428 = por %p426, %p427
      %p429 = scmp.ne.s32.totalorder %s415, %s416
      %p430 = scmp.eq.s32.totalorder %s58, 3
      %p431 = por %p429, %p430
      %p433 = scmp.ne.s32.totalorder %s416, %s432
      %p434 = scmp.eq.s32.totalorder %s58, 0
      %p435 = por %p433, %p434
      %s436 = ssub.s32 %s60, %s67
      %p437 = scmp.eq.s32.totalorder %s436, 0
      %s439 = sadd.s32 %s438, 1
      %s440 = scalar_select %p437, %s438, %s439
      %p443 = pneg %p437
      %p444 = scmp.eq.s32.totalorder %s52, 3
      %p445 = por %p443, %p444
      %p446 = scmp.ne.s32.totalorder %s438, %s441
      %p447 = scmp.eq.s32.totalorder %s52, 0
      %p448 = por %p446, %p447
      %p449 = scmp.ne.s32.totalorder %s438, %s441
      %p450 = scmp.eq.s32.totalorder %s57, 3
      %p451 = por %p449, %p450
      %p452 = scmp.ne.s32.totalorder %s441, %s442
      %p453 = scmp.eq.s32.totalorder %s57, 0
      %p454 = por %p452, %p453
      %p455 = scmp.ne.s32.totalorder %s441, %s442
      %p456 = scmp.eq.s32.totalorder %s58, 3
      %p457 = por %p455, %p456
      %p459 = scmp.ne.s32.totalorder %s442, %s458
      %p460 = scmp.eq.s32.totalorder %s58, 0
      %p461 = por %p459, %p460
      %s462 = ssub.s32 %s60, %s67
      %p463 = scmp.eq.s32.totalorder %s462, 0
      %s465 = sadd.s32 %s464, 1
      %s466 = scalar_select %p463, %s464, %s465
      %p469 = pneg %p463
      %p470 = scmp.eq.s32.totalorder %s52, 3
      %p471 = por %p469, %p470
      %p472 = scmp.ne.s32.totalorder %s464, %s467
      %p473 = scmp.eq.s32.totalorder %s52, 0
      %p474 = por %p472, %p473
      %p475 = scmp.ne.s32.totalorder %s464, %s467
      %p476 = scmp.eq.s32.totalorder %s57, 3
      %p477 = por %p475, %p476
      %p478 = scmp.ne.s32.totalorder %s467, %s468
      %p479 = scmp.eq.s32.totalorder %s57, 0
      %p480 = por %p478, %p479
      %p481 = scmp.ne.s32.totalorder %s467, %s468
      %p482 = scmp.eq.s32.totalorder %s58, 3
      %p483 = por %p481, %p482
      %p485 = scmp.ne.s32.totalorder %s468, %s484
      %p486 = scmp.eq.s32.totalorder %s58, 0
      %p487 = por %p485, %p486
      %s488 = ssub.s32 %s60, %s67
      %p489 = scmp.eq.s32.totalorder %s488, 0
      %s491 = sadd.s32 %s490, 1
      %s492 = scalar_select %p489, %s490, %s491
      %p495 = pneg %p489
      %p496 = scmp.eq.s32.totalorder %s52, 3
      %p497 = por %p495, %p496
      %p498 = scmp.ne.s32.totalorder %s490, %s493
      %p499 = scmp.eq.s32.totalorder %s52, 0
      %p500 = por %p498, %p499
      %p501 = scmp.ne.s32.totalorder %s490, %s493
      %p502 = scmp.eq.s32.totalorder %s57, 3
      %p503 = por %p501, %p502
      %p504 = scmp.ne.s32.totalorder %s493, %s494
      %p505 = scmp.eq.s32.totalorder %s57, 0
      %p506 = por %p504, %p505
      %p507 = scmp.ne.s32.totalorder %s493, %s494
      %p508 = scmp.eq.s32.totalorder %s58, 3
      %p509 = por %p507, %p508
      %p511 = scmp.ne.s32.totalorder %s494, %s510
      %p512 = scmp.eq.s32.totalorder %s58, 0
      %p513 = por %p511, %p512
      %s514 = ssub.s32 %s60, %s67
      %p515 = scmp.eq.s32.totalorder %s514, 0
      %s517 = sadd.s32 %s516, 1
      %s518 = scalar_select %p515, %s516, %s517
      %p521 = pneg %p515
      %p522 = scmp.eq.s32.totalorder %s52, 3
      %p523 = por %p521, %p522
      %p524 = scmp.ne.s32.totalorder %s516, %s519
      %p525 = scmp.eq.s32.totalorder %s52, 0
      %p526 = por %p524, %p525
      %p527 = scmp.ne.s32.totalorder %s516, %s519
      %p528 = scmp.eq.s32.totalorder %s57, 3
      %p529 = por %p527, %p528
      %p530 = scmp.ne.s32.totalorder %s519, %s520
      %p531 = scmp.eq.s32.totalorder %s57, 0
      %p532 = por %p530, %p531
      %p533 = scmp.ne.s32.totalorder %s519, %s520
      %p534 = scmp.eq.s32.totalorder %s58, 3
      %p535 = por %p533, %p534
      %p537 = scmp.ne.s32.totalorder %s520, %s536
      %p538 = scmp.eq.s32.totalorder %s58, 0
      %p539 = por %p537, %p538
      %s540 = ssub.s32 %s60, %s67
      %p541 = scmp.eq.s32.totalorder %s540, 0
      %s543 = sadd.s32 %s542, 1
      %s544 = scalar_select %p541, %s542, %s543
      %p547 = pneg %p541
      %p548 = scmp.eq.s32.totalorder %s52, 3
      %p549 = por %p547, %p548
      %p550 = scmp.ne.s32.totalorder %s542, %s545
      %p551 = scmp.eq.s32.totalorder %s52, 0
      %p552 = por %p550, %p551
      %p553 = scmp.ne.s32.totalorder %s542, %s545
      %p554 = scmp.eq.s32.totalorder %s57, 3
      %p555 = por %p553, %p554
      %p556 = scmp.ne.s32.totalorder %s545, %s546
      %p557 = scmp.eq.s32.totalorder %s57, 0
      %p558 = por %p556, %p557
      %p559 = scmp.ne.s32.totalorder %s545, %s546
      %p560 = scmp.eq.s32.totalorder %s58, 3
      %p561 = por %p559, %p560
      %p563 = scmp.ne.s32.totalorder %s546, %s562
      %p564 = scmp.eq.s32.totalorder %s58, 0
      %p565 = por %p563, %p564
      %s566 = ssub.s32 %s60, %s67
      %p567 = scmp.eq.s32.totalorder %s566, 0
      %s569 = sadd.s32 %s568, 1
      %s570 = scalar_select %p567, %s568, %s569
      %p573 = pneg %p567
      %p574 = scmp.eq.s32.totalorder %s52, 3
      %p575 = por %p573, %p574
      %p576 = scmp.ne.s32.totalorder %s568, %s571
      %p577 = scmp.eq.s32.totalorder %s52, 0
      %p578 = por %p576, %p577
      %p579 = scmp.ne.s32.totalorder %s568, %s571
      %p580 = scmp.eq.s32.totalorder %s57, 3
      %p581 = por %p579, %p580
      %p582 = scmp.ne.s32.totalorder %s571, %s572
      %p583 = scmp.eq.s32.totalorder %s57, 0
      %p584 = por %p582, %p583
      %p585 = scmp.ne.s32.totalorder %s571, %s572
      %p586 = scmp.eq.s32.totalorder %s58, 3
      %p587 = por %p585, %p586
      %p589 = scmp.ne.s32.totalorder %s572, %s588
      %p590 = scmp.eq.s32.totalorder %s58, 0
      %p591 = por %p589, %p590
      %s592 = ssub.s32 %s60, %s67
      %p593 = scmp.eq.s32.totalorder %s592, 0
      %s595 = sadd.s32 %s594, 1
      %s596 = scalar_select %p593, %s594, %s595
      %p599 = pneg %p593
      %p600 = scmp.eq.s32.totalorder %s52, 3
      %p601 = por %p599, %p600
      %p602 = scmp.ne.s32.totalorder %s594, %s597
      %p603 = scmp.eq.s32.totalorder %s52, 0
      %p604 = por %p602, %p603
      %p605 = scmp.ne.s32.totalorder %s594, %s597
      %p606 = scmp.eq.s32.totalorder %s57, 3
      %p607 = por %p605, %p606
      %p608 = scmp.ne.s32.totalorder %s597, %s598
      %p609 = scmp.eq.s32.totalorder %s57, 0
      %p610 = por %p608, %p609
      %p611 = scmp.ne.s32.totalorder %s597, %s598
      %p612 = scmp.eq.s32.totalorder %s58, 3
      %p613 = por %p611, %p612
      %p615 = scmp.ne.s32.totalorder %s598, %s614
      %p616 = scmp.eq.s32.totalorder %s58, 0
      %p617 = por %p615, %p616
      %s618 = ssub.s32 %s60, %s67
      %p619 = scmp.eq.s32.totalorder %s618, 0
      %s621 = sadd.s32 %s620, 1
      %s622 = scalar_select %p619, %s620, %s621
      %p625 = pneg %p619
      %p626 = scmp.eq.s32.totalorder %s52, 3
      %p627 = por %p625, %p626
      %p628 = scmp.ne.s32.totalorder %s620, %s623
      %p629 = scmp.eq.s32.totalorder %s52, 0
      %p630 = por %p628, %p629
      %p631 = scmp.ne.s32.totalorder %s620, %s623
      %p632 = scmp.eq.s32.totalorder %s57, 3
      %p633 = por %p631, %p632
      %p634 = scmp.ne.s32.totalorder %s623, %s624
      %p635 = scmp.eq.s32.totalorder %s57, 0
      %p636 = por %p634, %p635
      %p637 = scmp.ne.s32.totalorder %s623, %s624
      %p638 = scmp.eq.s32.totalorder %s58, 3
      %p639 = por %p637, %p638
      %p641 = scmp.ne.s32.totalorder %s624, %s640
      %p642 = scmp.eq.s32.totalorder %s58, 0
      %p643 = por %p641, %p642
      %s644 = ssub.s32 %s59, %s71
      %p645 = scmp.eq.s32.totalorder %s644, 0
      %s647 = sadd.s32 %s646, 1
      %s648 = scalar_select %p645, %s646, %s647
      %p651 = pneg %p645
      %p652 = scmp.eq.s32.totalorder %s52, 3
      %p653 = por %p651, %p652
      %p654 = scmp.ne.s32.totalorder %s646, %s649
      %p655 = scmp.eq.s32.totalorder %s52, 0
      %p656 = por %p654, %p655
      %p657 = scmp.ne.s32.totalorder %s646, %s649
      %p658 = scmp.eq.s32.totalorder %s57, 3
      %p659 = por %p657, %p658
      %p660 = scmp.ne.s32.totalorder %s649, %s650
      %p661 = scmp.eq.s32.totalorder %s57, 0
      %p662 = por %p660, %p661
      %p663 = scmp.ne.s32.totalorder %s649, %s650
      %p664 = scmp.eq.s32.totalorder %s58, 3
      %p665 = por %p663, %p664
      %p667 = scmp.ne.s32.totalorder %s650, %s666
      %p668 = scmp.eq.s32.totalorder %s58, 0
      %p669 = por %p667, %p668
      %p670 = scmp.le.s32.totalorder 1, %s52
      %p671 = scmp.lt.s32.totalorder %s52, 5
      %p672 = pnand %p670, %p671
      %p673 = pneg %p672
      // Predicated region
      $region9: #{tpu_custom_call.1} parent=5 // pred_check
        _
      $region10: #{tpu_custom_call.1} parent=5 // pred_check_branch
        %675 = sbr.rel (%p672) target = $region12
      $region11: #{tpu_custom_call.1} parent=5 // pred_region
        %s676 = ssub.s32 %s52, 1
      $region12: #{tpu_custom_call.1} parent=5 // pred_fallthru
        _
      %p677 = scmp.lt.s32.totalorder %s52, 4
      // Predicated region
      $region13: #{tpu_custom_call.1} parent=5 // pred_check
        %p678 = pneg %p677
      $region14: #{tpu_custom_call.1} parent=5 // pred_check_branch
        %680 = sbr.rel (%p678) target = $region16
      $region15: #{tpu_custom_call.1} parent=5 // pred_region
        // Predicated region
        $region17: #{tpu_custom_call.1} parent=15 // pred_check
          %p681 = pneg %p84
        $region18: #{tpu_custom_call.1} parent=15 // pred_check_branch
          %683 = sbr.rel (%p681) target = $region20
        $region19: #{tpu_custom_call.1} parent=15 // pred_region
          %s684 = sand.u32 %s74, 1
          %s685 = scalar_lea.sflag [#allocation3], %s684
          %s686 = sand.u32 %s74, 1
          %s687 = smul.addr %s686, 8
          %s688 = scalar_lea.vmem [#allocation2], %s687
          %s690 = ssub.s32 128, 128
          %691 = vsyncadd %s685, %s690
          %s692 = smul.addr %s59, 128
          %s693 = scalar_lea.hbm %s0, %s692
          %s695 = sshll.u32 %s688, 4
          %s696 = int_to_ptr.vmem [resolvable:$true] %s695
          %698 = dma.hbm_to_vmem [thread:$0]  %s693, 128, %s696, %s685
        $region20: #{tpu_custom_call.1} parent=15 // pred_fallthru
          _
        // Predicated region
        $region21: #{tpu_custom_call.1} parent=15 // pred_check
          %p699 = pneg %p110
        $region22: #{tpu_custom_call.1} parent=15 // pred_check_branch
          %701 = sbr.rel (%p699) target = $region24
        $region23: #{tpu_custom_call.1} parent=15 // pred_region
          %s702 = sand.u32 %s52, 1
          %s703 = scalar_lea.sflag [#allocation6], %s702
          %s704 = sand.u32 %s100, 1
          %s705 = smul.addr %s704, 4
          %s706 = scalar_lea.vmem [#allocation5], %s705
          %s708 = ssub.s32 64, 64
          %709 = vsyncadd %s703, %s708
          %s710 = smul.addr %s59, 64
          %s711 = scalar_lea.hbm %s1, %s710
          %s713 = sshll.u32 %s706, 4
          %s714 = int_to_ptr.vmem [resolvable:$true] %s713
          %716 = dma.hbm_to_vmem [thread:$0]  %s711, 64, %s714, %s703
        $region24: #{tpu_custom_call.1} parent=15 // pred_fallthru
          _
        // Predicated region
        $region25: #{tpu_custom_call.1} parent=15 // pred_check
          %p717 = pneg %p136
        $region26: #{tpu_custom_call.1} parent=15 // pred_check_branch
          %719 = sbr.rel (%p717) target = $region28
        $region27: #{tpu_custom_call.1} parent=15 // pred_region
          %s720 = sand.u32 %s52, 1
          %s721 = scalar_lea.sflag [#allocation6], %s720
          %s722 = sand.u32 %s126, 1
          %s723 = smul.addr %s722, 8
          %s724 = scalar_lea.vmem [#allocation7], %s723
          %s726 = ssub.s32 128, 128
          %727 = vsyncadd %s721, %s726
          %s728 = smul.addr %s59, 128
          %s729 = scalar_lea.hbm %s2, %s728
          %s731 = sshll.u32 %s724, 4
          %s732 = int_to_ptr.vmem [resolvable:$true] %s731
          %734 = dma.hbm_to_vmem [thread:$0]  %s729, 128, %s732, %s721
        $region28: #{tpu_custom_call.1} parent=15 // pred_fallthru
          _
        // Predicated region
        $region29: #{tpu_custom_call.1} parent=15 // pred_check
          %p735 = pneg %p162
        $region30: #{tpu_custom_call.1} parent=15 // pred_check_branch
          %737 = sbr.rel (%p735) target = $region32
        $region31: #{tpu_custom_call.1} parent=15 // pred_region
          %p738 = scmp.lt.s32.totalorder %s59, 1
          %s739 = scalar_select %p738, %s59, 1
          %s740 = scalar_lea.vmem %s3, %s739
        $region32: #{tpu_custom_call.1} parent=15 // pred_fallthru
          _
        // Predicated region
        $region33: #{tpu_custom_call.1} parent=15 // pred_check
          %p741 = pneg %p188
        $region34: #{tpu_custom_call.1} parent=15 // pred_check_branch
          %743 = sbr.rel (%p741) target = $region36
        $region35: #{tpu_custom_call.1} parent=15 // pred_region
          %p744 = scmp.lt.s32.totalorder %s60, 1
          %s745 = scalar_select %p744, %s60, 1
          %s746 = smul.addr %s745, 4
          %s747 = smul.addr %s746, 4
          %s748 = scalar_lea.vmem %s4, %s747
        $region36: #{tpu_custom_call.1} parent=15 // pred_fallthru
          _
        // Predicated region
        $region37: #{tpu_custom_call.1} parent=15 // pred_check
          %p749 = pneg %p214
        $region38: #{tpu_custom_call.1} parent=15 // pred_check_branch
          %751 = sbr.rel (%p749) target = $region40
        $region39: #{tpu_custom_call.1} parent=15 // pred_region
          %p752 = scmp.lt.s32.totalorder %s60, 1
          %s753 = scalar_select %p752, %s60, 1
          %s754 = smul.addr %s753, 4
          %s755 = smul.addr %s754, 4
          %s756 = scalar_lea.vmem %s5, %s755
        $region40: #{tpu_custom_call.1} parent=15 // pred_fallthru
          _
        // Predicated region
        $region41: #{tpu_custom_call.1} parent=15 // pred_check
          %p757 = pneg %p240
        $region42: #{tpu_custom_call.1} parent=15 // pred_check_branch
          %759 = sbr.rel (%p757) target = $region44
        $region43: #{tpu_custom_call.1} parent=15 // pred_region
          %p760 = scmp.lt.s32.totalorder %s60, 1
          %s761 = scalar_select %p760, %s60, 1
          %s762 = smul.addr %s761, 4
          %s763 = smul.addr %s762, 4
          %s764 = scalar_lea.vmem %s6, %s763
        $region44: #{tpu_custom_call.1} parent=15 // pred_fallthru
          _
        // Predicated region
        $region45: #{tpu_custom_call.1} parent=15 // pred_check
          %p765 = pneg %p266
        $region46: #{tpu_custom_call.1} parent=15 // pred_check_branch
          %767 = sbr.rel (%p765) target = $region48
        $region47: #{tpu_custom_call.1} parent=15 // pred_region
          %s768 = sand.u32 %s52, 1
          %s769 = scalar_lea.sflag [#allocation9], %s768
          %s770 = sand.u32 %s256, 1
          %s771 = smul.addr %s770, 16
          %s772 = scalar_lea.vmem [#allocation8], %s771
          %s774 = ssub.s32 256, 256
          %775 = vsyncadd %s769, %s774
          %s776 = smul.addr %s60, 4
          %s777 = smul.addr %s776, 64
          %s778 = scalar_lea.hbm %s7, %s777
          %s779 = sshll.u32 %s772, 4
          %s780 = int_to_ptr.vmem [resolvable:$true] %s779
          %785 = dma.hbm_to_vmem [thread:$0]  %s778, 256, %s780, %s769, 64, 64, 4
        $region48: #{tpu_custom_call.1} parent=15 // pred_fallthru
          _
        // Predicated region
        $region49: #{tpu_custom_call.1} parent=15 // pred_check
          %p786 = pneg %p292
        $region50: #{tpu_custom_call.1} parent=15 // pred_check_branch
          %788 = sbr.rel (%p786) target = $region52
        $region51: #{tpu_custom_call.1} parent=15 // pred_region
          %s789 = sand.u32 %s52, 1
          %s790 = scalar_lea.sflag [#allocation9], %s789
          %s791 = sand.u32 %s282, 1
          %s792 = scalar_lea.vmem [#allocation10], %s791
          %s794 = ssub.s32 16, 16
          %795 = vsyncadd %s790, %s794
          %s796 = smul.addr %s60, 16
          %s797 = scalar_lea.hbm %s8, %s796
          %s799 = sshll.u32 %s792, 4
          %s800 = int_to_ptr.vmem [resolvable:$true] %s799
          %802 = dma.hbm_to_vmem [thread:$0]  %s797, 16, %s800, %s790
        $region52: #{tpu_custom_call.1} parent=15 // pred_fallthru
          _
        // Predicated region
        $region53: #{tpu_custom_call.1} parent=15 // pred_check
          %p803 = pneg %p318
        $region54: #{tpu_custom_call.1} parent=15 // pred_check_branch
          %805 = sbr.rel (%p803) target = $region56
        $region55: #{tpu_custom_call.1} parent=15 // pred_region
          %s806 = sand.u32 %s52, 1
          %s807 = scalar_lea.sflag [#allocation12], %s806
          %s808 = sand.u32 %s308, 1
          %s809 = scalar_lea.vmem [#allocation11], %s808
          %s811 = ssub.s32 16, 16
          %812 = vsyncadd %s807, %s811
          %s813 = smul.addr %s60, 16
          %s814 = scalar_lea.hbm %s9, %s813
          %s816 = sshll.u32 %s809, 4
          %s817 = int_to_ptr.vmem [resolvable:$true] %s816
          %819 = dma.hbm_to_vmem [thread:$0]  %s814, 16, %s817, %s807
        $region56: #{tpu_custom_call.1} parent=15 // pred_fallthru
          _
        // Predicated region
        $region57: #{tpu_custom_call.1} parent=15 // pred_check
          %p820 = pneg %p344
        $region58: #{tpu_custom_call.1} parent=15 // pred_check_branch
          %822 = sbr.rel (%p820) target = $region60
        $region59: #{tpu_custom_call.1} parent=15 // pred_region
          %p823 = scmp.lt.s32.totalorder %s60, 1
          %s824 = scalar_select %p823, %s60, 1
          %s825 = smul.addr %s824, 4
          %s826 = smul.addr %s825, 4
          %s827 = scalar_lea.vmem %s10, %s826
        $region60: #{tpu_custom_call.1} parent=15 // pred_fallthru
          _
        // Predicated region
        $region61: #{tpu_custom_call.1} parent=15 // pred_check
          %p828 = pneg %p370
        $region62: #{tpu_custom_call.1} parent=15 // pred_check_branch
          %830 = sbr.rel (%p828) target = $region64
        $region63: #{tpu_custom_call.1} parent=15 // pred_region
          %s831 = sand.u32 %s52, 1
          %s832 = scalar_lea.sflag [#allocation12], %s831
          %s833 = sand.u32 %s360, 1
          %s834 = smul.addr %s833, 16
          %s835 = scalar_lea.vmem [#allocation13], %s834
          %s837 = ssub.s32 256, 256
          %838 = vsyncadd %s832, %s837
          %s839 = smul.addr %s60, 4
          %s840 = smul.addr %s839, 64
          %s841 = scalar_lea.hbm %s11, %s840
          %s842 = sshll.u32 %s835, 4
          %s843 = int_to_ptr.vmem [resolvable:$true] %s842
          %848 = dma.hbm_to_vmem [thread:$0]  %s841, 256, %s843, %s832, 64, 64, 4
        $region64: #{tpu_custom_call.1} parent=15 // pred_fallthru
          _
        // Predicated region
        $region65: #{tpu_custom_call.1} parent=15 // pred_check
          %p849 = pneg %p396
        $region66: #{tpu_custom_call.1} parent=15 // pred_check_branch
          %851 = sbr.rel (%p849) target = $region68
        $region67: #{tpu_custom_call.1} parent=15 // pred_region
          %s852 = sand.u32 %s52, 1
          %s853 = scalar_lea.sflag [#allocation15], %s852
          %s854 = sand.u32 %s386, 1
          %s855 = smul.addr %s854, 16
          %s856 = scalar_lea.vmem [#allocation14], %s855
          %s858 = ssub.s32 256, 256
          %859 = vsyncadd %s853, %s858
          %s860 = smul.addr %s60, 4
          %s861 = smul.addr %s860, 64
          %s862 = scalar_lea.hbm %s12, %s861
          %s863 = sshll.u32 %s856, 4
          %s864 = int_to_ptr.vmem [resolvable:$true] %s863
          %869 = dma.hbm_to_vmem [thread:$0]  %s862, 256, %s864, %s853, 64, 64, 4
        $region68: #{tpu_custom_call.1} parent=15 // pred_fallthru
          _
        // Predicated region
        $region69: #{tpu_custom_call.1} parent=15 // pred_check
          %p870 = pneg %p422
        $region70: #{tpu_custom_call.1} parent=15 // pred_check_branch
          %872 = sbr.rel (%p870) target = $region72
        $region71: #{tpu_custom_call.1} parent=15 // pred_region
          %s873 = sand.u32 %s52, 1
          %s874 = scalar_lea.sflag [#allocation15], %s873
          %s875 = sand.u32 %s412, 1
          %s876 = smul.addr %s875, 16
          %s877 = scalar_lea.vmem [#allocation16], %s876
          %s879 = ssub.s32 256, 256
          %880 = vsyncadd %s874, %s879
          %s881 = smul.addr %s60, 4
          %s882 = smul.addr %s881, 64
          %s883 = scalar_lea.hbm %s13, %s882
          %s884 = sshll.u32 %s877, 4
          %s885 = int_to_ptr.vmem [resolvable:$true] %s884
          %890 = dma.hbm_to_vmem [thread:$0]  %s883, 256, %s885, %s874, 64, 64, 4
        $region72: #{tpu_custom_call.1} parent=15 // pred_fallthru
          _
        // Predicated region
        $region73: #{tpu_custom_call.1} parent=15 // pred_check
          %p891 = pneg %p448
        $region74: #{tpu_custom_call.1} parent=15 // pred_check_branch
          %893 = sbr.rel (%p891) target = $region76
        $region75: #{tpu_custom_call.1} parent=15 // pred_region
          %s894 = sand.u32 %s52, 1
          %s895 = scalar_lea.sflag [#allocation18], %s894
          %s896 = sand.u32 %s438, 1
          %s897 = scalar_lea.vmem [#allocation17], %s896
          %s899 = ssub.s32 16, 16
          %900 = vsyncadd %s895, %s899
          %s901 = smul.addr %s60, 16
          %s902 = scalar_lea.hbm %s14, %s901
          %s904 = sshll.u32 %s897, 4
          %s905 = int_to_ptr.vmem [resolvable:$true] %s904
          %907 = dma.hbm_to_vmem [thread:$0]  %s902, 16, %s905, %s895
        $region76: #{tpu_custom_call.1} parent=15 // pred_fallthru
          _
        // Predicated region
        $region77: #{tpu_custom_call.1} parent=15 // pred_check
          %p908 = pneg %p474
        $region78: #{tpu_custom_call.1} parent=15 // pred_check_branch
          %910 = sbr.rel (%p908) target = $region80
        $region79: #{tpu_custom_call.1} parent=15 // pred_region
          %s911 = sand.u32 %s52, 1
          %s912 = scalar_lea.sflag [#allocation18], %s911
          %s913 = sand.u32 %s464, 1
          %s914 = scalar_lea.vmem [#allocation19], %s913
          %s916 = ssub.s32 16, 16
          %917 = vsyncadd %s912, %s916
          %s918 = smul.addr %s60, 16
          %s919 = scalar_lea.hbm %s15, %s918
          %s921 = sshll.u32 %s914, 4
          %s922 = int_to_ptr.vmem [resolvable:$true] %s921
          %924 = dma.hbm_to_vmem [thread:$0]  %s919, 16, %s922, %s912
        $region80: #{tpu_custom_call.1} parent=15 // pred_fallthru
          _
        // Predicated region
        $region81: #{tpu_custom_call.1} parent=15 // pred_check
          %p925 = pneg %p500
        $region82: #{tpu_custom_call.1} parent=15 // pred_check_branch
          %927 = sbr.rel (%p925) target = $region84
        $region83: #{tpu_custom_call.1} parent=15 // pred_region
          %s928 = sand.u32 %s490, 1
          %s929 = scalar_lea.sflag [#allocation21], %s928
          %s930 = sand.u32 %s490, 1
          %s931 = smul.addr %s930, 16
          %s932 = scalar_lea.vmem [#allocation20], %s931
          %s934 = ssub.s32 256, 256
          %935 = vsyncadd %s929, %s934
          %s936 = smul.addr %s60, 4
          %s937 = smul.addr %s936, 64
          %s938 = scalar_lea.hbm %s16, %s937
          %s939 = sshll.u32 %s932, 4
          %s940 = int_to_ptr.vmem [resolvable:$true] %s939
          %945 = dma.hbm_to_vmem [thread:$0]  %s938, 256, %s940, %s929, 64, 64, 4
        $region84: #{tpu_custom_call.1} parent=15 // pred_fallthru
          _
        // Predicated region
        $region85: #{tpu_custom_call.1} parent=15 // pred_check
          %p946 = pneg %p526
        $region86: #{tpu_custom_call.1} parent=15 // pred_check_branch
          %948 = sbr.rel (%p946) target = $region88
        $region87: #{tpu_custom_call.1} parent=15 // pred_region
          %p949 = scmp.lt.s32.totalorder %s60, 1
          %s950 = scalar_select %p949, %s60, 1
          %s951 = scalar_lea.vmem %s17, %s950
        $region88: #{tpu_custom_call.1} parent=15 // pred_fallthru
          _
        // Predicated region
        $region89: #{tpu_custom_call.1} parent=15 // pred_check
          %p952 = pneg %p552
        $region90: #{tpu_custom_call.1} parent=15 // pred_check_branch
          %954 = sbr.rel (%p952) target = $region92
        $region91: #{tpu_custom_call.1} parent=15 // pred_region
          %p955 = scmp.lt.s32.totalorder %s60, 1
          %s956 = scalar_select %p955, %s60, 1
          %s957 = smul.addr %s956, 8
          %s958 = smul.addr %s957, 4
          %s959 = scalar_lea.vmem %s18, %s958
        $region92: #{tpu_custom_call.1} parent=15 // pred_fallthru
          _
        // Predicated region
        $region93: #{tpu_custom_call.1} parent=15 // pred_check
          %p960 = pneg %p578
        $region94: #{tpu_custom_call.1} parent=15 // pred_check_branch
          %962 = sbr.rel (%p960) target = $region96
        $region95: #{tpu_custom_call.1} parent=15 // pred_region
          %p963 = scmp.lt.s32.totalorder %s60, 1
          %s964 = scalar_select %p963, %s60, 1
          %s965 = scalar_lea.vmem %s19, %s964
        $region96: #{tpu_custom_call.1} parent=15 // pred_fallthru
          _
        // Predicated region
        $region97: #{tpu_custom_call.1} parent=15 // pred_check
          %p966 = pneg %p604
        $region98: #{tpu_custom_call.1} parent=15 // pred_check_branch
          %968 = sbr.rel (%p966) target = $region100
        $region99: #{tpu_custom_call.1} parent=15 // pred_region
          %p969 = scmp.lt.s32.totalorder %s60, 1
          %s970 = scalar_select %p969, %s60, 1
          %s971 = scalar_lea.vmem %s20, %s970
        $region100: #{tpu_custom_call.1} parent=15 // pred_fallthru
          _
        // Predicated region
        $region101: #{tpu_custom_call.1} parent=15 // pred_check
          %p972 = pneg %p630
        $region102: #{tpu_custom_call.1} parent=15 // pred_check_branch
          %974 = sbr.rel (%p972) target = $region104
        $region103: #{tpu_custom_call.1} parent=15 // pred_region
          %p975 = scmp.lt.s32.totalorder %s60, 1
          %s976 = scalar_select %p975, %s60, 1
          %s977 = scalar_lea.vmem %s21, %s976
        $region104: #{tpu_custom_call.1} parent=15 // pred_fallthru
          _
      $region16: #{tpu_custom_call.1} parent=5 // pred_fallthru
        _
      %p978 = scmp.le.s32.totalorder 1, %s52
      %p979 = scmp.lt.s32.totalorder %s52, 5
      %p980 = pnand %p978, %p979
      %p981 = pneg %p980
      // Predicated region
      $region105: #{tpu_custom_call.1} parent=5 // pred_check
        _
      $region106: #{tpu_custom_call.1} parent=5 // pred_check_branch
        %983 = sbr.rel (%p980) target = $region108
      $region107: #{tpu_custom_call.1} parent=5 // pred_region
        %s984 = ssub.s32 %s52, 1
        %s985 = sand.u32 %s77, 1
        %s986 = scalar_lea.sflag [#allocation3], %s985
        %s987 = sand.u32 %s77, 1
        %s988 = smul.addr %s987, 8
        %s989 = scalar_lea.vmem [#allocation2], %s988
        // Predicated region
        $region109: #{tpu_custom_call.1} parent=107 // pred_check
          %p990 = pneg %p90
        $region110: #{tpu_custom_call.1} parent=107 // pred_check_branch
          %992 = sbr.rel (%p990) target = $region112
        $region111: #{tpu_custom_call.1} parent=107 // pred_region
          %993 = dma.done %s986, 128
        $region112: #{tpu_custom_call.1} parent=107 // pred_fallthru
          _
        %s994 = sand.u32 %s57, 1
        %s995 = scalar_lea.sflag [#allocation6], %s994
        %s996 = sand.u32 %s103, 1
        %s997 = smul.addr %s996, 4
        %s998 = scalar_lea.vmem [#allocation5], %s997
        // Predicated region
        $region113: #{tpu_custom_call.1} parent=107 // pred_check
          %p999 = pneg %p116
        $region114: #{tpu_custom_call.1} parent=107 // pred_check_branch
          %1001 = sbr.rel (%p999) target = $region116
        $region115: #{tpu_custom_call.1} parent=107 // pred_region
          %1002 = dma.done %s995, 64
        $region116: #{tpu_custom_call.1} parent=107 // pred_fallthru
          _
        %s1003 = sand.u32 %s57, 1
        %s1004 = scalar_lea.sflag [#allocation6], %s1003
        %s1005 = sand.u32 %s129, 1
        %s1006 = smul.addr %s1005, 8
        %s1007 = scalar_lea.vmem [#allocation7], %s1006
        // Predicated region
        $region117: #{tpu_custom_call.1} parent=107 // pred_check
          %p1008 = pneg %p142
        $region118: #{tpu_custom_call.1} parent=107 // pred_check_branch
          %1010 = sbr.rel (%p1008) target = $region120
        $region119: #{tpu_custom_call.1} parent=107 // pred_region
          %1011 = dma.done %s1004, 128
        $region120: #{tpu_custom_call.1} parent=107 // pred_fallthru
          _
        %s1012 = sand.u32 %s57, 1
        %s1013 = scalar_lea.sflag [#allocation9], %s1012
        %s1014 = sand.u32 %s259, 1
        %s1015 = smul.addr %s1014, 16
        %s1016 = scalar_lea.vmem [#allocation8], %s1015
        // Predicated region
        $region121: #{tpu_custom_call.1} parent=107 // pred_check
          %p1017 = pneg %p272
        $region122: #{tpu_custom_call.1} parent=107 // pred_check_branch
          %1019 = sbr.rel (%p1017) target = $region124
        $region123: #{tpu_custom_call.1} parent=107 // pred_region
          %1020 = dma.done %s1013, 256
        $region124: #{tpu_custom_call.1} parent=107 // pred_fallthru
          _
        %s1021 = sand.u32 %s57, 1
        %s1022 = scalar_lea.sflag [#allocation9], %s1021
        %s1023 = sand.u32 %s285, 1
        %s1024 = scalar_lea.vmem [#allocation10], %s1023
        // Predicated region
        $region125: #{tpu_custom_call.1} parent=107 // pred_check
          %p1025 = pneg %p298
        $region126: #{tpu_custom_call.1} parent=107 // pred_check_branch
          %1027 = sbr.rel (%p1025) target = $region128
        $region127: #{tpu_custom_call.1} parent=107 // pred_region
          %1028 = dma.done %s1022, 16
        $region128: #{tpu_custom_call.1} parent=107 // pred_fallthru
          _
        %s1029 = sand.u32 %s57, 1
        %s1030 = scalar_lea.sflag [#allocation12], %s1029
        %s1031 = sand.u32 %s311, 1
        %s1032 = scalar_lea.vmem [#allocation11], %s1031
        // Predicated region
        $region129: #{tpu_custom_call.1} parent=107 // pred_check
          %p1033 = pneg %p324
        $region130: #{tpu_custom_call.1} parent=107 // pred_check_branch
          %1035 = sbr.rel (%p1033) target = $region132
        $region131: #{tpu_custom_call.1} parent=107 // pred_region
          %1036 = dma.done %s1030, 16
        $region132: #{tpu_custom_call.1} parent=107 // pred_fallthru
          _
        %s1037 = sand.u32 %s57, 1
        %s1038 = scalar_lea.sflag [#allocation12], %s1037
        %s1039 = sand.u32 %s363, 1
        %s1040 = smul.addr %s1039, 16
        %s1041 = scalar_lea.vmem [#allocation13], %s1040
        // Predicated region
        $region133: #{tpu_custom_call.1} parent=107 // pred_check
          %p1042 = pneg %p376
        $region134: #{tpu_custom_call.1} parent=107 // pred_check_branch
          %1044 = sbr.rel (%p1042) target = $region136
        $region135: #{tpu_custom_call.1} parent=107 // pred_region
          %1045 = dma.done %s1038, 256
        $region136: #{tpu_custom_call.1} parent=107 // pred_fallthru
          _
        %s1046 = sand.u32 %s57, 1
        %s1047 = scalar_lea.sflag [#allocation15], %s1046
        %s1048 = sand.u32 %s389, 1
        %s1049 = smul.addr %s1048, 16
        %s1050 = scalar_lea.vmem [#allocation14], %s1049
        // Predicated region
        $region137: #{tpu_custom_call.1} parent=107 // pred_check
          %p1051 = pneg %p402
        $region138: #{tpu_custom_call.1} parent=107 // pred_check_branch
          %1053 = sbr.rel (%p1051) target = $region140
        $region139: #{tpu_custom_call.1} parent=107 // pred_region
          %1054 = dma.done %s1047, 256
        $region140: #{tpu_custom_call.1} parent=107 // pred_fallthru
          _
        %s1055 = sand.u32 %s57, 1
        %s1056 = scalar_lea.sflag [#allocation15], %s1055
        %s1057 = sand.u32 %s415, 1
        %s1058 = smul.addr %s1057, 16
        %s1059 = scalar_lea.vmem [#allocation16], %s1058
        // Predicated region
        $region141: #{tpu_custom_call.1} parent=107 // pred_check
          %p1060 = pneg %p428
        $region142: #{tpu_custom_call.1} parent=107 // pred_check_branch
          %1062 = sbr.rel (%p1060) target = $region144
        $region143: #{tpu_custom_call.1} parent=107 // pred_region
          %1063 = dma.done %s1056, 256
        $region144: #{tpu_custom_call.1} parent=107 // pred_fallthru
          _
        %s1064 = sand.u32 %s57, 1
        %s1065 = scalar_lea.sflag [#allocation18], %s1064
        %s1066 = sand.u32 %s441, 1
        %s1067 = scalar_lea.vmem [#allocation17], %s1066
        // Predicated region
        $region145: #{tpu_custom_call.1} parent=107 // pred_check
          %p1068 = pneg %p454
        $region146: #{tpu_custom_call.1} parent=107 // pred_check_branch
          %1070 = sbr.rel (%p1068) target = $region148
        $region147: #{tpu_custom_call.1} parent=107 // pred_region
          %1071 = dma.done %s1065, 16
        $region148: #{tpu_custom_call.1} parent=107 // pred_fallthru
          _
        %s1072 = sand.u32 %s57, 1
        %s1073 = scalar_lea.sflag [#allocation18], %s1072
        %s1074 = sand.u32 %s467, 1
        %s1075 = scalar_lea.vmem [#allocation19], %s1074
        // Predicated region
        $region149: #{tpu_custom_call.1} parent=107 // pred_check
          %p1076 = pneg %p480
        $region150: #{tpu_custom_call.1} parent=107 // pred_check_branch
          %1078 = sbr.rel (%p1076) target = $region152
        $region151: #{tpu_custom_call.1} parent=107 // pred_region
          %1079 = dma.done %s1073, 16
        $region152: #{tpu_custom_call.1} parent=107 // pred_fallthru
          _
        %s1080 = sand.u32 %s493, 1
        %s1081 = scalar_lea.sflag [#allocation21], %s1080
        %s1082 = sand.u32 %s493, 1
        %s1083 = smul.addr %s1082, 16
        %s1084 = scalar_lea.vmem [#allocation20], %s1083
        // Predicated region
        $region153: #{tpu_custom_call.1} parent=107 // pred_check
          %p1085 = pneg %p506
        $region154: #{tpu_custom_call.1} parent=107 // pred_check_branch
          %1087 = sbr.rel (%p1085) target = $region156
        $region155: #{tpu_custom_call.1} parent=107 // pred_region
          %1088 = dma.done %s1081, 256
        $region156: #{tpu_custom_call.1} parent=107 // pred_fallthru
          _
        %s1089 = sand.u32 %s77, 1
        %s1090 = scalar_lea.sflag [#allocation3], %s1089
        %s1091 = sand.u32 %s77, 1
        %s1092 = smul.addr %s1091, 8
        %s1093 = scalar_lea.vmem [#allocation2], %s1092
        %p1094 = pneg %p90
        %p1095 = pneg %p87
        %s1096 = sand.u32 %s57, 1
        %s1097 = scalar_lea.sflag [#allocation6], %s1096
        %s1098 = sand.u32 %s103, 1
        %s1099 = smul.addr %s1098, 4
        %s1100 = scalar_lea.vmem [#allocation5], %s1099
        %p1101 = pneg %p116
        %p1102 = pneg %p113
        %s1103 = sand.u32 %s57, 1
        %s1104 = scalar_lea.sflag [#allocation6], %s1103
        %s1105 = sand.u32 %s129, 1
        %s1106 = smul.addr %s1105, 8
        %s1107 = scalar_lea.vmem [#allocation7], %s1106
        %p1108 = pneg %p142
        %p1109 = pneg %p139
        %p1110 = scmp.lt.s32.totalorder %s61, 1
        %s1111 = scalar_select %p1110, %s61, 1
        %s1112 = scalar_lea.vmem %s3, %s1111
        %p1113 = pneg %p168
        %p1114 = pneg %p165
        %p1115 = scmp.lt.s32.totalorder %s62, 1
        %s1116 = scalar_select %p1115, %s62, 1
        %s1117 = smul.addr %s1116, 4
        %s1118 = smul.addr %s1117, 4
        %s1119 = scalar_lea.vmem %s4, %s1118
        %p1120 = pneg %p194
        %p1121 = pneg %p191
        %p1122 = scmp.lt.s32.totalorder %s62, 1
        %s1123 = scalar_select %p1122, %s62, 1
        %s1124 = smul.addr %s1123, 4
        %s1125 = smul.addr %s1124, 4
        %s1126 = scalar_lea.vmem %s5, %s1125
        %p1127 = pneg %p220
        %p1128 = pneg %p217
        %p1129 = scmp.lt.s32.totalorder %s62, 1
        %s1130 = scalar_select %p1129, %s62, 1
        %s1131 = smul.addr %s1130, 4
        %s1132 = smul.addr %s1131, 4
        %s1133 = scalar_lea.vmem %s6, %s1132
        %p1134 = pneg %p246
        %p1135 = pneg %p243
        %s1136 = sand.u32 %s57, 1
        %s1137 = scalar_lea.sflag [#allocation9], %s1136
        %s1138 = sand.u32 %s259, 1
        %s1139 = smul.addr %s1138, 16
        %s1140 = scalar_lea.vmem [#allocation8], %s1139
        %p1141 = pneg %p272
        %p1142 = pneg %p269
        %s1143 = sand.u32 %s57, 1
        %s1144 = scalar_lea.sflag [#allocation9], %s1143
        %s1145 = sand.u32 %s285, 1
        %s1146 = scalar_lea.vmem [#allocation10], %s1145
        %p1147 = pneg %p298
        %p1148 = pneg %p295
        %s1149 = sand.u32 %s57, 1
        %s1150 = scalar_lea.sflag [#allocation12], %s1149
        %s1151 = sand.u32 %s311, 1
        %s1152 = scalar_lea.vmem [#allocation11], %s1151
        %p1153 = pneg %p324
        %p1154 = pneg %p321
        %p1155 = scmp.lt.s32.totalorder %s62, 1
        %s1156 = scalar_select %p1155, %s62, 1
        %s1157 = smul.addr %s1156, 4
        %s1158 = smul.addr %s1157, 4
        %s1159 = scalar_lea.vmem %s10, %s1158
        %p1160 = pneg %p350
        %p1161 = pneg %p347
        %s1162 = sand.u32 %s57, 1
        %s1163 = scalar_lea.sflag [#allocation12], %s1162
        %s1164 = sand.u32 %s363, 1
        %s1165 = smul.addr %s1164, 16
        %s1166 = scalar_lea.vmem [#allocation13], %s1165
        %p1167 = pneg %p376
        %p1168 = pneg %p373
        %s1169 = sand.u32 %s57, 1
        %s1170 = scalar_lea.sflag [#allocation15], %s1169
        %s1171 = sand.u32 %s389, 1
        %s1172 = smul.addr %s1171, 16
        %s1173 = scalar_lea.vmem [#allocation14], %s1172
        %p1174 = pneg %p402
        %p1175 = pneg %p399
        %s1176 = sand.u32 %s57, 1
        %s1177 = scalar_lea.sflag [#allocation15], %s1176
        %s1178 = sand.u32 %s415, 1
        %s1179 = smul.addr %s1178, 16
        %s1180 = scalar_lea.vmem [#allocation16], %s1179
        %p1181 = pneg %p428
        %p1182 = pneg %p425
        %s1183 = sand.u32 %s57, 1
        %s1184 = scalar_lea.sflag [#allocation18], %s1183
        %s1185 = sand.u32 %s441, 1
        %s1186 = scalar_lea.vmem [#allocation17], %s1185
        %p1187 = pneg %p454
        %p1188 = pneg %p451
        %s1189 = sand.u32 %s57, 1
        %s1190 = scalar_lea.sflag [#allocation18], %s1189
        %s1191 = sand.u32 %s467, 1
        %s1192 = scalar_lea.vmem [#allocation19], %s1191
        %p1193 = pneg %p480
        %p1194 = pneg %p477
        %s1195 = sand.u32 %s493, 1
        %s1196 = scalar_lea.sflag [#allocation21], %s1195
        %s1197 = sand.u32 %s493, 1
        %s1198 = smul.addr %s1197, 16
        %s1199 = scalar_lea.vmem [#allocation20], %s1198
        %p1200 = pneg %p506
        %p1201 = pneg %p503
        %p1202 = scmp.lt.s32.totalorder %s62, 1
        %s1203 = scalar_select %p1202, %s62, 1
        %s1204 = scalar_lea.vmem %s17, %s1203
        %p1205 = pneg %p532
        %p1206 = pneg %p529
        %p1207 = scmp.lt.s32.totalorder %s62, 1
        %s1208 = scalar_select %p1207, %s62, 1
        %s1209 = smul.addr %s1208, 8
        %s1210 = smul.addr %s1209, 4
        %s1211 = scalar_lea.vmem %s18, %s1210
        %p1212 = pneg %p558
        %p1213 = pneg %p555
        %p1214 = scmp.lt.s32.totalorder %s62, 1
        %s1215 = scalar_select %p1214, %s62, 1
        %s1216 = scalar_lea.vmem %s19, %s1215
        %p1217 = pneg %p584
        %p1218 = pneg %p581
        %p1219 = scmp.lt.s32.totalorder %s62, 1
        %s1220 = scalar_select %p1219, %s62, 1
        %s1221 = scalar_lea.vmem %s20, %s1220
        %p1222 = pneg %p610
        %p1223 = pneg %p607
        %p1224 = scmp.lt.s32.totalorder %s62, 1
        %s1225 = scalar_select %p1224, %s62, 1
        %s1226 = scalar_lea.vmem %s21, %s1225
        %p1227 = pneg %p636
        %p1228 = pneg %p633
        %p1229 = pneg %p662
        %p1230 = pneg %p659
        %s1231 = sand.u32 %s649, 1
        %s1232 = scalar_lea.sflag [#allocation4], %s1231
        %s1233 = sand.u32 %s649, 1
        %s1234 = smul.addr %s1233, 8
        %s1235 = scalar_lea.vmem [#allocation22], %s1234
        %p1236 = scmp.lt.s32.totalorder %s61, 1
        %s1237 = scalar_select %p1236, %s61, 1
        %s1238 = scalar_lea.vmem %s3, %s1237
        %p1239 = scmp.lt.s32.totalorder %s62, 1
        %s1240 = scalar_select %p1239, %s62, 1
        %s1241 = smul.addr %s1240, 4
        %s1242 = smul.addr %s1241, 4
        %s1243 = scalar_lea.vmem %s4, %s1242
        %p1244 = scmp.lt.s32.totalorder %s62, 1
        %s1245 = scalar_select %p1244, %s62, 1
        %s1246 = smul.addr %s1245, 4
        %s1247 = smul.addr %s1246, 4
        %s1248 = scalar_lea.vmem %s5, %s1247
        %p1249 = scmp.lt.s32.totalorder %s62, 1
        %s1250 = scalar_select %p1249, %s62, 1
        %s1251 = smul.addr %s1250, 4
        %s1252 = smul.addr %s1251, 4
        %s1253 = scalar_lea.vmem %s6, %s1252
        %p1254 = scmp.lt.s32.totalorder %s62, 1
        %s1255 = scalar_select %p1254, %s62, 1
        %s1256 = smul.addr %s1255, 4
        %s1257 = smul.addr %s1256, 4
        %s1258 = scalar_lea.vmem %s10, %s1257
        %p1259 = scmp.lt.s32.totalorder %s62, 1
        %s1260 = scalar_select %p1259, %s62, 1
        %s1261 = scalar_lea.vmem %s17, %s1260
        %p1262 = scmp.lt.s32.totalorder %s62, 1
        %s1263 = scalar_select %p1262, %s62, 1
        %s1264 = smul.addr %s1263, 8
        %s1265 = smul.addr %s1264, 4
        %s1266 = scalar_lea.vmem %s18, %s1265
        %p1267 = scmp.lt.s32.totalorder %s62, 1
        %s1268 = scalar_select %p1267, %s62, 1
        %s1269 = scalar_lea.vmem %s19, %s1268
        %p1270 = scmp.lt.s32.totalorder %s62, 1
        %s1271 = scalar_select %p1270, %s62, 1
        %s1272 = scalar_lea.vmem %s20, %s1271
        %p1273 = scmp.lt.s32.totalorder %s62, 1
        %s1274 = scalar_select %p1273, %s62, 1
        %s1275 = scalar_lea.vmem %s21, %s1274
        %p1277 = scmp.eq.s32.totalorder %s62, 0
        // Predicated region
        $region157: #{tpu_custom_call.1} parent=107 // pred_check
          %p1278 = pneg %p1277
        $region158: #{tpu_custom_call.1} parent=107 // pred_check_branch
          %1280 = sbr.rel (%p1278) target = $region160
        $region159: #{tpu_custom_call.1} parent=107 // pred_region
          %v1281 = vld [vmem:[%s989] sm:$0xff]
          %vm1282 = vcmask 261120
          %1283 = vst.msk [vmem:[%s1235] sm:$0xff] %vm1282, %v1281
        $region160: #{tpu_custom_call.1} parent=107 // pred_fallthru
          _
        %v1284 = vld [vmem:[%s1235] sm:$0xff]
        %v1285 = vld [vmem:[%s1007] sm:$0xff]
        %v1286 = vld [vmem:[%s998] sm:$0xf]
        %v1287 = vld [vmem:[%s1238] sm:$0x1]
        %v1288 = vld [vmem:[%s1243] sm:$0xf]
        %v1289 = vld [vmem:[%s1243 + $0x4] sm:$0xf]
        %v1290 = vld [vmem:[%s1243 + $0x8] sm:$0xf]
        %v1291 = vld [vmem:[%s1243 + $0xc] sm:$0xf]
        %v1292 = vld [vmem:[%s1248] sm:$0xf]
        %v1293 = vld [vmem:[%s1248 + $0x4] sm:$0xf]
        %v1294 = vld [vmem:[%s1248 + $0x8] sm:$0xf]
        %v1295 = vld [vmem:[%s1248 + $0xc] sm:$0xf]
        %v1296 = vld [vmem:[%s1253] sm:$0xf]
        %v1297 = vld [vmem:[%s1253 + $0x4] sm:$0xf]
        %v1298 = vld [vmem:[%s1253 + $0x8] sm:$0xf]
        %v1299 = vld [vmem:[%s1253 + $0xc] sm:$0xf]
        %v1300 = vld [vmem:[%s1016] sm:$0xf]
        %v1301 = vld [vmem:[%s1016 + $0x4] sm:$0xf]
        %v1302 = vld [vmem:[%s1016 + $0x8] sm:$0xf]
        %v1303 = vld [vmem:[%s1016 + $0xc] sm:$0xf]
        %v1304 = vld [vmem:[%s1024] sm:$0x1]
        %v1305 = vld [vmem:[%s1032] sm:$0x1]
        %v1306 = vpack.c.bf16 %v1284, %v1284
        %v1311 = vunpack.c.l.b16 %v1288
        %v1312 = vunpack.c.l.b16 %v1289
        %v1313 = vunpack.c.l.b16 %v1290
        %v1314 = vunpack.c.l.b16 %v1291
        %v1315 = vpack.c.b16 %v1312, %v1311
        %v1316 = vpack.c.b16 %v1314, %v1313
        %vm1319 = vcmask 261120
        %v1321 = vsel %vm1319, %v1306, 0
        %1323 = vmatprep.subr.bf16.mxu0 0
        %1324 = vmatpush1.bf16.msra.mxu0 %v1315
        %1325 = vmatprep.subr.bf16.mxu0 0
        %1326 = vmatpush1.bf16.msra.mxu0 %v1316
        %1327 = vmatprep.subr.bf16.mxu0 0
        %1328 = vmatpush1.bf16.msra.mxu0 0
        %1329 = vmatprep.subr.bf16.mxu0 0
        %1330 = vmatpush1.bf16.msra.mxu0 0
        %1331 = vmatprep.subr.bf16.mxu0 0
        %1332 = vmatpush1.bf16.msra.mxu0 0
        %1333 = vmatprep.subr.bf16.mxu0 0
        %1334 = vmatpush1.bf16.msra.mxu0 0
        %1335 = vmatprep.subr.bf16.mxu0 0
        %1336 = vmatpush1.bf16.msra.mxu0 0
        %1337 = vmatprep.subr.bf16.mxu0 0
        %1338 = vmatpush1.bf16.msra.mxu0 0
        %1339 = vmatprep.subr.bf16.mxu0 0
        %1340 = vmatpush1.bf16.msra.mxu0 0
        %1341 = vmatprep.subr.bf16.mxu0 0
        %1342 = vmatpush1.bf16.msra.mxu0 0
        %1343 = vmatprep.subr.bf16.mxu0 0
        %1344 = vmatpush1.bf16.msra.mxu0 0
        %1345 = vmatprep.subr.bf16.mxu0 0
        %1346 = vmatpush1.bf16.msra.mxu0 0
        %1347 = vmatprep.subr.bf16.mxu0 0
        %1348 = vmatpush1.bf16.msra.mxu0 0
        %1349 = vmatprep.subr.bf16.mxu0 0
        %1350 = vmatpush1.bf16.msra.mxu0 0
        %1351 = vmatprep.subr.bf16.mxu0 0
        %1352 = vmatpush1.bf16.msra.mxu0 0
        %1353 = vmatprep.subr.bf16.mxu0 0
        %1354 = vmatpush1.bf16.msra.mxu0 0
        %1355 = vmatprep.mubr.bf16.mxu0 0
        %1356 = vmatmul.mubr.bf16.gmra.mrb[0].mxu0 %v1321
        %v1357 = vpop.f32.mrb[0].mxu0
        %v1358 = vadd.f32 0.0, %v1357
        %v1359 = vpop.f32.mrb[0].mxu0
        %v1360 = vpop.f32.mrb[0].mxu0
        %v1361 = vpop.f32.mrb[0].mxu0
        %1362 = vdwg.mxu0
        %v1367 = vunpack.c.l.b16 %v1292
        %v1368 = vunpack.c.l.b16 %v1293
        %v1369 = vunpack.c.l.b16 %v1294
        %v1370 = vunpack.c.l.b16 %v1295
        %v1371 = vpack.c.b16 %v1368, %v1367
        %v1372 = vpack.c.b16 %v1370, %v1369
        %1375 = vmatprep.subr.bf16.mxu0 0
        %1376 = vmatpush1.bf16.msra.mxu0 %v1371
        %1377 = vmatprep.subr.bf16.mxu0 0
        %1378 = vmatpush1.bf16.msra.mxu0 %v1372
        %1379 = vmatprep.subr.bf16.mxu0 0
        %1380 = vmatpush1.bf16.msra.mxu0 0
        %1381 = vmatprep.subr.bf16.mxu0 0
        %1382 = vmatpush1.bf16.msra.mxu0 0
        %1383 = vmatprep.subr.bf16.mxu0 0
        %1384 = vmatpush1.bf16.msra.mxu0 0
        %1385 = vmatprep.subr.bf16.mxu0 0
        %1386 = vmatpush1.bf16.msra.mxu0 0
        %1387 = vmatprep.subr.bf16.mxu0 0
        %1388 = vmatpush1.bf16.msra.mxu0 0
        %1389 = vmatprep.subr.bf16.mxu0 0
        %1390 = vmatpush1.bf16.msra.mxu0 0
        %1391 = vmatprep.subr.bf16.mxu0 0
        %1392 = vmatpush1.bf16.msra.mxu0 0
        %1393 = vmatprep.subr.bf16.mxu0 0
        %1394 = vmatpush1.bf16.msra.mxu0 0
        %1395 = vmatprep.subr.bf16.mxu0 0
        %1396 = vmatpush1.bf16.msra.mxu0 0
        %1397 = vmatprep.subr.bf16.mxu0 0
        %1398 = vmatpush1.bf16.msra.mxu0 0
        %1399 = vmatprep.subr.bf16.mxu0 0
        %1400 = vmatpush1.bf16.msra.mxu0 0
        %1401 = vmatprep.subr.bf16.mxu0 0
        %1402 = vmatpush1.bf16.msra.mxu0 0
        %1403 = vmatprep.subr.bf16.mxu0 0
        %1404 = vmatpush1.bf16.msra.mxu0 0
        %1405 = vmatprep.subr.bf16.mxu0 0
        %1406 = vmatpush1.bf16.msra.mxu0 0
        %1407 = vmatprep.mubr.bf16.mxu0 0
        %1408 = vmatmul.mubr.bf16.gmra.mrb[0].mxu0 %v1321
        %v1409 = vpop.f32.mrb[0].mxu0
        %v1410 = vadd.f32 0.0, %v1409
        %v1411 = vpop.f32.mrb[0].mxu0
        %v1412 = vpop.f32.mrb[0].mxu0
        %v1413 = vpop.f32.mrb[0].mxu0
        %1414 = vdwg.mxu0
        %v1419 = vunpack.c.l.b16 %v1296
        %v1420 = vunpack.c.l.b16 %v1297
        %v1421 = vunpack.c.l.b16 %v1298
        %v1422 = vunpack.c.l.b16 %v1299
        %v1423 = vpack.c.b16 %v1420, %v1419
        %v1424 = vpack.c.b16 %v1422, %v1421
        %1427 = vmatprep.subr.bf16.mxu0 0
        %1428 = vmatpush1.bf16.msra.mxu0 %v1423
        %1429 = vmatprep.subr.bf16.mxu0 0
        %1430 = vmatpush1.bf16.msra.mxu0 %v1424
        %1431 = vmatprep.subr.bf16.mxu0 0
        %1432 = vmatpush1.bf16.msra.mxu0 0
        %1433 = vmatprep.subr.bf16.mxu0 0
        %1434 = vmatpush1.bf16.msra.mxu0 0
        %1435 = vmatprep.subr.bf16.mxu0 0
        %1436 = vmatpush1.bf16.msra.mxu0 0
        %1437 = vmatprep.subr.bf16.mxu0 0
        %1438 = vmatpush1.bf16.msra.mxu0 0
        %1439 = vmatprep.subr.bf16.mxu0 0
        %1440 = vmatpush1.bf16.msra.mxu0 0
        %1441 = vmatprep.subr.bf16.mxu0 0
        %1442 = vmatpush1.bf16.msra.mxu0 0
        %1443 = vmatprep.subr.bf16.mxu0 0
        %1444 = vmatpush1.bf16.msra.mxu0 0
        %1445 = vmatprep.subr.bf16.mxu0 0
        %1446 = vmatpush1.bf16.msra.mxu0 0
        %1447 = vmatprep.subr.bf16.mxu0 0
        %1448 = vmatpush1.bf16.msra.mxu0 0
        %1449 = vmatprep.subr.bf16.mxu0 0
        %1450 = vmatpush1.bf16.msra.mxu0 0
        %1451 = vmatprep.subr.bf16.mxu0 0
        %1452 = vmatpush1.bf16.msra.mxu0 0
        %1453 = vmatprep.subr.bf16.mxu0 0
        %1454 = vmatpush1.bf16.msra.mxu0 0
        %1455 = vmatprep.subr.bf16.mxu0 0
        %1456 = vmatpush1.bf16.msra.mxu0 0
        %1457 = vmatprep.subr.bf16.mxu0 0
        %1458 = vmatpush1.bf16.msra.mxu0 0
        %1459 = vmatprep.mubr.bf16.mxu0 0
        %1460 = vmatmul.mubr.bf16.gmra.mrb[0].mxu0 %v1321
        %v1461 = vpop.f32.mrb[0].mxu0
        %v1462 = vadd.f32 0.0, %v1461
        %v1463 = vpop.f32.mrb[0].mxu0
        %v1464 = vpop.f32.mrb[0].mxu0
        %v1465 = vpop.f32.mrb[0].mxu0
        %1466 = vdwg.mxu0
        %v1467 = vpack.c.bf16 %v1358, %v1358
        %v1468 = vpack.c.bf16 %v1410, %v1410
        %v1469 = vpack.c.bf16 %v1462, %v1462
        %vm1470 = vcmask 64512
        %v1472 = vsel %vm1470, %v1467, 0
        %v1475 = vsel %vm1470, %v1468, 0
        %1477 = vmatprep.subr.bf16.mxu0 0
        %1478 = vmatpush1.bf16.xpose.msra.mxu0 %v1475
        %1479 = vmatprep.subr.bf16.mxu0 0
        %1480 = vmatpush1.bf16.xpose.msra.mxu0 0
        %1481 = vmatprep.subr.bf16.mxu0 0
        %1482 = vmatpush1.bf16.xpose.msra.mxu0 0
        %1483 = vmatprep.subr.bf16.mxu0 0
        %1484 = vmatpush1.bf16.xpose.msra.mxu0 0
        %1485 = vmatprep.subr.bf16.mxu0 0
        %1486 = vmatpush1.bf16.xpose.msra.mxu0 0
        %1487 = vmatprep.subr.bf16.mxu0 0
        %1488 = vmatpush1.bf16.xpose.msra.mxu0 0
        %1489 = vmatprep.subr.bf16.mxu0 0
        %1490 = vmatpush1.bf16.xpose.msra.mxu0 0
        %1491 = vmatprep.subr.bf16.mxu0 0
        %1492 = vmatpush1.bf16.xpose.msra.mxu0 0
        %1493 = vmatprep.subr.bf16.mxu0 0
        %1494 = vmatpush1.bf16.xpose.msra.mxu0 0
        %1495 = vmatprep.subr.bf16.mxu0 0
        %1496 = vmatpush1.bf16.xpose.msra.mxu0 0
        %1497 = vmatprep.subr.bf16.mxu0 0
        %1498 = vmatpush1.bf16.xpose.msra.mxu0 0
        %1499 = vmatprep.subr.bf16.mxu0 0
        %1500 = vmatpush1.bf16.xpose.msra.mxu0 0
        %1501 = vmatprep.subr.bf16.mxu0 0
        %1502 = vmatpush1.bf16.xpose.msra.mxu0 0
        %1503 = vmatprep.subr.bf16.mxu0 0
        %1504 = vmatpush1.bf16.xpose.msra.mxu0 0
        %1505 = vmatprep.subr.bf16.mxu0 0
        %1506 = vmatpush1.bf16.xpose.msra.mxu0 0
        %1507 = vmatprep.subr.bf16.mxu0 0
        %1508 = vmatpush1.bf16.xpose.msra.mxu0 0
        %1509 = vmatprep.mubr.bf16.mxu0 0
        %1510 = vmatmul.mubr.bf16.gmra.mrb[0].mxu0 %v1472
        %v1511 = vpop.f32.mrb[0].mxu0
        %v1512 = vadd.f32 0.0, %v1511
        %v1513 = vpop.f32.mrb[0].mxu0
        %v1514 = vpop.f32.mrb[0].mxu0
        %v1515 = vpop.f32.mrb[0].mxu0
        %1516 = vdwg.mxu0
        %v1517 = vmul.f32 %v1512, 0.35355338
        %v1518 = vunpack.c.l.bf16 %v1286
        %v1519 = vadd.f32 %v1517, %v1518
        %v1520 = vsel %vm1470, %v1519, -inf
        %1521 = vmax.xlane.f32.xlu0 %v1520
        %v1522 = vpop.xlane.xlu0 %1521
        %v1523 = vsub.f32 %v1519, %v1522
        %v1524 = vmul.f32 %v1523, 1.442695
        %v1525 = vpow.pop %v1524
        %v1526 = vsel %vm1470, %v1525, 0.0
        %1527 = vadd.xlane.f32.xlu0 %v1526
        %v1528 = vpop.xlane.xlu0 %1527
        %v1529 = vrcp.pop %v1528
        %v1530 = vmul.f32 %v1525, %v1529
        %v1531 = vpack.c.bf16 %v1530, %v1530
        %v1533 = vsel %vm1470, %v1531, 0
        %vm1535 = vcmask 1043456
        %v1537 = vsel %vm1535, %v1469, 0
        %1539 = vmatprep.subr.bf16.mxu0 0
        %1540 = vmatpush1.bf16.msra.mxu0 %v1537
        %1541 = vmatprep.subr.bf16.mxu0 0
        %1542 = vmatpush1.bf16.msra.mxu0 0
        %1543 = vmatprep.subr.bf16.mxu0 0
        %1544 = vmatpush1.bf16.msra.mxu0 0
        %1545 = vmatprep.subr.bf16.mxu0 0
        %1546 = vmatpush1.bf16.msra.mxu0 0
        %1547 = vmatprep.subr.bf16.mxu0 0
        %1548 = vmatpush1.bf16.msra.mxu0 0
        %1549 = vmatprep.subr.bf16.mxu0 0
        %1550 = vmatpush1.bf16.msra.mxu0 0
        %1551 = vmatprep.subr.bf16.mxu0 0
        %1552 = vmatpush1.bf16.msra.mxu0 0
        %1553 = vmatprep.subr.bf16.mxu0 0
        %1554 = vmatpush1.bf16.msra.mxu0 0
        %1555 = vmatprep.subr.bf16.mxu0 0
        %1556 = vmatpush1.bf16.msra.mxu0 0
        %1557 = vmatprep.subr.bf16.mxu0 0
        %1558 = vmatpush1.bf16.msra.mxu0 0
        %1559 = vmatprep.subr.bf16.mxu0 0
        %1560 = vmatpush1.bf16.msra.mxu0 0
        %1561 = vmatprep.subr.bf16.mxu0 0
        %1562 = vmatpush1.bf16.msra.mxu0 0
        %1563 = vmatprep.subr.bf16.mxu0 0
        %1564 = vmatpush1.bf16.msra.mxu0 0
        %1565 = vmatprep.subr.bf16.mxu0 0
        %1566 = vmatpush1.bf16.msra.mxu0 0
        %1567 = vmatprep.subr.bf16.mxu0 0
        %1568 = vmatpush1.bf16.msra.mxu0 0
        %1569 = vmatprep.subr.bf16.mxu0 0
        %1570 = vmatpush1.bf16.msra.mxu0 0
        %1571 = vmatprep.mubr.bf16.mxu0 0
        %1572 = vmatmul.mubr.bf16.gmra.mrb[0].mxu0 %v1533
        %v1573 = vpop.f32.mrb[0].mxu0
        %v1574 = vadd.f32 0.0, %v1573
        %v1575 = vpop.f32.mrb[0].mxu0
        %v1576 = vpop.f32.mrb[0].mxu0
        %v1577 = vpop.f32.mrb[0].mxu0
        %1578 = vdwg.mxu0
        %1580 = vrot.lane.b32.xlu0 %v1467, 120
        %v1581 = vpop.permute.xlu0 %1580
        %1583 = vrot.lane.b32.xlu0 %v1468, 120
        %v1584 = vpop.permute.xlu0 %1583
        %v1586 = vsel %vm1470, %v1581, 0
        %v1589 = vsel %vm1470, %v1584, 0
        %1591 = vmatprep.subr.bf16.mxu0 0
        %1592 = vmatpush1.bf16.xpose.msra.mxu0 %v1589
        %1593 = vmatprep.subr.bf16.mxu0 0
        %1594 = vmatpush1.bf16.xpose.msra.mxu0 0
        %1595 = vmatprep.subr.bf16.mxu0 0
        %1596 = vmatpush1.bf16.xpose.msra.mxu0 0
        %1597 = vmatprep.subr.bf16.mxu0 0
        %1598 = vmatpush1.bf16.xpose.msra.mxu0 0
        %1599 = vmatprep.subr.bf16.mxu0 0
        %1600 = vmatpush1.bf16.xpose.msra.mxu0 0
        %1601 = vmatprep.subr.bf16.mxu0 0
        %1602 = vmatpush1.bf16.xpose.msra.mxu0 0
        %1603 = vmatprep.subr.bf16.mxu0 0
        %1604 = vmatpush1.bf16.xpose.msra.mxu0 0
        %1605 = vmatprep.subr.bf16.mxu0 0
        %1606 = vmatpush1.bf16.xpose.msra.mxu0 0
        %1607 = vmatprep.subr.bf16.mxu0 0
        %1608 = vmatpush1.bf16.xpose.msra.mxu0 0
        %1609 = vmatprep.subr.bf16.mxu0 0
        %1610 = vmatpush1.bf16.xpose.msra.mxu0 0
        %1611 = vmatprep.subr.bf16.mxu0 0
        %1612 = vmatpush1.bf16.xpose.msra.mxu0 0
        %1613 = vmatprep.subr.bf16.mxu0 0
        %1614 = vmatpush1.bf16.xpose.msra.mxu0 0
        %1615 = vmatprep.subr.bf16.mxu0 0
        %1616 = vmatpush1.bf16.xpose.msra.mxu0 0
        %1617 = vmatprep.subr.bf16.mxu0 0
        %1618 = vmatpush1.bf16.xpose.msra.mxu0 0
        %1619 = vmatprep.subr.bf16.mxu0 0
        %1620 = vmatpush1.bf16.xpose.msra.mxu0 0
        %1621 = vmatprep.subr.bf16.mxu0 0
        %1622 = vmatpush1.bf16.xpose.msra.mxu0 0
        %1623 = vmatprep.mubr.bf16.mxu0 0
        %1624 = vmatmul.mubr.bf16.gmra.mrb[0].mxu0 %v1586
        %v1625 = vpop.f32.mrb[0].mxu0
        %v1626 = vadd.f32 0.0, %v1625
        %v1627 = vpop.f32.mrb[0].mxu0
        %v1628 = vpop.f32.mrb[0].mxu0
        %v1629 = vpop.f32.mrb[0].mxu0
        %1630 = vdwg.mxu0
        %v1631 = vmul.f32 %v1626, 0.35355338
        %v1632 = vadd.f32 %v1631, %v1518
        %v1633 = vsel %vm1470, %v1632, -inf
        %1634 = vmax.xlane.f32.xlu0 %v1633
        %v1635 = vpop.xlane.xlu0 %1634
        %v1636 = vsub.f32 %v1632, %v1635
        %v1637 = vmul.f32 %v1636, 1.442695
        %v1638 = vpow.pop %v1637
        %v1639 = vsel %vm1470, %v1638, 0.0
        %1640 = vadd.xlane.f32.xlu0 %v1639
        %v1641 = vpop.xlane.xlu0 %1640
        %v1642 = vrcp.pop %v1641
        %v1643 = vmul.f32 %v1638, %v1642
        %v1644 = vpack.c.bf16 %v1643, %v1643
        %1646 = vrot.lane.b32.xlu0 %v1469, 120
        %v1647 = vpop.permute.xlu0 %1646
        %v1649 = vsel %vm1470, %v1644, 0
        %v1652 = vsel %vm1535, %v1647, 0
        %1654 = vmatprep.subr.bf16.mxu0 0
        %1655 = vmatpush1.bf16.msra.mxu0 %v1652
        %1656 = vmatprep.subr.bf16.mxu0 0
        %1657 = vmatpush1.bf16.msra.mxu0 0
        %1658 = vmatprep.subr.bf16.mxu0 0
        %1659 = vmatpush1.bf16.msra.mxu0 0
        %1660 = vmatprep.subr.bf16.mxu0 0
        %1661 = vmatpush1.bf16.msra.mxu0 0
        %1662 = vmatprep.subr.bf16.mxu0 0
        %1663 = vmatpush1.bf16.msra.mxu0 0
        %1664 = vmatprep.subr.bf16.mxu0 0
        %1665 = vmatpush1.bf16.msra.mxu0 0
        %1666 = vmatprep.subr.bf16.mxu0 0
        %1667 = vmatpush1.bf16.msra.mxu0 0
        %1668 = vmatprep.subr.bf16.mxu0 0
        %1669 = vmatpush1.bf16.msra.mxu0 0
        %1670 = vmatprep.subr.bf16.mxu0 0
        %1671 = vmatpush1.bf16.msra.mxu0 0
        %1672 = vmatprep.subr.bf16.mxu0 0
        %1673 = vmatpush1.bf16.msra.mxu0 0
        %1674 = vmatprep.subr.bf16.mxu0 0
        %1675 = vmatpush1.bf16.msra.mxu0 0
        %1676 = vmatprep.subr.bf16.mxu0 0
        %1677 = vmatpush1.bf16.msra.mxu0 0
        %1678 = vmatprep.subr.bf16.mxu0 0
        %1679 = vmatpush1.bf16.msra.mxu0 0
        %1680 = vmatprep.subr.bf16.mxu0 0
        %1681 = vmatpush1.bf16.msra.mxu0 0
        %1682 = vmatprep.subr.bf16.mxu0 0
        %1683 = vmatpush1.bf16.msra.mxu0 0
        %1684 = vmatprep.subr.bf16.mxu0 0
        %1685 = vmatpush1.bf16.msra.mxu0 0
        %1686 = vmatprep.mubr.bf16.mxu0 0
        %1687 = vmatmul.mubr.bf16.gmra.mrb[0].mxu0 %v1649
        %v1688 = vpop.f32.mrb[0].mxu0
        %v1689 = vadd.f32 0.0, %v1688
        %v1690 = vpop.f32.mrb[0].mxu0
        %v1691 = vpop.f32.mrb[0].mxu0
        %v1692 = vpop.f32.mrb[0].mxu0
        %1693 = vdwg.mxu0
        %1694 = vrot.lane.b32.xlu0 %v1467, 112
        %v1695 = vpop.permute.xlu0 %1694
        %1696 = vrot.lane.b32.xlu0 %v1468, 112
        %v1697 = vpop.permute.xlu0 %1696
        %v1699 = vsel %vm1470, %v1695, 0
        %v1702 = vsel %vm1470, %v1697, 0
        %1704 = vmatprep.subr.bf16.mxu0 0
        %1705 = vmatpush1.bf16.xpose.msra.mxu0 %v1702
        %1706 = vmatprep.subr.bf16.mxu0 0
        %1707 = vmatpush1.bf16.xpose.msra.mxu0 0
        %1708 = vmatprep.subr.bf16.mxu0 0
        %1709 = vmatpush1.bf16.xpose.msra.mxu0 0
        %1710 = vmatprep.subr.bf16.mxu0 0
        %1711 = vmatpush1.bf16.xpose.msra.mxu0 0
        %1712 = vmatprep.subr.bf16.mxu0 0
        %1713 = vmatpush1.bf16.xpose.msra.mxu0 0
        %1714 = vmatprep.subr.bf16.mxu0 0
        %1715 = vmatpush1.bf16.xpose.msra.mxu0 0
        %1716 = vmatprep.subr.bf16.mxu0 0
        %1717 = vmatpush1.bf16.xpose.msra.mxu0 0
        %1718 = vmatprep.subr.bf16.mxu0 0
        %1719 = vmatpush1.bf16.xpose.msra.mxu0 0
        %1720 = vmatprep.subr.bf16.mxu0 0
        %1721 = vmatpush1.bf16.xpose.msra.mxu0 0
        %1722 = vmatprep.subr.bf16.mxu0 0
        %1723 = vmatpush1.bf16.xpose.msra.mxu0 0
        %1724 = vmatprep.subr.bf16.mxu0 0
        %1725 = vmatpush1.bf16.xpose.msra.mxu0 0
        %1726 = vmatprep.subr.bf16.mxu0 0
        %1727 = vmatpush1.bf16.xpose.msra.mxu0 0
        %1728 = vmatprep.subr.bf16.mxu0 0
        %1729 = vmatpush1.bf16.xpose.msra.mxu0 0
        %1730 = vmatprep.subr.bf16.mxu0 0
        %1731 = vmatpush1.bf16.xpose.msra.mxu0 0
        %1732 = vmatprep.subr.bf16.mxu0 0
        %1733 = vmatpush1.bf16.xpose.msra.mxu0 0
        %1734 = vmatprep.subr.bf16.mxu0 0
        %1735 = vmatpush1.bf16.xpose.msra.mxu0 0
        %1736 = vmatprep.mubr.bf16.mxu0 0
        %1737 = vmatmul.mubr.bf16.gmra.mrb[0].mxu0 %v1699
        %v1738 = vpop.f32.mrb[0].mxu0
        %v1739 = vadd.f32 0.0, %v1738
        %v1740 = vpop.f32.mrb[0].mxu0
        %v1741 = vpop.f32.mrb[0].mxu0
        %v1742 = vpop.f32.mrb[0].mxu0
        %1743 = vdwg.mxu0
        %v1744 = vmul.f32 %v1739, 0.35355338
        %v1745 = vadd.f32 %v1744, %v1518
        %v1746 = vsel %vm1470, %v1745, -inf
        %1747 = vmax.xlane.f32.xlu0 %v1746
        %v1748 = vpop.xlane.xlu0 %1747
        %v1749 = vsub.f32 %v1745, %v1748
        %v1750 = vmul.f32 %v1749, 1.442695
        %v1751 = vpow.pop %v1750
        %v1752 = vsel %vm1470, %v1751, 0.0
        %1753 = vadd.xlane.f32.xlu0 %v1752
        %v1754 = vpop.xlane.xlu0 %1753
        %v1755 = vrcp.pop %v1754
        %v1756 = vmul.f32 %v1751, %v1755
        %v1757 = vpack.c.bf16 %v1756, %v1756
        %1758 = vrot.lane.b32.xlu0 %v1469, 112
        %v1759 = vpop.permute.xlu0 %1758
        %v1761 = vsel %vm1470, %v1757, 0
        %v1764 = vsel %vm1535, %v1759, 0
        %1766 = vmatprep.subr.bf16.mxu0 0
        %1767 = vmatpush1.bf16.msra.mxu0 %v1764
        %1768 = vmatprep.subr.bf16.mxu0 0
        %1769 = vmatpush1.bf16.msra.mxu0 0
        %1770 = vmatprep.subr.bf16.mxu0 0
        %1771 = vmatpush1.bf16.msra.mxu0 0
        %1772 = vmatprep.subr.bf16.mxu0 0
        %1773 = vmatpush1.bf16.msra.mxu0 0
        %1774 = vmatprep.subr.bf16.mxu0 0
        %1775 = vmatpush1.bf16.msra.mxu0 0
        %1776 = vmatprep.subr.bf16.mxu0 0
        %1777 = vmatpush1.bf16.msra.mxu0 0
        %1778 = vmatprep.subr.bf16.mxu0 0
        %1779 = vmatpush1.bf16.msra.mxu0 0
        %1780 = vmatprep.subr.bf16.mxu0 0
        %1781 = vmatpush1.bf16.msra.mxu0 0
        %1782 = vmatprep.subr.bf16.mxu0 0
        %1783 = vmatpush1.bf16.msra.mxu0 0
        %1784 = vmatprep.subr.bf16.mxu0 0
        %1785 = vmatpush1.bf16.msra.mxu0 0
        %1786 = vmatprep.subr.bf16.mxu0 0
        %1787 = vmatpush1.bf16.msra.mxu0 0
        %1788 = vmatprep.subr.bf16.mxu0 0
        %1789 = vmatpush1.bf16.msra.mxu0 0
        %1790 = vmatprep.subr.bf16.mxu0 0
        %1791 = vmatpush1.bf16.msra.mxu0 0
        %1792 = vmatprep.subr.bf16.mxu0 0
        %1793 = vmatpush1.bf16.msra.mxu0 0
        %1794 = vmatprep.subr.bf16.mxu0 0
        %1795 = vmatpush1.bf16.msra.mxu0 0
        %1796 = vmatprep.subr.bf16.mxu0 0
        %1797 = vmatpush1.bf16.msra.mxu0 0
        %1798 = vmatprep.mubr.bf16.mxu0 0
        %1799 = vmatmul.mubr.bf16.gmra.mrb[0].mxu0 %v1761
        %v1800 = vpop.f32.mrb[0].mxu0
        %v1801 = vadd.f32 0.0, %v1800
        %v1802 = vpop.f32.mrb[0].mxu0
        %v1803 = vpop.f32.mrb[0].mxu0
        %v1804 = vpop.f32.mrb[0].mxu0
        %1805 = vdwg.mxu0
        %1806 = vrot.lane.b32.xlu0 %v1467, 104
        %v1807 = vpop.permute.xlu0 %1806
        %1808 = vrot.lane.b32.xlu0 %v1468, 104
        %v1809 = vpop.permute.xlu0 %1808
        %v1811 = vsel %vm1470, %v1807, 0
        %v1814 = vsel %vm1470, %v1809, 0
        %1816 = vmatprep.subr.bf16.mxu0 0
        %1817 = vmatpush1.bf16.xpose.msra.mxu0 %v1814
        %1818 = vmatprep.subr.bf16.mxu0 0
        %1819 = vmatpush1.bf16.xpose.msra.mxu0 0
        %1820 = vmatprep.subr.bf16.mxu0 0
        %1821 = vmatpush1.bf16.xpose.msra.mxu0 0
        %1822 = vmatprep.subr.bf16.mxu0 0
        %1823 = vmatpush1.bf16.xpose.msra.mxu0 0
        %1824 = vmatprep.subr.bf16.mxu0 0
        %1825 = vmatpush1.bf16.xpose.msra.mxu0 0
        %1826 = vmatprep.subr.bf16.mxu0 0
        %1827 = vmatpush1.bf16.xpose.msra.mxu0 0
        %1828 = vmatprep.subr.bf16.mxu0 0
        %1829 = vmatpush1.bf16.xpose.msra.mxu0 0
        %1830 = vmatprep.subr.bf16.mxu0 0
        %1831 = vmatpush1.bf16.xpose.msra.mxu0 0
        %1832 = vmatprep.subr.bf16.mxu0 0
        %1833 = vmatpush1.bf16.xpose.msra.mxu0 0
        %1834 = vmatprep.subr.bf16.mxu0 0
        %1835 = vmatpush1.bf16.xpose.msra.mxu0 0
        %1836 = vmatprep.subr.bf16.mxu0 0
        %1837 = vmatpush1.bf16.xpose.msra.mxu0 0
        %1838 = vmatprep.subr.bf16.mxu0 0
        %1839 = vmatpush1.bf16.xpose.msra.mxu0 0
        %1840 = vmatprep.subr.bf16.mxu0 0
        %1841 = vmatpush1.bf16.xpose.msra.mxu0 0
        %1842 = vmatprep.subr.bf16.mxu0 0
        %1843 = vmatpush1.bf16.xpose.msra.mxu0 0
        %1844 = vmatprep.subr.bf16.mxu0 0
        %1845 = vmatpush1.bf16.xpose.msra.mxu0 0
        %1846 = vmatprep.subr.bf16.mxu0 0
        %1847 = vmatpush1.bf16.xpose.msra.mxu0 0
        %1848 = vmatprep.mubr.bf16.mxu0 0
        %1849 = vmatmul.mubr.bf16.gmra.mrb[0].mxu0 %v1811
        %v1850 = vpop.f32.mrb[0].mxu0
        %v1851 = vadd.f32 0.0, %v1850
        %v1852 = vpop.f32.mrb[0].mxu0
        %v1853 = vpop.f32.mrb[0].mxu0
        %v1854 = vpop.f32.mrb[0].mxu0
        %1855 = vdwg.mxu0
        %v1856 = vmul.f32 %v1851, 0.35355338
        %v1857 = vadd.f32 %v1856, %v1518
        %v1858 = vsel %vm1470, %v1857, -inf
        %1859 = vmax.xlane.f32.xlu0 %v1858
        %v1860 = vpop.xlane.xlu0 %1859
        %v1861 = vsub.f32 %v1857, %v1860
        %v1862 = vmul.f32 %v1861, 1.442695
        %v1863 = vpow.pop %v1862
        %v1864 = vsel %vm1470, %v1863, 0.0
        %1865 = vadd.xlane.f32.xlu0 %v1864
        %v1866 = vpop.xlane.xlu0 %1865
        %v1867 = vrcp.pop %v1866
        %v1868 = vmul.f32 %v1863, %v1867
        %v1869 = vpack.c.bf16 %v1868, %v1868
        %1870 = vrot.lane.b32.xlu0 %v1469, 104
        %v1871 = vpop.permute.xlu0 %1870
        %v1873 = vsel %vm1470, %v1869, 0
        %v1876 = vsel %vm1535, %v1871, 0
        %1878 = vmatprep.subr.bf16.mxu0 0
        %1879 = vmatpush1.bf16.msra.mxu0 %v1876
        %1880 = vmatprep.subr.bf16.mxu0 0
        %1881 = vmatpush1.bf16.msra.mxu0 0
        %1882 = vmatprep.subr.bf16.mxu0 0
        %1883 = vmatpush1.bf16.msra.mxu0 0
        %1884 = vmatprep.subr.bf16.mxu0 0
        %1885 = vmatpush1.bf16.msra.mxu0 0
        %1886 = vmatprep.subr.bf16.mxu0 0
        %1887 = vmatpush1.bf16.msra.mxu0 0
        %1888 = vmatprep.subr.bf16.mxu0 0
        %1889 = vmatpush1.bf16.msra.mxu0 0
        %1890 = vmatprep.subr.bf16.mxu0 0
        %1891 = vmatpush1.bf16.msra.mxu0 0
        %1892 = vmatprep.subr.bf16.mxu0 0
        %1893 = vmatpush1.bf16.msra.mxu0 0
        %1894 = vmatprep.subr.bf16.mxu0 0
        %1895 = vmatpush1.bf16.msra.mxu0 0
        %1896 = vmatprep.subr.bf16.mxu0 0
        %1897 = vmatpush1.bf16.msra.mxu0 0
        %1898 = vmatprep.subr.bf16.mxu0 0
        %1899 = vmatpush1.bf16.msra.mxu0 0
        %1900 = vmatprep.subr.bf16.mxu0 0
        %1901 = vmatpush1.bf16.msra.mxu0 0
        %1902 = vmatprep.subr.bf16.mxu0 0
        %1903 = vmatpush1.bf16.msra.mxu0 0
        %1904 = vmatprep.subr.bf16.mxu0 0
        %1905 = vmatpush1.bf16.msra.mxu0 0
        %1906 = vmatprep.subr.bf16.mxu0 0
        %1907 = vmatpush1.bf16.msra.mxu0 0
        %1908 = vmatprep.subr.bf16.mxu0 0
        %1909 = vmatpush1.bf16.msra.mxu0 0
        %1910 = vmatprep.mubr.bf16.mxu0 0
        %1911 = vmatmul.mubr.bf16.gmra.mrb[0].mxu0 %v1873
        %v1912 = vpop.f32.mrb[0].mxu0
        %v1913 = vadd.f32 0.0, %v1912
        %v1914 = vpop.f32.mrb[0].mxu0
        %v1915 = vpop.f32.mrb[0].mxu0
        %v1916 = vpop.f32.mrb[0].mxu0
        %1917 = vdwg.mxu0
        %1919 = vrot.lane.b32.xlu0 %v1689, 8
        %v1920 = vpop.permute.xlu0 %1919
        %1923 = vrot.lane.b32.xlu0 %v1801, 16
        %v1924 = vpop.permute.xlu0 %1923
        %1927 = vrot.lane.b32.xlu0 %v1913, 24
        %v1928 = vpop.permute.xlu0 %1927
        %v1930 = vsel %vm1470, %v1574, %v1920
        %vm1931 = vcmask 130048
        %v1932 = vsel %vm1931, %v1930, %v1924
        %vm1933 = vcmask 195584
        %v1934 = vsel %vm1933, %v1932, %v1928
        %v1935 = vpack.c.bf16 %v1934, %v1934
        %v1940 = vunpack.c.l.b16 %v1300
        %v1941 = vunpack.c.l.b16 %v1301
        %v1942 = vunpack.c.l.b16 %v1302
        %v1943 = vunpack.c.l.b16 %v1303
        %v1944 = vpack.c.b16 %v1941, %v1940
        %v1945 = vpack.c.b16 %v1943, %v1942
        %v1949 = vsel %vm1319, %v1935, 0
        %1951 = vmatprep.subr.bf16.mxu0 0
        %1952 = vmatpush1.bf16.msra.mxu0 %v1944
        %1953 = vmatprep.subr.bf16.mxu0 0
        %1954 = vmatpush1.bf16.msra.mxu0 %v1945
        %1955 = vmatprep.subr.bf16.mxu0 0
        %1956 = vmatpush1.bf16.msra.mxu0 0
        %1957 = vmatprep.subr.bf16.mxu0 0
        %1958 = vmatpush1.bf16.msra.mxu0 0
        %1959 = vmatprep.subr.bf16.mxu0 0
        %1960 = vmatpush1.bf16.msra.mxu0 0
        %1961 = vmatprep.subr.bf16.mxu0 0
        %1962 = vmatpush1.bf16.msra.mxu0 0
        %1963 = vmatprep.subr.bf16.mxu0 0
        %1964 = vmatpush1.bf16.msra.mxu0 0
        %1965 = vmatprep.subr.bf16.mxu0 0
        %1966 = vmatpush1.bf16.msra.mxu0 0
        %1967 = vmatprep.subr.bf16.mxu0 0
        %1968 = vmatpush1.bf16.msra.mxu0 0
        %1969 = vmatprep.subr.bf16.mxu0 0
        %1970 = vmatpush1.bf16.msra.mxu0 0
        %1971 = vmatprep.subr.bf16.mxu0 0
        %1972 = vmatpush1.bf16.msra.mxu0 0
        %1973 = vmatprep.subr.bf16.mxu0 0
        %1974 = vmatpush1.bf16.msra.mxu0 0
        %1975 = vmatprep.subr.bf16.mxu0 0
        %1976 = vmatpush1.bf16.msra.mxu0 0
        %1977 = vmatprep.subr.bf16.mxu0 0
        %1978 = vmatpush1.bf16.msra.mxu0 0
        %1979 = vmatprep.subr.bf16.mxu0 0
        %1980 = vmatpush1.bf16.msra.mxu0 0
        %1981 = vmatprep.subr.bf16.mxu0 0
        %1982 = vmatpush1.bf16.msra.mxu0 0
        %1983 = vmatprep.mubr.bf16.mxu0 0
        %1984 = vmatmul.mubr.bf16.gmra.mrb[0].mxu0 %v1949
        %v1985 = vpop.f32.mrb[0].mxu0
        %v1986 = vadd.f32 0.0, %v1985
        %v1987 = vpop.f32.mrb[0].mxu0
        %v1988 = vpop.f32.mrb[0].mxu0
        %v1989 = vpop.f32.mrb[0].mxu0
        %1990 = vdwg.mxu0
        %v1991 = vadd.f32 %v1986, %v1284
        %v1992 = vsel %vm1319, %v1991, 0.0
        %1993 = vadd.xlane.f32.xlu0 %v1992
        %v1994 = vpop.xlane.xlu0 %1993
        %v1995 = vrcp.pop 32.0
        %v1996 = vmul.f32 %v1994, %v1995
        %v1997 = vsub.f32 %v1991, %v1996
        %v1998 = vmul.f32 %v1997, %v1997
        %v1999 = vsel %vm1319, %v1998, 0.0
        %2000 = vadd.xlane.f32.xlu0 %v1999
        %v2001 = vpop.xlane.xlu0 %2000
        %v2002 = vmul.f32 %v2001, %v1995
        %v2003 = vadd.f32 %v2002, 1e-06
        %v2004 = vrsqrt.pop %v2003
        %v2005 = vmul.f32 %v1997, %v2004
        %v2007 = vlaneseq
        %v2008 = vshrl.u32 %v2007, 7
        %v2009 = vsub.s32 0, %v2008
        %v2010 = vrot.slane %v1304, %v2009
        %v2012 = vmul.f32 %v2005, %v2010
        %v2014 = vlaneseq
        %v2015 = vshrl.u32 %v2014, 7
        %v2016 = vsub.s32 0, %v2015
        %v2017 = vrot.slane %v1305, %v2016
        %v2019 = vadd.f32 %v2012, %v2017
        %v2020 = vld [vmem:[%s1258] sm:$0xf]
        %v2021 = vld [vmem:[%s1258 + $0x4] sm:$0xf]
        %v2022 = vld [vmem:[%s1258 + $0x8] sm:$0xf]
        %v2023 = vld [vmem:[%s1258 + $0xc] sm:$0xf]
        %v2024 = vld [vmem:[%s1041] sm:$0xf]
        %v2025 = vld [vmem:[%s1041 + $0x4] sm:$0xf]
        %v2026 = vld [vmem:[%s1041 + $0x8] sm:$0xf]
        %v2027 = vld [vmem:[%s1041 + $0xc] sm:$0xf]
        %v2028 = vld [vmem:[%s1050] sm:$0xf]
        %v2029 = vld [vmem:[%s1050 + $0x4] sm:$0xf]
        %v2030 = vld [vmem:[%s1050 + $0x8] sm:$0xf]
        %v2031 = vld [vmem:[%s1050 + $0xc] sm:$0xf]
        %v2032 = vld [vmem:[%s1059] sm:$0xf]
        %v2033 = vld [vmem:[%s1059 + $0x4] sm:$0xf]
        %v2034 = vld [vmem:[%s1059 + $0x8] sm:$0xf]
        %v2035 = vld [vmem:[%s1059 + $0xc] sm:$0xf]
        %v2036 = vld [vmem:[%s1067] sm:$0x1]
        %v2037 = vld [vmem:[%s1075] sm:$0x1]
        %v2038 = vpack.c.bf16 %v2019, %v2019
        %v2039 = vpack.c.bf16 %v1285, %v1285
        %v2044 = vunpack.c.l.b16 %v2020
        %v2045 = vunpack.c.l.b16 %v2021
        %v2046 = vunpack.c.l.b16 %v2022
        %v2047 = vunpack.c.l.b16 %v2023
        %v2048 = vpack.c.b16 %v2045, %v2044
        %v2049 = vpack.c.b16 %v2047, %v2046
        %v2053 = vsel %vm1319, %v2038, 0
        %2055 = vmatprep.subr.bf16.mxu0 0
        %2056 = vmatpush1.bf16.msra.mxu0 %v2048
        %2057 = vmatprep.subr.bf16.mxu0 0
        %2058 = vmatpush1.bf16.msra.mxu0 %v2049
        %2059 = vmatprep.subr.bf16.mxu0 0
        %2060 = vmatpush1.bf16.msra.mxu0 0
        %2061 = vmatprep.subr.bf16.mxu0 0
        %2062 = vmatpush1.bf16.msra.mxu0 0
        %2063 = vmatprep.subr.bf16.mxu0 0
        %2064 = vmatpush1.bf16.msra.mxu0 0
        %2065 = vmatprep.subr.bf16.mxu0 0
        %2066 = vmatpush1.bf16.msra.mxu0 0
        %2067 = vmatprep.subr.bf16.mxu0 0
        %2068 = vmatpush1.bf16.msra.mxu0 0
        %2069 = vmatprep.subr.bf16.mxu0 0
        %2070 = vmatpush1.bf16.msra.mxu0 0
        %2071 = vmatprep.subr.bf16.mxu0 0
        %2072 = vmatpush1.bf16.msra.mxu0 0
        %2073 = vmatprep.subr.bf16.mxu0 0
        %2074 = vmatpush1.bf16.msra.mxu0 0
        %2075 = vmatprep.subr.bf16.mxu0 0
        %2076 = vmatpush1.bf16.msra.mxu0 0
        %2077 = vmatprep.subr.bf16.mxu0 0
        %2078 = vmatpush1.bf16.msra.mxu0 0
        %2079 = vmatprep.subr.bf16.mxu0 0
        %2080 = vmatpush1.bf16.msra.mxu0 0
        %2081 = vmatprep.subr.bf16.mxu0 0
        %2082 = vmatpush1.bf16.msra.mxu0 0
        %2083 = vmatprep.subr.bf16.mxu0 0
        %2084 = vmatpush1.bf16.msra.mxu0 0
        %2085 = vmatprep.subr.bf16.mxu0 0
        %2086 = vmatpush1.bf16.msra.mxu0 0
        %2087 = vmatprep.mubr.bf16.mxu0 0
        %2088 = vmatmul.mubr.bf16.gmra.mrb[0].mxu0 %v2053
        %v2089 = vpop.f32.mrb[0].mxu0
        %v2090 = vadd.f32 0.0, %v2089
        %v2091 = vpop.f32.mrb[0].mxu0
        %v2092 = vpop.f32.mrb[0].mxu0
        %v2093 = vpop.f32.mrb[0].mxu0
        %2094 = vdwg.mxu0
        %v2099 = vunpack.c.l.b16 %v2024
        %v2100 = vunpack.c.l.b16 %v2025
        %v2101 = vunpack.c.l.b16 %v2026
        %v2102 = vunpack.c.l.b16 %v2027
        %v2103 = vpack.c.b16 %v2100, %v2099
        %v2104 = vpack.c.b16 %v2102, %v2101
        %v2108 = vsel %vm1319, %v2039, 0
        %2110 = vmatprep.subr.bf16.mxu0 0
        %2111 = vmatpush1.bf16.msra.mxu0 %v2103
        %2112 = vmatprep.subr.bf16.mxu0 0
        %2113 = vmatpush1.bf16.msra.mxu0 %v2104
        %2114 = vmatprep.subr.bf16.mxu0 0
        %2115 = vmatpush1.bf16.msra.mxu0 0
        %2116 = vmatprep.subr.bf16.mxu0 0
        %2117 = vmatpush1.bf16.msra.mxu0 0
        %2118 = vmatprep.subr.bf16.mxu0 0
        %2119 = vmatpush1.bf16.msra.mxu0 0
        %2120 = vmatprep.subr.bf16.mxu0 0
        %2121 = vmatpush1.bf16.msra.mxu0 0
        %2122 = vmatprep.subr.bf16.mxu0 0
        %2123 = vmatpush1.bf16.msra.mxu0 0
        %2124 = vmatprep.subr.bf16.mxu0 0
        %2125 = vmatpush1.bf16.msra.mxu0 0
        %2126 = vmatprep.subr.bf16.mxu0 0
        %2127 = vmatpush1.bf16.msra.mxu0 0
        %2128 = vmatprep.subr.bf16.mxu0 0
        %2129 = vmatpush1.bf16.msra.mxu0 0
        %2130 = vmatprep.subr.bf16.mxu0 0
        %2131 = vmatpush1.bf16.msra.mxu0 0
        %2132 = vmatprep.subr.bf16.mxu0 0
        %2133 = vmatpush1.bf16.msra.mxu0 0
        %2134 = vmatprep.subr.bf16.mxu0 0
        %2135 = vmatpush1.bf16.msra.mxu0 0
        %2136 = vmatprep.subr.bf16.mxu0 0
        %2137 = vmatpush1.bf16.msra.mxu0 0
        %2138 = vmatprep.subr.bf16.mxu0 0
        %2139 = vmatpush1.bf16.msra.mxu0 0
        %2140 = vmatprep.subr.bf16.mxu0 0
        %2141 = vmatpush1.bf16.msra.mxu0 0
        %2142 = vmatprep.mubr.bf16.mxu0 0
        %2143 = vmatmul.mubr.bf16.gmra.mrb[0].mxu0 %v2108
        %v2144 = vpop.f32.mrb[0].mxu0
        %v2145 = vadd.f32 0.0, %v2144
        %v2146 = vpop.f32.mrb[0].mxu0
        %v2147 = vpop.f32.mrb[0].mxu0
        %v2148 = vpop.f32.mrb[0].mxu0
        %2149 = vdwg.mxu0
        %v2154 = vunpack.c.l.b16 %v2028
        %v2155 = vunpack.c.l.b16 %v2029
        %v2156 = vunpack.c.l.b16 %v2030
        %v2157 = vunpack.c.l.b16 %v2031
        %v2158 = vpack.c.b16 %v2155, %v2154
        %v2159 = vpack.c.b16 %v2157, %v2156
        %2162 = vmatprep.subr.bf16.mxu0 0
        %2163 = vmatpush1.bf16.msra.mxu0 %v2158
        %2164 = vmatprep.subr.bf16.mxu0 0
        %2165 = vmatpush1.bf16.msra.mxu0 %v2159
        %2166 = vmatprep.subr.bf16.mxu0 0
        %2167 = vmatpush1.bf16.msra.mxu0 0
        %2168 = vmatprep.subr.bf16.mxu0 0
        %2169 = vmatpush1.bf16.msra.mxu0 0
        %2170 = vmatprep.subr.bf16.mxu0 0
        %2171 = vmatpush1.bf16.msra.mxu0 0
        %2172 = vmatprep.subr.bf16.mxu0 0
        %2173 = vmatpush1.bf16.msra.mxu0 0
        %2174 = vmatprep.subr.bf16.mxu0 0
        %2175 = vmatpush1.bf16.msra.mxu0 0
        %2176 = vmatprep.subr.bf16.mxu0 0
        %2177 = vmatpush1.bf16.msra.mxu0 0
        %2178 = vmatprep.subr.bf16.mxu0 0
        %2179 = vmatpush1.bf16.msra.mxu0 0
        %2180 = vmatprep.subr.bf16.mxu0 0
        %2181 = vmatpush1.bf16.msra.mxu0 0
        %2182 = vmatprep.subr.bf16.mxu0 0
        %2183 = vmatpush1.bf16.msra.mxu0 0
        %2184 = vmatprep.subr.bf16.mxu0 0
        %2185 = vmatpush1.bf16.msra.mxu0 0
        %2186 = vmatprep.subr.bf16.mxu0 0
        %2187 = vmatpush1.bf16.msra.mxu0 0
        %2188 = vmatprep.subr.bf16.mxu0 0
        %2189 = vmatpush1.bf16.msra.mxu0 0
        %2190 = vmatprep.subr.bf16.mxu0 0
        %2191 = vmatpush1.bf16.msra.mxu0 0
        %2192 = vmatprep.subr.bf16.mxu0 0
        %2193 = vmatpush1.bf16.msra.mxu0 0
        %2194 = vmatprep.mubr.bf16.mxu0 0
        %2195 = vmatmul.mubr.bf16.gmra.mrb[0].mxu0 %v2108
        %v2196 = vpop.f32.mrb[0].mxu0
        %v2197 = vadd.f32 0.0, %v2196
        %v2198 = vpop.f32.mrb[0].mxu0
        %v2199 = vpop.f32.mrb[0].mxu0
        %v2200 = vpop.f32.mrb[0].mxu0
        %2201 = vdwg.mxu0
        %v2202 = vpack.c.bf16 %v2090, %v2090
        %v2203 = vpack.c.bf16 %v2145, %v2145
        %v2204 = vpack.c.bf16 %v2197, %v2197
        %v2206 = vsel %vm1470, %v2202, 0
        %v2209 = vsel %vm1470, %v2203, 0
        %2211 = vmatprep.subr.bf16.mxu0 0
        %2212 = vmatpush1.bf16.xpose.msra.mxu0 %v2209
        %2213 = vmatprep.subr.bf16.mxu0 0
        %2214 = vmatpush1.bf16.xpose.msra.mxu0 0
        %2215 = vmatprep.subr.bf16.mxu0 0
        %2216 = vmatpush1.bf16.xpose.msra.mxu0 0
        %2217 = vmatprep.subr.bf16.mxu0 0
        %2218 = vmatpush1.bf16.xpose.msra.mxu0 0
        %2219 = vmatprep.subr.bf16.mxu0 0
        %2220 = vmatpush1.bf16.xpose.msra.mxu0 0
        %2221 = vmatprep.subr.bf16.mxu0 0
        %2222 = vmatpush1.bf16.xpose.msra.mxu0 0
        %2223 = vmatprep.subr.bf16.mxu0 0
        %2224 = vmatpush1.bf16.xpose.msra.mxu0 0
        %2225 = vmatprep.subr.bf16.mxu0 0
        %2226 = vmatpush1.bf16.xpose.msra.mxu0 0
        %2227 = vmatprep.subr.bf16.mxu0 0
        %2228 = vmatpush1.bf16.xpose.msra.mxu0 0
        %2229 = vmatprep.subr.bf16.mxu0 0
        %2230 = vmatpush1.bf16.xpose.msra.mxu0 0
        %2231 = vmatprep.subr.bf16.mxu0 0
        %2232 = vmatpush1.bf16.xpose.msra.mxu0 0
        %2233 = vmatprep.subr.bf16.mxu0 0
        %2234 = vmatpush1.bf16.xpose.msra.mxu0 0
        %2235 = vmatprep.subr.bf16.mxu0 0
        %2236 = vmatpush1.bf16.xpose.msra.mxu0 0
        %2237 = vmatprep.subr.bf16.mxu0 0
        %2238 = vmatpush1.bf16.xpose.msra.mxu0 0
        %2239 = vmatprep.subr.bf16.mxu0 0
        %2240 = vmatpush1.bf16.xpose.msra.mxu0 0
        %2241 = vmatprep.subr.bf16.mxu0 0
        %2242 = vmatpush1.bf16.xpose.msra.mxu0 0
        %2243 = vmatprep.mubr.bf16.mxu0 0
        %2244 = vmatmul.mubr.bf16.gmra.mrb[0].mxu0 %v2206
        %v2245 = vpop.f32.mrb[0].mxu0
        %v2246 = vadd.f32 0.0, %v2245
        %v2247 = vpop.f32.mrb[0].mxu0
        %v2248 = vpop.f32.mrb[0].mxu0
        %v2249 = vpop.f32.mrb[0].mxu0
        %2250 = vdwg.mxu0
        %v2251 = vmul.f32 %v2246, 0.35355338
        %v2252 = vunpack.c.l.bf16 %v1287
        %v2253 = vlaneseq
        %v2254 = vshrl.u32 %v2253, 7
        %v2255 = vsub.s32 0, %v2254
        %v2256 = vrot.slane %v2252, %v2255
        %v2257 = vadd.f32 %v2251, %v2256
        %v2258 = vsel %vm1470, %v2257, -inf
        %2259 = vmax.xlane.f32.xlu0 %v2258
        %v2260 = vpop.xlane.xlu0 %2259
        %v2261 = vsub.f32 %v2257, %v2260
        %v2262 = vmul.f32 %v2261, 1.442695
        %v2263 = vpow.pop %v2262
        %v2264 = vsel %vm1470, %v2263, 0.0
        %2265 = vadd.xlane.f32.xlu0 %v2264
        %v2266 = vpop.xlane.xlu0 %2265
        %v2267 = vrcp.pop %v2266
        %v2268 = vmul.f32 %v2263, %v2267
        %v2269 = vpack.c.bf16 %v2268, %v2268
        %v2271 = vsel %vm1470, %v2269, 0
        %v2274 = vsel %vm1535, %v2204, 0
        %2276 = vmatprep.subr.bf16.mxu0 0
        %2277 = vmatpush1.bf16.msra.mxu0 %v2274
        %2278 = vmatprep.subr.bf16.mxu0 0
        %2279 = vmatpush1.bf16.msra.mxu0 0
        %2280 = vmatprep.subr.bf16.mxu0 0
        %2281 = vmatpush1.bf16.msra.mxu0 0
        %2282 = vmatprep.subr.bf16.mxu0 0
        %2283 = vmatpush1.bf16.msra.mxu0 0
        %2284 = vmatprep.subr.bf16.mxu0 0
        %2285 = vmatpush1.bf16.msra.mxu0 0
        %2286 = vmatprep.subr.bf16.mxu0 0
        %2287 = vmatpush1.bf16.msra.mxu0 0
        %2288 = vmatprep.subr.bf16.mxu0 0
        %2289 = vmatpush1.bf16.msra.mxu0 0
        %2290 = vmatprep.subr.bf16.mxu0 0
        %2291 = vmatpush1.bf16.msra.mxu0 0
        %2292 = vmatprep.subr.bf16.mxu0 0
        %2293 = vmatpush1.bf16.msra.mxu0 0
        %2294 = vmatprep.subr.bf16.mxu0 0
        %2295 = vmatpush1.bf16.msra.mxu0 0
        %2296 = vmatprep.subr.bf16.mxu0 0
        %2297 = vmatpush1.bf16.msra.mxu0 0
        %2298 = vmatprep.subr.bf16.mxu0 0
        %2299 = vmatpush1.bf16.msra.mxu0 0
        %2300 = vmatprep.subr.bf16.mxu0 0
        %2301 = vmatpush1.bf16.msra.mxu0 0
        %2302 = vmatprep.subr.bf16.mxu0 0
        %2303 = vmatpush1.bf16.msra.mxu0 0
        %2304 = vmatprep.subr.bf16.mxu0 0
        %2305 = vmatpush1.bf16.msra.mxu0 0
        %2306 = vmatprep.subr.bf16.mxu0 0
        %2307 = vmatpush1.bf16.msra.mxu0 0
        %2308 = vmatprep.mubr.bf16.mxu0 0
        %2309 = vmatmul.mubr.bf16.gmra.mrb[0].mxu0 %v2271
        %v2310 = vpop.f32.mrb[0].mxu0
        %v2311 = vadd.f32 0.0, %v2310
        %v2312 = vpop.f32.mrb[0].mxu0
        %v2313 = vpop.f32.mrb[0].mxu0
        %v2314 = vpop.f32.mrb[0].mxu0
        %2315 = vdwg.mxu0
        %2317 = vrot.lane.b32.xlu0 %v2202, 120
        %v2318 = vpop.permute.xlu0 %2317
        %2320 = vrot.lane.b32.xlu0 %v2203, 120
        %v2321 = vpop.permute.xlu0 %2320
        %v2323 = vsel %vm1470, %v2318, 0
        %v2326 = vsel %vm1470, %v2321, 0
        %2328 = vmatprep.subr.bf16.mxu0 0
        %2329 = vmatpush1.bf16.xpose.msra.mxu0 %v2326
        %2330 = vmatprep.subr.bf16.mxu0 0
        %2331 = vmatpush1.bf16.xpose.msra.mxu0 0
        %2332 = vmatprep.subr.bf16.mxu0 0
        %2333 = vmatpush1.bf16.xpose.msra.mxu0 0
        %2334 = vmatprep.subr.bf16.mxu0 0
        %2335 = vmatpush1.bf16.xpose.msra.mxu0 0
        %2336 = vmatprep.subr.bf16.mxu0 0
        %2337 = vmatpush1.bf16.xpose.msra.mxu0 0
        %2338 = vmatprep.subr.bf16.mxu0 0
        %2339 = vmatpush1.bf16.xpose.msra.mxu0 0
        %2340 = vmatprep.subr.bf16.mxu0 0
        %2341 = vmatpush1.bf16.xpose.msra.mxu0 0
        %2342 = vmatprep.subr.bf16.mxu0 0
        %2343 = vmatpush1.bf16.xpose.msra.mxu0 0
        %2344 = vmatprep.subr.bf16.mxu0 0
        %2345 = vmatpush1.bf16.xpose.msra.mxu0 0
        %2346 = vmatprep.subr.bf16.mxu0 0
        %2347 = vmatpush1.bf16.xpose.msra.mxu0 0
        %2348 = vmatprep.subr.bf16.mxu0 0
        %2349 = vmatpush1.bf16.xpose.msra.mxu0 0
        %2350 = vmatprep.subr.bf16.mxu0 0
        %2351 = vmatpush1.bf16.xpose.msra.mxu0 0
        %2352 = vmatprep.subr.bf16.mxu0 0
        %2353 = vmatpush1.bf16.xpose.msra.mxu0 0
        %2354 = vmatprep.subr.bf16.mxu0 0
        %2355 = vmatpush1.bf16.xpose.msra.mxu0 0
        %2356 = vmatprep.subr.bf16.mxu0 0
        %2357 = vmatpush1.bf16.xpose.msra.mxu0 0
        %2358 = vmatprep.subr.bf16.mxu0 0
        %2359 = vmatpush1.bf16.xpose.msra.mxu0 0
        %2360 = vmatprep.mubr.bf16.mxu0 0
        %2361 = vmatmul.mubr.bf16.gmra.mrb[0].mxu0 %v2323
        %v2362 = vpop.f32.mrb[0].mxu0
        %v2363 = vadd.f32 0.0, %v2362
        %v2364 = vpop.f32.mrb[0].mxu0
        %v2365 = vpop.f32.mrb[0].mxu0
        %v2366 = vpop.f32.mrb[0].mxu0
        %2367 = vdwg.mxu0
        %v2368 = vmul.f32 %v2363, 0.35355338
        %v2369 = vadd.f32 %v2368, %v2256
        %v2370 = vsel %vm1470, %v2369, -inf
        %2371 = vmax.xlane.f32.xlu0 %v2370
        %v2372 = vpop.xlane.xlu0 %2371
        %v2373 = vsub.f32 %v2369, %v2372
        %v2374 = vmul.f32 %v2373, 1.442695
        %v2375 = vpow.pop %v2374
        %v2376 = vsel %vm1470, %v2375, 0.0
        %2377 = vadd.xlane.f32.xlu0 %v2376
        %v2378 = vpop.xlane.xlu0 %2377
        %v2379 = vrcp.pop %v2378
        %v2380 = vmul.f32 %v2375, %v2379
        %v2381 = vpack.c.bf16 %v2380, %v2380
        %2383 = vrot.lane.b32.xlu0 %v2204, 120
        %v2384 = vpop.permute.xlu0 %2383
        %v2386 = vsel %vm1470, %v2381, 0
        %v2389 = vsel %vm1535, %v2384, 0
        %2391 = vmatprep.subr.bf16.mxu0 0
        %2392 = vmatpush1.bf16.msra.mxu0 %v2389
        %2393 = vmatprep.subr.bf16.mxu0 0
        %2394 = vmatpush1.bf16.msra.mxu0 0
        %2395 = vmatprep.subr.bf16.mxu0 0
        %2396 = vmatpush1.bf16.msra.mxu0 0
        %2397 = vmatprep.subr.bf16.mxu0 0
        %2398 = vmatpush1.bf16.msra.mxu0 0
        %2399 = vmatprep.subr.bf16.mxu0 0
        %2400 = vmatpush1.bf16.msra.mxu0 0
        %2401 = vmatprep.subr.bf16.mxu0 0
        %2402 = vmatpush1.bf16.msra.mxu0 0
        %2403 = vmatprep.subr.bf16.mxu0 0
        %2404 = vmatpush1.bf16.msra.mxu0 0
        %2405 = vmatprep.subr.bf16.mxu0 0
        %2406 = vmatpush1.bf16.msra.mxu0 0
        %2407 = vmatprep.subr.bf16.mxu0 0
        %2408 = vmatpush1.bf16.msra.mxu0 0
        %2409 = vmatprep.subr.bf16.mxu0 0
        %2410 = vmatpush1.bf16.msra.mxu0 0
        %2411 = vmatprep.subr.bf16.mxu0 0
        %2412 = vmatpush1.bf16.msra.mxu0 0
        %2413 = vmatprep.subr.bf16.mxu0 0
        %2414 = vmatpush1.bf16.msra.mxu0 0
        %2415 = vmatprep.subr.bf16.mxu0 0
        %2416 = vmatpush1.bf16.msra.mxu0 0
        %2417 = vmatprep.subr.bf16.mxu0 0
        %2418 = vmatpush1.bf16.msra.mxu0 0
        %2419 = vmatprep.subr.bf16.mxu0 0
        %2420 = vmatpush1.bf16.msra.mxu0 0
        %2421 = vmatprep.subr.bf16.mxu0 0
        %2422 = vmatpush1.bf16.msra.mxu0 0
        %2423 = vmatprep.mubr.bf16.mxu0 0
        %2424 = vmatmul.mubr.bf16.gmra.mrb[0].mxu0 %v2386
        %v2425 = vpop.f32.mrb[0].mxu0
        %v2426 = vadd.f32 0.0, %v2425
        %v2427 = vpop.f32.mrb[0].mxu0
        %v2428 = vpop.f32.mrb[0].mxu0
        %v2429 = vpop.f32.mrb[0].mxu0
        %2430 = vdwg.mxu0
        %2431 = vrot.lane.b32.xlu0 %v2202, 112
        %v2432 = vpop.permute.xlu0 %2431
        %2433 = vrot.lane.b32.xlu0 %v2203, 112
        %v2434 = vpop.permute.xlu0 %2433
        %v2436 = vsel %vm1470, %v2432, 0
        %v2439 = vsel %vm1470, %v2434, 0
        %2441 = vmatprep.subr.bf16.mxu0 0
        %2442 = vmatpush1.bf16.xpose.msra.mxu0 %v2439
        %2443 = vmatprep.subr.bf16.mxu0 0
        %2444 = vmatpush1.bf16.xpose.msra.mxu0 0
        %2445 = vmatprep.subr.bf16.mxu0 0
        %2446 = vmatpush1.bf16.xpose.msra.mxu0 0
        %2447 = vmatprep.subr.bf16.mxu0 0
        %2448 = vmatpush1.bf16.xpose.msra.mxu0 0
        %2449 = vmatprep.subr.bf16.mxu0 0
        %2450 = vmatpush1.bf16.xpose.msra.mxu0 0
        %2451 = vmatprep.subr.bf16.mxu0 0
        %2452 = vmatpush1.bf16.xpose.msra.mxu0 0
        %2453 = vmatprep.subr.bf16.mxu0 0
        %2454 = vmatpush1.bf16.xpose.msra.mxu0 0
        %2455 = vmatprep.subr.bf16.mxu0 0
        %2456 = vmatpush1.bf16.xpose.msra.mxu0 0
        %2457 = vmatprep.subr.bf16.mxu0 0
        %2458 = vmatpush1.bf16.xpose.msra.mxu0 0
        %2459 = vmatprep.subr.bf16.mxu0 0
        %2460 = vmatpush1.bf16.xpose.msra.mxu0 0
        %2461 = vmatprep.subr.bf16.mxu0 0
        %2462 = vmatpush1.bf16.xpose.msra.mxu0 0
        %2463 = vmatprep.subr.bf16.mxu0 0
        %2464 = vmatpush1.bf16.xpose.msra.mxu0 0
        %2465 = vmatprep.subr.bf16.mxu0 0
        %2466 = vmatpush1.bf16.xpose.msra.mxu0 0
        %2467 = vmatprep.subr.bf16.mxu0 0
        %2468 = vmatpush1.bf16.xpose.msra.mxu0 0
        %2469 = vmatprep.subr.bf16.mxu0 0
        %2470 = vmatpush1.bf16.xpose.msra.mxu0 0
        %2471 = vmatprep.subr.bf16.mxu0 0
        %2472 = vmatpush1.bf16.xpose.msra.mxu0 0
        %2473 = vmatprep.mubr.bf16.mxu0 0
        %2474 = vmatmul.mubr.bf16.gmra.mrb[0].mxu0 %v2436
        %v2475 = vpop.f32.mrb[0].mxu0
        %v2476 = vadd.f32 0.0, %v2475
        %v2477 = vpop.f32.mrb[0].mxu0
        %v2478 = vpop.f32.mrb[0].mxu0
        %v2479 = vpop.f32.mrb[0].mxu0
        %2480 = vdwg.mxu0
        %v2481 = vmul.f32 %v2476, 0.35355338
        %v2482 = vadd.f32 %v2481, %v2256
        %v2483 = vsel %vm1470, %v2482, -inf
        %2484 = vmax.xlane.f32.xlu0 %v2483
        %v2485 = vpop.xlane.xlu0 %2484
        %v2486 = vsub.f32 %v2482, %v2485
        %v2487 = vmul.f32 %v2486, 1.442695
        %v2488 = vpow.pop %v2487
        %v2489 = vsel %vm1470, %v2488, 0.0
        %2490 = vadd.xlane.f32.xlu0 %v2489
        %v2491 = vpop.xlane.xlu0 %2490
        %v2492 = vrcp.pop %v2491
        %v2493 = vmul.f32 %v2488, %v2492
        %v2494 = vpack.c.bf16 %v2493, %v2493
        %2495 = vrot.lane.b32.xlu0 %v2204, 112
        %v2496 = vpop.permute.xlu0 %2495
        %v2498 = vsel %vm1470, %v2494, 0
        %v2501 = vsel %vm1535, %v2496, 0
        %2503 = vmatprep.subr.bf16.mxu0 0
        %2504 = vmatpush1.bf16.msra.mxu0 %v2501
        %2505 = vmatprep.subr.bf16.mxu0 0
        %2506 = vmatpush1.bf16.msra.mxu0 0
        %2507 = vmatprep.subr.bf16.mxu0 0
        %2508 = vmatpush1.bf16.msra.mxu0 0
        %2509 = vmatprep.subr.bf16.mxu0 0
        %2510 = vmatpush1.bf16.msra.mxu0 0
        %2511 = vmatprep.subr.bf16.mxu0 0
        %2512 = vmatpush1.bf16.msra.mxu0 0
        %2513 = vmatprep.subr.bf16.mxu0 0
        %2514 = vmatpush1.bf16.msra.mxu0 0
        %2515 = vmatprep.subr.bf16.mxu0 0
        %2516 = vmatpush1.bf16.msra.mxu0 0
        %2517 = vmatprep.subr.bf16.mxu0 0
        %2518 = vmatpush1.bf16.msra.mxu0 0
        %2519 = vmatprep.subr.bf16.mxu0 0
        %2520 = vmatpush1.bf16.msra.mxu0 0
        %2521 = vmatprep.subr.bf16.mxu0 0
        %2522 = vmatpush1.bf16.msra.mxu0 0
        %2523 = vmatprep.subr.bf16.mxu0 0
        %2524 = vmatpush1.bf16.msra.mxu0 0
        %2525 = vmatprep.subr.bf16.mxu0 0
        %2526 = vmatpush1.bf16.msra.mxu0 0
        %2527 = vmatprep.subr.bf16.mxu0 0
        %2528 = vmatpush1.bf16.msra.mxu0 0
        %2529 = vmatprep.subr.bf16.mxu0 0
        %2530 = vmatpush1.bf16.msra.mxu0 0
        %2531 = vmatprep.subr.bf16.mxu0 0
        %2532 = vmatpush1.bf16.msra.mxu0 0
        %2533 = vmatprep.subr.bf16.mxu0 0
        %2534 = vmatpush1.bf16.msra.mxu0 0
        %2535 = vmatprep.mubr.bf16.mxu0 0
        %2536 = vmatmul.mubr.bf16.gmra.mrb[0].mxu0 %v2498
        %v2537 = vpop.f32.mrb[0].mxu0
        %v2538 = vadd.f32 0.0, %v2537
        %v2539 = vpop.f32.mrb[0].mxu0
        %v2540 = vpop.f32.mrb[0].mxu0
        %v2541 = vpop.f32.mrb[0].mxu0
        %2542 = vdwg.mxu0
        %2543 = vrot.lane.b32.xlu0 %v2202, 104
        %v2544 = vpop.permute.xlu0 %2543
        %2545 = vrot.lane.b32.xlu0 %v2203, 104
        %v2546 = vpop.permute.xlu0 %2545
        %v2548 = vsel %vm1470, %v2544, 0
        %v2551 = vsel %vm1470, %v2546, 0
        %2553 = vmatprep.subr.bf16.mxu0 0
        %2554 = vmatpush1.bf16.xpose.msra.mxu0 %v2551
        %2555 = vmatprep.subr.bf16.mxu0 0
        %2556 = vmatpush1.bf16.xpose.msra.mxu0 0
        %2557 = vmatprep.subr.bf16.mxu0 0
        %2558 = vmatpush1.bf16.xpose.msra.mxu0 0
        %2559 = vmatprep.subr.bf16.mxu0 0
        %2560 = vmatpush1.bf16.xpose.msra.mxu0 0
        %2561 = vmatprep.subr.bf16.mxu0 0
        %2562 = vmatpush1.bf16.xpose.msra.mxu0 0
        %2563 = vmatprep.subr.bf16.mxu0 0
        %2564 = vmatpush1.bf16.xpose.msra.mxu0 0
        %2565 = vmatprep.subr.bf16.mxu0 0
        %2566 = vmatpush1.bf16.xpose.msra.mxu0 0
        %2567 = vmatprep.subr.bf16.mxu0 0
        %2568 = vmatpush1.bf16.xpose.msra.mxu0 0
        %2569 = vmatprep.subr.bf16.mxu0 0
        %2570 = vmatpush1.bf16.xpose.msra.mxu0 0
        %2571 = vmatprep.subr.bf16.mxu0 0
        %2572 = vmatpush1.bf16.xpose.msra.mxu0 0
        %2573 = vmatprep.subr.bf16.mxu0 0
        %2574 = vmatpush1.bf16.xpose.msra.mxu0 0
        %2575 = vmatprep.subr.bf16.mxu0 0
        %2576 = vmatpush1.bf16.xpose.msra.mxu0 0
        %2577 = vmatprep.subr.bf16.mxu0 0
        %2578 = vmatpush1.bf16.xpose.msra.mxu0 0
        %2579 = vmatprep.subr.bf16.mxu0 0
        %2580 = vmatpush1.bf16.xpose.msra.mxu0 0
        %2581 = vmatprep.subr.bf16.mxu0 0
        %2582 = vmatpush1.bf16.xpose.msra.mxu0 0
        %2583 = vmatprep.subr.bf16.mxu0 0
        %2584 = vmatpush1.bf16.xpose.msra.mxu0 0
        %2585 = vmatprep.mubr.bf16.mxu0 0
        %2586 = vmatmul.mubr.bf16.gmra.mrb[0].mxu0 %v2548
        %v2587 = vpop.f32.mrb[0].mxu0
        %v2588 = vadd.f32 0.0, %v2587
        %v2589 = vpop.f32.mrb[0].mxu0
        %v2590 = vpop.f32.mrb[0].mxu0
        %v2591 = vpop.f32.mrb[0].mxu0
        %2592 = vdwg.mxu0
        %v2593 = vmul.f32 %v2588, 0.35355338
        %v2594 = vadd.f32 %v2593, %v2256
        %v2595 = vsel %vm1470, %v2594, -inf
        %2596 = vmax.xlane.f32.xlu0 %v2595
        %v2597 = vpop.xlane.xlu0 %2596
        %v2598 = vsub.f32 %v2594, %v2597
        %v2599 = vmul.f32 %v2598, 1.442695
        %v2600 = vpow.pop %v2599
        %v2601 = vsel %vm1470, %v2600, 0.0
        %2602 = vadd.xlane.f32.xlu0 %v2601
        %v2603 = vpop.xlane.xlu0 %2602
        %v2604 = vrcp.pop %v2603
        %v2605 = vmul.f32 %v2600, %v2604
        %v2606 = vpack.c.bf16 %v2605, %v2605
        %2607 = vrot.lane.b32.xlu0 %v2204, 104
        %v2608 = vpop.permute.xlu0 %2607
        %v2610 = vsel %vm1470, %v2606, 0
        %v2613 = vsel %vm1535, %v2608, 0
        %2615 = vmatprep.subr.bf16.mxu0 0
        %2616 = vmatpush1.bf16.msra.mxu0 %v2613
        %2617 = vmatprep.subr.bf16.mxu0 0
        %2618 = vmatpush1.bf16.msra.mxu0 0
        %2619 = vmatprep.subr.bf16.mxu0 0
        %2620 = vmatpush1.bf16.msra.mxu0 0
        %2621 = vmatprep.subr.bf16.mxu0 0
        %2622 = vmatpush1.bf16.msra.mxu0 0
        %2623 = vmatprep.subr.bf16.mxu0 0
        %2624 = vmatpush1.bf16.msra.mxu0 0
        %2625 = vmatprep.subr.bf16.mxu0 0
        %2626 = vmatpush1.bf16.msra.mxu0 0
        %2627 = vmatprep.subr.bf16.mxu0 0
        %2628 = vmatpush1.bf16.msra.mxu0 0
        %2629 = vmatprep.subr.bf16.mxu0 0
        %2630 = vmatpush1.bf16.msra.mxu0 0
        %2631 = vmatprep.subr.bf16.mxu0 0
        %2632 = vmatpush1.bf16.msra.mxu0 0
        %2633 = vmatprep.subr.bf16.mxu0 0
        %2634 = vmatpush1.bf16.msra.mxu0 0
        %2635 = vmatprep.subr.bf16.mxu0 0
        %2636 = vmatpush1.bf16.msra.mxu0 0
        %2637 = vmatprep.subr.bf16.mxu0 0
        %2638 = vmatpush1.bf16.msra.mxu0 0
        %2639 = vmatprep.subr.bf16.mxu0 0
        %2640 = vmatpush1.bf16.msra.mxu0 0
        %2641 = vmatprep.subr.bf16.mxu0 0
        %2642 = vmatpush1.bf16.msra.mxu0 0
        %2643 = vmatprep.subr.bf16.mxu0 0
        %2644 = vmatpush1.bf16.msra.mxu0 0
        %2645 = vmatprep.subr.bf16.mxu0 0
        %2646 = vmatpush1.bf16.msra.mxu0 0
        %2647 = vmatprep.mubr.bf16.mxu0 0
        %2648 = vmatmul.mubr.bf16.gmra.mrb[0].mxu0 %v2610
        %v2649 = vpop.f32.mrb[0].mxu0
        %v2650 = vadd.f32 0.0, %v2649
        %v2651 = vpop.f32.mrb[0].mxu0
        %v2652 = vpop.f32.mrb[0].mxu0
        %v2653 = vpop.f32.mrb[0].mxu0
        %2654 = vdwg.mxu0
        %2656 = vrot.lane.b32.xlu0 %v2426, 8
        %v2657 = vpop.permute.xlu0 %2656
        %2660 = vrot.lane.b32.xlu0 %v2538, 16
        %v2661 = vpop.permute.xlu0 %2660
        %2664 = vrot.lane.b32.xlu0 %v2650, 24
        %v2665 = vpop.permute.xlu0 %2664
        %v2667 = vsel %vm1470, %v2311, %v2657
        %v2668 = vsel %vm1931, %v2667, %v2661
        %v2669 = vsel %vm1933, %v2668, %v2665
        %v2670 = vpack.c.bf16 %v2669, %v2669
        %v2675 = vunpack.c.l.b16 %v2032
        %v2676 = vunpack.c.l.b16 %v2033
        %v2677 = vunpack.c.l.b16 %v2034
        %v2678 = vunpack.c.l.b16 %v2035
        %v2679 = vpack.c.b16 %v2676, %v2675
        %v2680 = vpack.c.b16 %v2678, %v2677
        %v2684 = vsel %vm1319, %v2670, 0
        %2686 = vmatprep.subr.bf16.mxu0 0
        %2687 = vmatpush1.bf16.msra.mxu0 %v2679
        %2688 = vmatprep.subr.bf16.mxu0 0
        %2689 = vmatpush1.bf16.msra.mxu0 %v2680
        %2690 = vmatprep.subr.bf16.mxu0 0
        %2691 = vmatpush1.bf16.msra.mxu0 0
        %2692 = vmatprep.subr.bf16.mxu0 0
        %2693 = vmatpush1.bf16.msra.mxu0 0
        %2694 = vmatprep.subr.bf16.mxu0 0
        %2695 = vmatpush1.bf16.msra.mxu0 0
        %2696 = vmatprep.subr.bf16.mxu0 0
        %2697 = vmatpush1.bf16.msra.mxu0 0
        %2698 = vmatprep.subr.bf16.mxu0 0
        %2699 = vmatpush1.bf16.msra.mxu0 0
        %2700 = vmatprep.subr.bf16.mxu0 0
        %2701 = vmatpush1.bf16.msra.mxu0 0
        %2702 = vmatprep.subr.bf16.mxu0 0
        %2703 = vmatpush1.bf16.msra.mxu0 0
        %2704 = vmatprep.subr.bf16.mxu0 0
        %2705 = vmatpush1.bf16.msra.mxu0 0
        %2706 = vmatprep.subr.bf16.mxu0 0
        %2707 = vmatpush1.bf16.msra.mxu0 0
        %2708 = vmatprep.subr.bf16.mxu0 0
        %2709 = vmatpush1.bf16.msra.mxu0 0
        %2710 = vmatprep.subr.bf16.mxu0 0
        %2711 = vmatpush1.bf16.msra.mxu0 0
        %2712 = vmatprep.subr.bf16.mxu0 0
        %2713 = vmatpush1.bf16.msra.mxu0 0
        %2714 = vmatprep.subr.bf16.mxu0 0
        %2715 = vmatpush1.bf16.msra.mxu0 0
        %2716 = vmatprep.subr.bf16.mxu0 0
        %2717 = vmatpush1.bf16.msra.mxu0 0
        %2718 = vmatprep.mubr.bf16.mxu0 0
        %2719 = vmatmul.mubr.bf16.gmra.mrb[0].mxu0 %v2684
        %v2720 = vpop.f32.mrb[0].mxu0
        %v2721 = vadd.f32 0.0, %v2720
        %v2722 = vpop.f32.mrb[0].mxu0
        %v2723 = vpop.f32.mrb[0].mxu0
        %v2724 = vpop.f32.mrb[0].mxu0
        %2725 = vdwg.mxu0
        %v2726 = vadd.f32 %v2721, %v2019
        %v2727 = vsel %vm1319, %v2726, 0.0
        %2728 = vadd.xlane.f32.xlu0 %v2727
        %v2729 = vpop.xlane.xlu0 %2728
        %v2730 = vmul.f32 %v2729, %v1995
        %v2731 = vsub.f32 %v2726, %v2730
        %v2732 = vmul.f32 %v2731, %v2731
        %v2733 = vsel %vm1319, %v2732, 0.0
        %2734 = vadd.xlane.f32.xlu0 %v2733
        %v2735 = vpop.xlane.xlu0 %2734
        %v2736 = vmul.f32 %v2735, %v1995
        %v2737 = vadd.f32 %v2736, 1e-06
        %v2738 = vrsqrt.pop %v2737
        %v2739 = vmul.f32 %v2731, %v2738
        %v2741 = vlaneseq
        %v2742 = vshrl.u32 %v2741, 7
        %v2743 = vsub.s32 0, %v2742
        %v2744 = vrot.slane %v2036, %v2743
        %v2746 = vmul.f32 %v2739, %v2744
        %v2748 = vlaneseq
        %v2749 = vshrl.u32 %v2748, 7
        %v2750 = vsub.s32 0, %v2749
        %v2751 = vrot.slane %v2037, %v2750
        %v2753 = vadd.f32 %v2746, %v2751
        %v2754 = vld [vmem:[%s1084] sm:$0xf]
        %v2755 = vld [vmem:[%s1084 + $0x4] sm:$0xf]
        %v2756 = vld [vmem:[%s1084 + $0x8] sm:$0xf]
        %v2757 = vld [vmem:[%s1084 + $0xc] sm:$0xf]
        %v2758 = vld [vmem:[%s1261] sm:$0x1]
        %v2759 = vld [vmem:[%s1266] sm:$0xf]
        %v2760 = vld [vmem:[%s1266 + $0x4] sm:$0xf]
        %v2761 = vld [vmem:[%s1266 + $0x8] sm:$0xf]
        %v2762 = vld [vmem:[%s1266 + $0xc] sm:$0xf]
        %v2763 = vld [vmem:[%s1266 + $0x10] sm:$0xf]
        %v2764 = vld [vmem:[%s1266 + $0x14] sm:$0xf]
        %v2765 = vld [vmem:[%s1266 + $0x18] sm:$0xf]
        %v2766 = vld [vmem:[%s1266 + $0x1c] sm:$0xf]
        %v2767 = vld [vmem:[%s1269] sm:$0x1]
        %v2768 = vld [vmem:[%s1272] sm:$0x1]
        %v2769 = vld [vmem:[%s1275] sm:$0x1]
        %v2770 = vpack.c.bf16 %v2753, %v2753
        %v2772 = vlaneseq
        %v2773 = vshrl.u32 %v2772, 7
        %v2774 = vsub.s32 0, %v2773
        %v2775 = vrot.slane %v2758, %v2774
        %v2781 = vunpack.c.l.b16 %v2754
        %v2782 = vunpack.c.l.b16 %v2755
        %v2783 = vunpack.c.l.b16 %v2756
        %v2784 = vunpack.c.l.b16 %v2757
        %v2785 = vpack.c.b16 %v2782, %v2781
        %v2786 = vpack.c.b16 %v2784, %v2783
        %v2790 = vsel %vm1319, %v2770, 0
        %2792 = vmatprep.subr.bf16.mxu0 0
        %2793 = vmatpush1.bf16.msra.mxu0 %v2785
        %2794 = vmatprep.subr.bf16.mxu0 0
        %2795 = vmatpush1.bf16.msra.mxu0 %v2786
        %2796 = vmatprep.subr.bf16.mxu0 0
        %2797 = vmatpush1.bf16.msra.mxu0 0
        %2798 = vmatprep.subr.bf16.mxu0 0
        %2799 = vmatpush1.bf16.msra.mxu0 0
        %2800 = vmatprep.subr.bf16.mxu0 0
        %2801 = vmatpush1.bf16.msra.mxu0 0
        %2802 = vmatprep.subr.bf16.mxu0 0
        %2803 = vmatpush1.bf16.msra.mxu0 0
        %2804 = vmatprep.subr.bf16.mxu0 0
        %2805 = vmatpush1.bf16.msra.mxu0 0
        %2806 = vmatprep.subr.bf16.mxu0 0
        %2807 = vmatpush1.bf16.msra.mxu0 0
        %2808 = vmatprep.subr.bf16.mxu0 0
        %2809 = vmatpush1.bf16.msra.mxu0 0
        %2810 = vmatprep.subr.bf16.mxu0 0
        %2811 = vmatpush1.bf16.msra.mxu0 0
        %2812 = vmatprep.subr.bf16.mxu0 0
        %2813 = vmatpush1.bf16.msra.mxu0 0
        %2814 = vmatprep.subr.bf16.mxu0 0
        %2815 = vmatpush1.bf16.msra.mxu0 0
        %2816 = vmatprep.subr.bf16.mxu0 0
        %2817 = vmatpush1.bf16.msra.mxu0 0
        %2818 = vmatprep.subr.bf16.mxu0 0
        %2819 = vmatpush1.bf16.msra.mxu0 0
        %2820 = vmatprep.subr.bf16.mxu0 0
        %2821 = vmatpush1.bf16.msra.mxu0 0
        %2822 = vmatprep.subr.bf16.mxu0 0
        %2823 = vmatpush1.bf16.msra.mxu0 0
        %2824 = vmatprep.mubr.bf16.mxu0 0
        %2825 = vmatmul.mubr.bf16.gmra.mrb[0].mxu0 %v2790
        %v2826 = vpop.f32.mrb[0].mxu0
        %v2827 = vadd.f32 %v2775, %v2826
        %v2828 = vpop.f32.mrb[0].mxu0
        %v2829 = vpop.f32.mrb[0].mxu0
        %v2830 = vpop.f32.mrb[0].mxu0
        %2831 = vdwg.mxu0
        %v2832 = vmax.f32 %v2827, 0.0
        %v2833 = vpack.c.bf16 %v2832, %v2832
        %v2835 = vlaneseq
        %v2836 = vshrl.u32 %v2835, 7
        %v2837 = vsub.s32 0, %v2836
        %v2838 = vrot.slane %v2767, %v2837
        %v2848 = vunpack.c.l.b16 %v2759
        %v2849 = vunpack.c.l.b16 %v2760
        %v2850 = vunpack.c.l.b16 %v2761
        %v2851 = vunpack.c.l.b16 %v2762
        %v2852 = vunpack.c.l.b16 %v2763
        %v2853 = vunpack.c.l.b16 %v2764
        %v2854 = vunpack.c.l.b16 %v2765
        %v2855 = vunpack.c.l.b16 %v2766
        %v2856 = vpack.c.b16 %v2849, %v2848
        %v2857 = vpack.c.b16 %v2851, %v2850
        %v2858 = vpack.c.b16 %v2853, %v2852
        %v2859 = vpack.c.b16 %v2855, %v2854
        %vm2864 = vcmask 523264
        %v2866 = vsel %vm2864, %v2833, 0
        %2868 = vmatprep.subr.bf16.mxu0 0
        %2869 = vmatpush1.bf16.msra.mxu0 %v2856
        %2870 = vmatprep.subr.bf16.mxu0 0
        %2871 = vmatpush1.bf16.msra.mxu0 %v2857
        %2872 = vmatprep.subr.bf16.mxu0 0
        %2873 = vmatpush1.bf16.msra.mxu0 %v2858
        %2874 = vmatprep.subr.bf16.mxu0 0
        %2875 = vmatpush1.bf16.msra.mxu0 %v2859
        %2876 = vmatprep.subr.bf16.mxu0 0
        %2877 = vmatpush1.bf16.msra.mxu0 0
        %2878 = vmatprep.subr.bf16.mxu0 0
        %2879 = vmatpush1.bf16.msra.mxu0 0
        %2880 = vmatprep.subr.bf16.mxu0 0
        %2881 = vmatpush1.bf16.msra.mxu0 0
        %2882 = vmatprep.subr.bf16.mxu0 0
        %2883 = vmatpush1.bf16.msra.mxu0 0
        %2884 = vmatprep.subr.bf16.mxu0 0
        %2885 = vmatpush1.bf16.msra.mxu0 0
        %2886 = vmatprep.subr.bf16.mxu0 0
        %2887 = vmatpush1.bf16.msra.mxu0 0
        %2888 = vmatprep.subr.bf16.mxu0 0
        %2889 = vmatpush1.bf16.msra.mxu0 0
        %2890 = vmatprep.subr.bf16.mxu0 0
        %2891 = vmatpush1.bf16.msra.mxu0 0
        %2892 = vmatprep.subr.bf16.mxu0 0
        %2893 = vmatpush1.bf16.msra.mxu0 0
        %2894 = vmatprep.subr.bf16.mxu0 0
        %2895 = vmatpush1.bf16.msra.mxu0 0
        %2896 = vmatprep.subr.bf16.mxu0 0
        %2897 = vmatpush1.bf16.msra.mxu0 0
        %2898 = vmatprep.subr.bf16.mxu0 0
        %2899 = vmatpush1.bf16.msra.mxu0 0
        %2900 = vmatprep.mubr.bf16.mxu0 0
        %2901 = vmatmul.mubr.bf16.gmra.mrb[0].mxu0 %v2866
        %v2902 = vpop.f32.mrb[0].mxu0
        %v2903 = vadd.f32 %v2838, %v2902
        %v2904 = vpop.f32.mrb[0].mxu0
        %v2905 = vpop.f32.mrb[0].mxu0
        %v2906 = vpop.f32.mrb[0].mxu0
        %2907 = vdwg.mxu0
        %v2908 = vadd.f32 %v2903, %v2753
        %v2909 = vsel %vm1319, %v2908, 0.0
        %2910 = vadd.xlane.f32.xlu0 %v2909
        %v2911 = vpop.xlane.xlu0 %2910
        %v2912 = vmul.f32 %v2911, %v1995
        %v2913 = vsub.f32 %v2908, %v2912
        %v2914 = vmul.f32 %v2913, %v2913
        %v2915 = vsel %vm1319, %v2914, 0.0
        %2916 = vadd.xlane.f32.xlu0 %v2915
        %v2917 = vpop.xlane.xlu0 %2916
        %v2918 = vmul.f32 %v2917, %v1995
        %v2919 = vadd.f32 %v2918, 1e-06
        %v2920 = vrsqrt.pop %v2919
        %v2921 = vmul.f32 %v2913, %v2920
        %v2923 = vlaneseq
        %v2924 = vshrl.u32 %v2923, 7
        %v2925 = vsub.s32 0, %v2924
        %v2926 = vrot.slane %v2768, %v2925
        %v2928 = vmul.f32 %v2921, %v2926
        %v2930 = vlaneseq
        %v2931 = vshrl.u32 %v2930, 7
        %v2932 = vsub.s32 0, %v2931
        %v2933 = vrot.slane %v2769, %v2932
        %v2935 = vadd.f32 %v2928, %v2933
        %2936 = vst.msk [vmem:[%s1235] sm:$0xff] %vm1319, %v2935
        %s2937 = sand.u32 %s649, 1
        %s2938 = scalar_lea.sflag [#allocation4], %s2937
        %s2939 = sand.u32 %s649, 1
        %s2940 = smul.addr %s2939, 8
        %s2941 = scalar_lea.vmem [#allocation22], %s2940
        // Predicated region
        $region161: #{tpu_custom_call.1} parent=107 // pred_check
          %p2942 = pneg %p659
        $region162: #{tpu_custom_call.1} parent=107 // pred_check_branch
          %2944 = sbr.rel (%p2942) target = $region164
        $region163: #{tpu_custom_call.1} parent=107 // pred_region
          %s2946 = ssub.s32 128, 128
          %2947 = vsyncadd %s2938, %s2946
          %s2948 = smul.addr %s61, 128
          %s2949 = scalar_lea.hbm %s22, %s2948
          %s2951 = sshll.u32 %s2941, 4
          %s2952 = int_to_ptr.vmem [resolvable:$true] %s2951
          %2954 = dma.vmem_to_hbm [thread:$0]  %s2952, 128, %s2949, %s2938
        $region164: #{tpu_custom_call.1} parent=107 // pred_fallthru
          _
      $region108: #{tpu_custom_call.1} parent=5 // pred_fallthru
        _
      %p2955 = scmp.le.s32.totalorder 2, %s52
      // Predicated region
      $region165: #{tpu_custom_call.1} parent=5 // pred_check
        %p2956 = pneg %p2955
      $region166: #{tpu_custom_call.1} parent=5 // pred_check_branch
        %2958 = sbr.rel (%p2956) target = $region168
      $region167: #{tpu_custom_call.1} parent=5 // pred_region
        %s2959 = ssub.s32 %s52, 2
        // Predicated region
        $region169: #{tpu_custom_call.1} parent=167 // pred_check
          %p2960 = pneg %p665
        $region170: #{tpu_custom_call.1} parent=167 // pred_check_branch
          %2962 = sbr.rel (%p2960) target = $region172
        $region171: #{tpu_custom_call.1} parent=167 // pred_region
          %s2963 = sand.u32 %s650, 1
          %s2964 = scalar_lea.sflag [#allocation4], %s2963
          %s2965 = sand.u32 %s650, 1
          %s2966 = smul.addr %s2965, 8
          %s2967 = scalar_lea.vmem [#allocation22], %s2966
          %2968 = dma.done %s2964, 128
        $region172: #{tpu_custom_call.1} parent=167 // pred_fallthru
          _
      $region168: #{tpu_custom_call.1} parent=5 // pred_fallthru
        _
    $region6: #{tpu_custom_call.1} parent=1 // loop_footer
      %s56 = sadd.s32 1, %s52
    $region7: #{tpu_custom_call.1} parent=1 // loop_footer_branch
      %51 = sbr.rel target = $region3
    $region8: #{tpu_custom_call.1} parent=1 // loop_exit
      _
    %2969 = vsyncpa [#allocation3], 1
    %s2970 = scalar_lea.sflag [#allocation3], 1
    %2971 = vsyncpa %s2970, 1
    %2972 = vsyncpa [#allocation6], 1
    %s2973 = scalar_lea.sflag [#allocation6], 1
    %2974 = vsyncpa %s2973, 1
    %2975 = vsyncpa [#allocation9], 1
    %s2976 = scalar_lea.sflag [#allocation9], 1
    %2977 = vsyncpa %s2976, 1
    %2978 = vsyncpa [#allocation12], 1
    %s2979 = scalar_lea.sflag [#allocation12], 1
    %2980 = vsyncpa %s2979, 1
    %2981 = vsyncpa [#allocation15], 1
    %s2982 = scalar_lea.sflag [#allocation15], 1
    %2983 = vsyncpa %s2982, 1
    %2984 = vsyncpa [#allocation18], 1
    %s2985 = scalar_lea.sflag [#allocation18], 1
    %2986 = vsyncpa %s2985, 1
    %2987 = vsyncpa [#allocation21], 1
    %s2988 = scalar_lea.sflag [#allocation21], 1
    %2989 = vsyncpa %s2988, 1
    %2990 = vsyncpa [#allocation4], 1
    %s2991 = scalar_lea.sflag [#allocation4], 1
    %2992 = vsyncpa %s2991, 1

</llo_original>
